<compile_context>
chip_gen: v7x
topology: tpu7x:2x2x1
jax: 0.10.0
libtpu: 0.0.40
codegen_flags: <defaults>
</compile_context>

<pallas_src>
import math
from functools import partial

import jax
import jax.numpy as jnp
from jax.experimental import pallas as pl
from jax.experimental.pallas import tpu as pltpu

# ----------------------------- small RoBERTa config -----------------------------
VOCAB = 100
PAD_ID = 1                 # RoBERTa pad_token_id
TYPE_VOCAB = 1
B, S = 2, 8                # batch, sequence length
M = B * S                  # batch folded into matmul M-dimension
H = 64                     # hidden size
NH, DH = 4, 16             # num heads, head dim
INTER = 128                # intermediate (FFN) size
NUM_LAYERS = 2
MAX_POS = S + 2            # max_position_embeddings = max_input_length + 2
LN_EPS = 1e-5
MASK_BIAS = -1e9           # large finite additive bias (avoids NaN on fully-masked rows)

VEC_ROWS = 8               # packed per-layer f32 vector rows (all lane-0 aligned)
VEC_W = 3 * H              # packed row width (widest vector = fused QKV bias)


# ----------------------------- in-kernel math helpers -----------------------------
def _layernorm(x, gamma, beta):
    mean = jnp.mean(x, axis=-1, keepdims=True)
    var = jnp.mean((x - mean) ** 2, axis=-1, keepdims=True)
    return (x - mean) * jax.lax.rsqrt(var + LN_EPS) * gamma + beta


def _gelu_tanh(x):
    # tanh-approx GELU: one EUP tanh + a few VALU ops (~1e-3 abs dev from HF erf GELU).
    return 0.5 * x * (1.0 + jnp.tanh(0.7978845608028654 * (x + 0.044715 * x * x * x)))


# ----------------------------- fused encoder kernel -----------------------------
def encoder_kernel(emb_ref, mb_ref, embln_ref, vecs_ref,
                   wqkv_ref, wo_ref, w1_ref, w2_ref,
                   o_ref, ctx_scr):
    # single grid step: entire (B*S, H) hidden state stays in vregs/VMEM; all
    # weights are fully VMEM-resident.
    x = _layernorm(emb_ref[...], embln_ref[0:1, :], embln_ref[1:2, :])      # (M, H) f32
    mb = mb_ref[...]                                                        # (B, 1, S) additive mask

    for li in range(NUM_LAYERS):                                            # static unroll (L=2)
        vec = vecs_ref[li]                     # (VEC_ROWS, 3H) f32; all slices start at lane 0
        bqkv = vec[0:1, :]                     # (1, 3H)  fused QKV bias (scale folded into q part)
        b1   = vec[1:2, :INTER]                # (1, INTER)
        bo   = vec[2:3, :H]
        g1   = vec[3:4, :H]
        b1ln = vec[4:5, :H]
        b2   = vec[5:6, :H]
        g2   = vec[6:7, :H]
        b2ln = vec[7:8, :H]

        # ---------- self-attention ----------
        qkv = jnp.dot(x.astype(jnp.bfloat16), wqkv_ref[li],
                      preferred_element_type=jnp.float32) + bqkv            # (M, 3H) f32
        qkv3 = qkv.reshape(B, S, 3 * H)                                     # leading-dim split only

        for h in range(NH):                                                 # static unroll over heads
            lo = h * DH
            qh = qkv3[:, :, lo:lo + DH]                                     # (B, S, DH), scale pre-folded
            kh = qkv3[:, :, H + lo:H + lo + DH]
            vh = qkv3[:, :, 2 * H + lo:2 * H + lo + DH]
            s = jnp.einsum('bqd,bkd->bqk', qh, kh,
                           preferred_element_type=jnp.float32) + mb          # (B, S, S)
            s = s - jnp.max(s, axis=-1, keepdims=True)
            p = jnp.exp(s)
            p = p * pl.reciprocal(jnp.sum(p, axis=-1, keepdims=True), approx=True)
            ctx_h = jnp.einsum('bqk,bkd->bqd', p, vh,
                               preferred_element_type=jnp.float32)           # (B, S, DH)
            # deposit each head at its static lane offset (no concat, no acc chain)
            ctx_scr[:, lo:lo + DH] = ctx_h.reshape(M, DH).astype(jnp.bfloat16)

        # single fused output projection over the whole (M, H) context
        attn = jnp.dot(ctx_scr[...], wo_ref[li],
                       preferred_element_type=jnp.float32) + bo              # (M, H)
        x = _layernorm(attn + x, g1, b1ln)

        # ---------- feed-forward ----------
        h1 = jnp.dot(x.astype(jnp.bfloat16), w1_ref[li],
                     preferred_element_type=jnp.float32) + b1                # (M, INTER)
        h1 = _gelu_tanh(h1)
        y = jnp.dot(h1.astype(jnp.bfloat16), w2_ref[li],
                    preferred_element_type=jnp.float32) + b2                 # (M, H)
        x = _layernorm(y + x, g2, b2ln)

    o_ref[...] = x


# ----------------------------- pallas_call wrapper -----------------------------
def _full(shape):
    nd = len(shape)
    return pl.BlockSpec(shape, lambda i, _nd=nd: (0,) * _nd)


def roberta_encoder(emb_flat, mask_bias, params):
    return pl.pallas_call(
        encoder_kernel,
        out_shape=jax.ShapeDtypeStruct((M, H), jnp.float32),
        grid=(1,),                                           # single step; batch folded into M
        in_specs=[
            _full((M, H)),                                   # embeddings, batch-flattened
            _full((B, 1, S)),                                # additive mask bias
            _full((2, H)),                                   # embedding LN [gamma; beta]
            _full((NUM_LAYERS, VEC_ROWS, VEC_W)),            # all small f32 per-layer vectors, packed
            _full((NUM_LAYERS, H, 3 * H)),                   # fused Wqkv (bf16)
            _full((NUM_LAYERS, H, H)),                       # Wo (bf16)
            _full((NUM_LAYERS, H, INTER)),                   # W1 (bf16)
            _full((NUM_LAYERS, INTER, H)),                   # W2 (bf16)
        ],
        out_specs=_full((M, H)),
        scratch_shapes=[pltpu.VMEM((M, H), jnp.bfloat16)],   # per-layer context assembly buffer
        compiler_params=pltpu.CompilerParams(dimension_semantics=("arbitrary",)),
    )(emb_flat, mask_bias,
      params["emb_ln"], params["vecs"],
      params["wqkv"], params["wo"], params["w1"], params["w2"])


# ----------------------------- parameters -----------------------------
def init_params(key):
    def nrm(k, shape):
        return jax.random.normal(k, shape, jnp.float32) * 0.02

    def pad_row(v):
        return jnp.pad(v, (0, VEC_W - v.shape[0]))

    keys = jax.random.split(key, 3 + NUM_LAYERS)
    params = {
        "word_emb": nrm(keys[0], (VOCAB, H)),
        "pos_emb": nrm(keys[1], (MAX_POS, H)),
        "type_emb": nrm(keys[2], (TYPE_VOCAB, H)),
        "emb_ln": jnp.concatenate([jnp.ones((1, H), jnp.float32),
                                   jnp.zeros((1, H), jnp.float32)], axis=0),
    }

    scale = 1.0 / math.sqrt(DH)
    wqkv, wo, w1, w2, vecs = [], [], [], [], []
    for li in range(NUM_LAYERS):
        lk = jax.random.split(keys[3 + li], 6)
        wq, wk, wv = nrm(lk[0], (H, H)), nrm(lk[1], (H, H)), nrm(lk[2], (H, H))
        bq = bk = bv = jnp.zeros((H,), jnp.float32)
        # fuse Q/K/V and fold the 1/sqrt(DH) score scale into Wq / bq
        wqkv.append(jnp.concatenate([wq * scale, wk, wv], axis=1))
        wo.append(nrm(lk[3], (H, H)))
        w1.append(nrm(lk[4], (H, INTER)))
        w2.append(nrm(lk[5], (INTER, H)))

        # pack ALL per-layer f32 vectors into one (VEC_ROWS, 3H) block; every row
        # starts at lane 0 so in-kernel slices are free prefix slices.
        rows = [
            jnp.concatenate([bq * scale, bk, bv]),   # 0: fused QKV bias (3H)
            jnp.zeros((INTER,), jnp.float32),        # 1: FFN dense-1 bias
            jnp.zeros((H,), jnp.float32),            # 2: attention output bias
            jnp.ones((H,), jnp.float32),             # 3: attention LN gamma
            jnp.zeros((H,), jnp.float32),            # 4: attention LN beta
            jnp.zeros((H,), jnp.float32),            # 5: FFN dense-2 bias
            jnp.ones((H,), jnp.float32),             # 6: FFN LN gamma
            jnp.zeros((H,), jnp.float32),            # 7: FFN LN beta
        ]
        vecs.append(jnp.stack([pad_row(r) for r in rows]))

    # matmul weights in bf16 (MXU-native; f32 accumulation in-kernel); vectors stay f32.
    params["wqkv"] = jnp.stack(wqkv).astype(jnp.bfloat16)
    params["wo"] = jnp.stack(wo).astype(jnp.bfloat16)
    params["w1"] = jnp.stack(w1).astype(jnp.bfloat16)
    params["w2"] = jnp.stack(w2).astype(jnp.bfloat16)
    params["vecs"] = jnp.stack(vecs)
    return params


# ----------------------------- forward (ExtendedRoberta.forward) -----------------------------
def extended_roberta_forward(params, input_ids, attention_mask):
    """Returns last_hidden_state (B, S, H), matching ExtendedRoberta.forward (eval mode)."""
    # RoBERTa position ids: cumsum of non-pad mask, offset by padding_idx (=1).
    pad_mask = (input_ids != PAD_ID).astype(jnp.int32)
    position_ids = jnp.cumsum(pad_mask, axis=1) * pad_mask + PAD_ID
    token_type_ids = jnp.zeros_like(input_ids)

    emb = (params["word_emb"][input_ids]
           + params["pos_emb"][position_ids]
           + params["type_emb"][token_type_ids])
    # dropout is a no-op in eval mode.

    # HF extended attention mask, with a large finite bias instead of finfo.min
    # so fully-masked rows cannot produce NaN.
    mask_bias = ((1.0 - attention_mask.astype(jnp.float32)) * MASK_BIAS)[:, None, :]

    out = roberta_encoder(emb.reshape(M, H), mask_bias, params)
    return out.reshape(B, S, H)


# TODO(synk): pretrained-checkpoint loading / position-embedding copy from the
# original roberta-base has no Pallas equivalent; weights are synthetic here.

if __name__ == "__main__":
    key = jax.random.PRNGKey(0)
    pkey, dkey = jax.random.split(key)

    params = init_params(pkey)
    input_ids = jax.random.randint(dkey, (B, S), 0, VOCAB, dtype=jnp.int32)
    attention_mask = jnp.ones((B, S), jnp.int32)

    fwd = jax.jit(partial(extended_roberta_forward, params))
    out = fwd(input_ids, attention_mask)
    out = jax.block_until_ready(out)

    assert out.shape == (B, S, H) and out.dtype == jnp.float32
    assert bool(jnp.all(jnp.isfinite(out)))
    print("KERNEL_OK")
</pallas_src>

<mosaic_0001>
module attributes {stable_mosaic.version = 11 : i64} {
  func.func @encoder_kernel(%arg0: i32, %arg1: memref<16x64xf32, #tpu.memory_space<vmem>>, %arg2: memref<2x1x8xf32, #tpu.memory_space<vmem>>, %arg3: memref<2x64xf32, #tpu.memory_space<vmem>>, %arg4: memref<2x8x192xf32, #tpu.memory_space<vmem>>, %arg5: memref<2x64x192xbf16, #tpu.memory_space<vmem>>, %arg6: memref<2x64x64xbf16, #tpu.memory_space<vmem>>, %arg7: memref<2x64x128xbf16, #tpu.memory_space<vmem>>, %arg8: memref<2x128x64xbf16, #tpu.memory_space<vmem>>, %arg9: memref<16x64xf32, #tpu.memory_space<vmem>>, %arg10: memref<16x64xbf16, #tpu.memory_space<vmem>>) attributes {dimension_semantics = [#tpu.dimension_semantics<arbitrary>], iteration_bounds = array<i64: 1>, scalar_prefetch = 0 : i64, scratch_operands = 1 : i64, tpu.core_type = #tpu.core_type<tc>, window_params = [{pipeline_mode = #tpu.pipeline_mode<synchronous>, transform_indices = @transform_0, window_bounds = array<i64: 16, 64>}, {pipeline_mode = #tpu.pipeline_mode<synchronous>, transform_indices = @transform_1, window_bounds = array<i64: 2, 1, 8>}, {pipeline_mode = #tpu.pipeline_mode<synchronous>, transform_indices = @transform_2, window_bounds = array<i64: 2, 64>}, {pipeline_mode = #tpu.pipeline_mode<synchronous>, transform_indices = @transform_3, window_bounds = array<i64: 2, 8, 192>}, {pipeline_mode = #tpu.pipeline_mode<synchronous>, transform_indices = @transform_4, window_bounds = array<i64: 2, 64, 192>}, {pipeline_mode = #tpu.pipeline_mode<synchronous>, transform_indices = @transform_5, window_bounds = array<i64: 2, 64, 64>}, {pipeline_mode = #tpu.pipeline_mode<synchronous>, transform_indices = @transform_6, window_bounds = array<i64: 2, 64, 128>}, {pipeline_mode = #tpu.pipeline_mode<synchronous>, transform_indices = @transform_7, window_bounds = array<i64: 2, 128, 64>}, {pipeline_mode = #tpu.pipeline_mode<synchronous>, transform_indices = @transform_8, window_bounds = array<i64: 16, 64>}]} {
    %c0 = arith.constant 0 : index
    %c0_0 = arith.constant 0 : index
    %0 = vector.load %arg1[%c0, %c0_0] : memref<16x64xf32, #tpu.memory_space<vmem>>, vector<16x64xf32>
    %c0_1 = arith.constant 0 : index
    %c0_2 = arith.constant 0 : index
    %1 = vector.load %arg3[%c0_1, %c0_2] : memref<2x64xf32, #tpu.memory_space<vmem>>, vector<1x64xf32>
    %c1 = arith.constant 1 : index
    %c0_3 = arith.constant 0 : index
    %2 = vector.load %arg3[%c1, %c0_3] : memref<2x64xf32, #tpu.memory_space<vmem>>, vector<1x64xf32>
    %cst = arith.constant dense<0.000000e+00> : vector<16xf32>
    %3 = vector.multi_reduction <add>, %0, %cst [1] : vector<16x64xf32> to vector<16xf32>
    %4 = vector.shape_cast %3 : vector<16xf32> to vector<16x1xf32>
    %cst_4 = arith.constant 6.400000e+01 : f32
    %5 = vector.broadcast %cst_4 : f32 to vector<16x1xf32>
    %6 = arith.divf %4, %5 : vector<16x1xf32>
    %7 = vector.broadcast %6 : vector<16x1xf32> to vector<16x64xf32>
    %8 = arith.subf %0, %7 : vector<16x64xf32>
    %9 = arith.mulf %8, %8 : vector<16x64xf32>
    %cst_5 = arith.constant dense<0.000000e+00> : vector<16xf32>
    %10 = vector.multi_reduction <add>, %9, %cst_5 [1] : vector<16x64xf32> to vector<16xf32>
    %11 = vector.shape_cast %10 : vector<16xf32> to vector<16x1xf32>
    %cst_6 = arith.constant 6.400000e+01 : f32
    %12 = vector.broadcast %cst_6 : f32 to vector<16x1xf32>
    %13 = arith.divf %11, %12 : vector<16x1xf32>
    %14 = vector.broadcast %6 : vector<16x1xf32> to vector<16x64xf32>
    %15 = arith.subf %0, %14 : vector<16x64xf32>
    %cst_7 = arith.constant 9.99999974E-6 : f32
    %16 = vector.broadcast %cst_7 : f32 to vector<16x1xf32>
    %17 = arith.addf %13, %16 : vector<16x1xf32>
    %18 = math.rsqrt %17 : vector<16x1xf32>
    %19 = vector.broadcast %18 : vector<16x1xf32> to vector<16x64xf32>
    %20 = arith.mulf %15, %19 : vector<16x64xf32>
    %21 = vector.broadcast %1 : vector<1x64xf32> to vector<16x64xf32>
    %22 = arith.mulf %20, %21 : vector<16x64xf32>
    %23 = vector.broadcast %2 : vector<1x64xf32> to vector<16x64xf32>
    %24 = arith.addf %22, %23 : vector<16x64xf32>
    %c0_8 = arith.constant 0 : index
    %c0_9 = arith.constant 0 : index
    %c0_10 = arith.constant 0 : index
    %25 = vector.load %arg2[%c0_8, %c0_9, %c0_10] : memref<2x1x8xf32, #tpu.memory_space<vmem>>, vector<2x1x8xf32>
    %c0_11 = arith.constant 0 : index
    %c0_12 = arith.constant 0 : index
    %c0_13 = arith.constant 0 : index
    %26 = vector.load %arg4[%c0_11, %c0_12, %c0_13] : memref<2x8x192xf32, #tpu.memory_space<vmem>>, vector<1x8x192xf32>
    %27 = vector.shape_cast %26 : vector<1x8x192xf32> to vector<8x192xf32>
    %28 = vector.extract_strided_slice %27 {offsets = [0, 0], sizes = [1, 192], strides = [1, 1]} : vector<8x192xf32> to vector<1x192xf32>
    %29 = vector.extract_strided_slice %27 {offsets = [1, 0], sizes = [1, 128], strides = [1, 1]} : vector<8x192xf32> to vector<1x128xf32>
    %30 = vector.extract_strided_slice %27 {offsets = [2, 0], sizes = [1, 64], strides = [1, 1]} : vector<8x192xf32> to vector<1x64xf32>
    %31 = vector.extract_strided_slice %27 {offsets = [3, 0], sizes = [1, 64], strides = [1, 1]} : vector<8x192xf32> to vector<1x64xf32>
    %32 = vector.extract_strided_slice %27 {offsets = [4, 0], sizes = [1, 64], strides = [1, 1]} : vector<8x192xf32> to vector<1x64xf32>
    %33 = vector.extract_strided_slice %27 {offsets = [5, 0], sizes = [1, 64], strides = [1, 1]} : vector<8x192xf32> to vector<1x64xf32>
    %34 = vector.extract_strided_slice %27 {offsets = [6, 0], sizes = [1, 64], strides = [1, 1]} : vector<8x192xf32> to vector<1x64xf32>
    %35 = vector.extract_strided_slice %27 {offsets = [7, 0], sizes = [1, 64], strides = [1, 1]} : vector<8x192xf32> to vector<1x64xf32>
    %36 = arith.truncf %24 : vector<16x64xf32> to vector<16x64xbf16>
    %c0_14 = arith.constant 0 : index
    %c0_15 = arith.constant 0 : index
    %c0_16 = arith.constant 0 : index
    %37 = vector.load %arg5[%c0_14, %c0_15, %c0_16] : memref<2x64x192xbf16, #tpu.memory_space<vmem>>, vector<1x64x192xbf16>
    %38 = vector.shape_cast %37 : vector<1x64x192xbf16> to vector<64x192xbf16>
    %cst_17 = arith.constant dense<0.000000e+00> : vector<16x192xf32>
    %39 = tpu.matmul %36, %38, %cst_17 {dimension_numbers = #tpu.dot_dimension_numbers<[1], [0], [0], [1], [0, 0, 1, 1], [], []>} : vector<16x64xbf16>, vector<64x192xbf16>, vector<16x192xf32> -> vector<16x192xf32>
    %40 = vector.broadcast %28 : vector<1x192xf32> to vector<16x192xf32>
    %41 = arith.addf %39, %40 : vector<16x192xf32>
    %42 = vector.shape_cast %41 : vector<16x192xf32> to vector<2x8x192xf32>
    %43 = vector.extract_strided_slice %42 {offsets = [0, 0, 0], sizes = [2, 8, 16], strides = [1, 1, 1]} : vector<2x8x192xf32> to vector<2x8x16xf32>
    %44 = vector.extract_strided_slice %42 {offsets = [0, 0, 64], sizes = [2, 8, 16], strides = [1, 1, 1]} : vector<2x8x192xf32> to vector<2x8x16xf32>
    %45 = vector.extract_strided_slice %42 {offsets = [0, 0, 128], sizes = [2, 8, 16], strides = [1, 1, 1]} : vector<2x8x192xf32> to vector<2x8x16xf32>
    "tpu.trace_start"() <{level = 10 : i32, message = "bqd,bkd->bqk"}> : () -> ()
    %cst_18 = arith.constant dense<0.000000e+00> : vector<2x8x8xf32>
    %46 = tpu.matmul %43, %44, %cst_18 {dimension_numbers = #tpu.dot_dimension_numbers<[2], [2], [1], [1], [0, 0, 0, 1, 1, 1], [0], [0]>} : vector<2x8x16xf32>, vector<2x8x16xf32>, vector<2x8x8xf32> -> vector<2x8x8xf32>
    "tpu.trace_stop"() : () -> ()
    %47 = vector.broadcast %25 : vector<2x1x8xf32> to vector<2x8x8xf32>
    %48 = arith.addf %46, %47 : vector<2x8x8xf32>
    %cst_19 = arith.constant dense<0xFF800000> : vector<2x8xf32>
    %49 = vector.multi_reduction <maximumf>, %48, %cst_19 [2] : vector<2x8x8xf32> to vector<2x8xf32>
    %50 = vector.shape_cast %49 : vector<2x8xf32> to vector<2x8x1xf32>
    %51 = vector.broadcast %50 : vector<2x8x1xf32> to vector<2x8x8xf32>
    %52 = arith.subf %48, %51 : vector<2x8x8xf32>
    %53 = math.exp %52 : vector<2x8x8xf32>
    %cst_20 = arith.constant dense<0.000000e+00> : vector<2x8xf32>
    %54 = vector.multi_reduction <add>, %53, %cst_20 [2] : vector<2x8x8xf32> to vector<2x8xf32>
    %55 = vector.shape_cast %54 : vector<2x8xf32> to vector<2x8x1xf32>
    %56 = tpu.reciprocal %55 {approx = true} : vector<2x8x1xf32> -> vector<2x8x1xf32>
    %57 = vector.broadcast %56 : vector<2x8x1xf32> to vector<2x8x8xf32>
    %58 = arith.mulf %53, %57 : vector<2x8x8xf32>
    "tpu.trace_start"() <{level = 10 : i32, message = "bqk,bkd->bqd"}> : () -> ()
    %cst_21 = arith.constant dense<0.000000e+00> : vector<2x8x16xf32>
    %59 = tpu.matmul %58, %45, %cst_21 {dimension_numbers = #tpu.dot_dimension_numbers<[2], [1], [1], [2], [0, 0, 0, 1, 1, 2], [0], [0]>} : vector<2x8x8xf32>, vector<2x8x16xf32>, vector<2x8x16xf32> -> vector<2x8x16xf32>
    "tpu.trace_stop"() : () -> ()
    %60 = vector.shape_cast %59 : vector<2x8x16xf32> to vector<16x16xf32>
    %61 = arith.truncf %60 : vector<16x16xf32> to vector<16x16xbf16>
    %c0_22 = arith.constant 0 : index
    %c0_23 = arith.constant 0 : index
    %62 = vector.load %arg10[%c0_22, %c0_23] : memref<16x64xbf16, #tpu.memory_space<vmem>>, vector<16x16xbf16>
    tpu.vector_store %arg10[%c0_22, %c0_23], %61 {strides = array<i32>} : memref<16x64xbf16, #tpu.memory_space<vmem>>, vector<16x16xbf16>,
    %63 = vector.extract_strided_slice %42 {offsets = [0, 0, 16], sizes = [2, 8, 16], strides = [1, 1, 1]} : vector<2x8x192xf32> to vector<2x8x16xf32>
    %64 = vector.extract_strided_slice %42 {offsets = [0, 0, 80], sizes = [2, 8, 16], strides = [1, 1, 1]} : vector<2x8x192xf32> to vector<2x8x16xf32>
    %65 = vector.extract_strided_slice %42 {offsets = [0, 0, 144], sizes = [2, 8, 16], strides = [1, 1, 1]} : vector<2x8x192xf32> to vector<2x8x16xf32>
    "tpu.trace_start"() <{level = 10 : i32, message = "bqd,bkd->bqk"}> : () -> ()
    %cst_24 = arith.constant dense<0.000000e+00> : vector<2x8x8xf32>
    %66 = tpu.matmul %63, %64, %cst_24 {dimension_numbers = #tpu.dot_dimension_numbers<[2], [2], [1], [1], [0, 0, 0, 1, 1, 1], [0], [0]>} : vector<2x8x16xf32>, vector<2x8x16xf32>, vector<2x8x8xf32> -> vector<2x8x8xf32>
    "tpu.trace_stop"() : () -> ()
    %67 = vector.broadcast %25 : vector<2x1x8xf32> to vector<2x8x8xf32>
    %68 = arith.addf %66, %67 : vector<2x8x8xf32>
    %cst_25 = arith.constant dense<0xFF800000> : vector<2x8xf32>
    %69 = vector.multi_reduction <maximumf>, %68, %cst_25 [2] : vector<2x8x8xf32> to vector<2x8xf32>
    %70 = vector.shape_cast %69 : vector<2x8xf32> to vector<2x8x1xf32>
    %71 = vector.broadcast %70 : vector<2x8x1xf32> to vector<2x8x8xf32>
    %72 = arith.subf %68, %71 : vector<2x8x8xf32>
    %73 = math.exp %72 : vector<2x8x8xf32>
    %cst_26 = arith.constant dense<0.000000e+00> : vector<2x8xf32>
    %74 = vector.multi_reduction <add>, %73, %cst_26 [2] : vector<2x8x8xf32> to vector<2x8xf32>
    %75 = vector.shape_cast %74 : vector<2x8xf32> to vector<2x8x1xf32>
    %76 = tpu.reciprocal %75 {approx = true} : vector<2x8x1xf32> -> vector<2x8x1xf32>
    %77 = vector.broadcast %76 : vector<2x8x1xf32> to vector<2x8x8xf32>
    %78 = arith.mulf %73, %77 : vector<2x8x8xf32>
    "tpu.trace_start"() <{level = 10 : i32, message = "bqk,bkd->bqd"}> : () -> ()
    %cst_27 = arith.constant dense<0.000000e+00> : vector<2x8x16xf32>
    %79 = tpu.matmul %78, %65, %cst_27 {dimension_numbers = #tpu.dot_dimension_numbers<[2], [1], [1], [2], [0, 0, 0, 1, 1, 2], [0], [0]>} : vector<2x8x8xf32>, vector<2x8x16xf32>, vector<2x8x16xf32> -> vector<2x8x16xf32>
    "tpu.trace_stop"() : () -> ()
    %80 = vector.shape_cast %79 : vector<2x8x16xf32> to vector<16x16xf32>
    %81 = arith.truncf %80 : vector<16x16xf32> to vector<16x16xbf16>
    %c0_28 = arith.constant 0 : index
    %c16 = arith.constant 16 : index
    %82 = vector.load %arg10[%c0_28, %c16] : memref<16x64xbf16, #tpu.memory_space<vmem>>, vector<16x16xbf16>
    tpu.vector_store %arg10[%c0_28, %c16], %81 {strides = array<i32>} : memref<16x64xbf16, #tpu.memory_space<vmem>>, vector<16x16xbf16>,
    %83 = vector.extract_strided_slice %42 {offsets = [0, 0, 32], sizes = [2, 8, 16], strides = [1, 1, 1]} : vector<2x8x192xf32> to vector<2x8x16xf32>
    %84 = vector.extract_strided_slice %42 {offsets = [0, 0, 96], sizes = [2, 8, 16], strides = [1, 1, 1]} : vector<2x8x192xf32> to vector<2x8x16xf32>
    %85 = vector.extract_strided_slice %42 {offsets = [0, 0, 160], sizes = [2, 8, 16], strides = [1, 1, 1]} : vector<2x8x192xf32> to vector<2x8x16xf32>
    "tpu.trace_start"() <{level = 10 : i32, message = "bqd,bkd->bqk"}> : () -> ()
    %cst_29 = arith.constant dense<0.000000e+00> : vector<2x8x8xf32>
    %86 = tpu.matmul %83, %84, %cst_29 {dimension_numbers = #tpu.dot_dimension_numbers<[2], [2], [1], [1], [0, 0, 0, 1, 1, 1], [0], [0]>} : vector<2x8x16xf32>, vector<2x8x16xf32>, vector<2x8x8xf32> -> vector<2x8x8xf32>
    "tpu.trace_stop"() : () -> ()
    %87 = vector.broadcast %25 : vector<2x1x8xf32> to vector<2x8x8xf32>
    %88 = arith.addf %86, %87 : vector<2x8x8xf32>
    %cst_30 = arith.constant dense<0xFF800000> : vector<2x8xf32>
    %89 = vector.multi_reduction <maximumf>, %88, %cst_30 [2] : vector<2x8x8xf32> to vector<2x8xf32>
    %90 = vector.shape_cast %89 : vector<2x8xf32> to vector<2x8x1xf32>
    %91 = vector.broadcast %90 : vector<2x8x1xf32> to vector<2x8x8xf32>
    %92 = arith.subf %88, %91 : vector<2x8x8xf32>
    %93 = math.exp %92 : vector<2x8x8xf32>
    %cst_31 = arith.constant dense<0.000000e+00> : vector<2x8xf32>
    %94 = vector.multi_reduction <add>, %93, %cst_31 [2] : vector<2x8x8xf32> to vector<2x8xf32>
    %95 = vector.shape_cast %94 : vector<2x8xf32> to vector<2x8x1xf32>
    %96 = tpu.reciprocal %95 {approx = true} : vector<2x8x1xf32> -> vector<2x8x1xf32>
    %97 = vector.broadcast %96 : vector<2x8x1xf32> to vector<2x8x8xf32>
    %98 = arith.mulf %93, %97 : vector<2x8x8xf32>
    "tpu.trace_start"() <{level = 10 : i32, message = "bqk,bkd->bqd"}> : () -> ()
    %cst_32 = arith.constant dense<0.000000e+00> : vector<2x8x16xf32>
    %99 = tpu.matmul %98, %85, %cst_32 {dimension_numbers = #tpu.dot_dimension_numbers<[2], [1], [1], [2], [0, 0, 0, 1, 1, 2], [0], [0]>} : vector<2x8x8xf32>, vector<2x8x16xf32>, vector<2x8x16xf32> -> vector<2x8x16xf32>
    "tpu.trace_stop"() : () -> ()
    %100 = vector.shape_cast %99 : vector<2x8x16xf32> to vector<16x16xf32>
    %101 = arith.truncf %100 : vector<16x16xf32> to vector<16x16xbf16>
    %c0_33 = arith.constant 0 : index
    %c32 = arith.constant 32 : index
    %102 = vector.load %arg10[%c0_33, %c32] : memref<16x64xbf16, #tpu.memory_space<vmem>>, vector<16x16xbf16>
    tpu.vector_store %arg10[%c0_33, %c32], %101 {strides = array<i32>} : memref<16x64xbf16, #tpu.memory_space<vmem>>, vector<16x16xbf16>,
    %103 = vector.extract_strided_slice %42 {offsets = [0, 0, 48], sizes = [2, 8, 16], strides = [1, 1, 1]} : vector<2x8x192xf32> to vector<2x8x16xf32>
    %104 = vector.extract_strided_slice %42 {offsets = [0, 0, 112], sizes = [2, 8, 16], strides = [1, 1, 1]} : vector<2x8x192xf32> to vector<2x8x16xf32>
    %105 = vector.extract_strided_slice %42 {offsets = [0, 0, 176], sizes = [2, 8, 16], strides = [1, 1, 1]} : vector<2x8x192xf32> to vector<2x8x16xf32>
    "tpu.trace_start"() <{level = 10 : i32, message = "bqd,bkd->bqk"}> : () -> ()
    %cst_34 = arith.constant dense<0.000000e+00> : vector<2x8x8xf32>
    %106 = tpu.matmul %103, %104, %cst_34 {dimension_numbers = #tpu.dot_dimension_numbers<[2], [2], [1], [1], [0, 0, 0, 1, 1, 1], [0], [0]>} : vector<2x8x16xf32>, vector<2x8x16xf32>, vector<2x8x8xf32> -> vector<2x8x8xf32>
    "tpu.trace_stop"() : () -> ()
    %107 = vector.broadcast %25 : vector<2x1x8xf32> to vector<2x8x8xf32>
    %108 = arith.addf %106, %107 : vector<2x8x8xf32>
    %cst_35 = arith.constant dense<0xFF800000> : vector<2x8xf32>
    %109 = vector.multi_reduction <maximumf>, %108, %cst_35 [2] : vector<2x8x8xf32> to vector<2x8xf32>
    %110 = vector.shape_cast %109 : vector<2x8xf32> to vector<2x8x1xf32>
    %111 = vector.broadcast %110 : vector<2x8x1xf32> to vector<2x8x8xf32>
    %112 = arith.subf %108, %111 : vector<2x8x8xf32>
    %113 = math.exp %112 : vector<2x8x8xf32>
    %cst_36 = arith.constant dense<0.000000e+00> : vector<2x8xf32>
    %114 = vector.multi_reduction <add>, %113, %cst_36 [2] : vector<2x8x8xf32> to vector<2x8xf32>
    %115 = vector.shape_cast %114 : vector<2x8xf32> to vector<2x8x1xf32>
    %116 = tpu.reciprocal %115 {approx = true} : vector<2x8x1xf32> -> vector<2x8x1xf32>
    %117 = vector.broadcast %116 : vector<2x8x1xf32> to vector<2x8x8xf32>
    %118 = arith.mulf %113, %117 : vector<2x8x8xf32>
    "tpu.trace_start"() <{level = 10 : i32, message = "bqk,bkd->bqd"}> : () -> ()
    %cst_37 = arith.constant dense<0.000000e+00> : vector<2x8x16xf32>
    %119 = tpu.matmul %118, %105, %cst_37 {dimension_numbers = #tpu.dot_dimension_numbers<[2], [1], [1], [2], [0, 0, 0, 1, 1, 2], [0], [0]>} : vector<2x8x8xf32>, vector<2x8x16xf32>, vector<2x8x16xf32> -> vector<2x8x16xf32>
    "tpu.trace_stop"() : () -> ()
    %120 = vector.shape_cast %119 : vector<2x8x16xf32> to vector<16x16xf32>
    %121 = arith.truncf %120 : vector<16x16xf32> to vector<16x16xbf16>
    %c0_38 = arith.constant 0 : index
    %c48 = arith.constant 48 : index
    %122 = vector.load %arg10[%c0_38, %c48] : memref<16x64xbf16, #tpu.memory_space<vmem>>, vector<16x16xbf16>
    tpu.vector_store %arg10[%c0_38, %c48], %121 {strides = array<i32>} : memref<16x64xbf16, #tpu.memory_space<vmem>>, vector<16x16xbf16>,
    %c0_39 = arith.constant 0 : index
    %c0_40 = arith.constant 0 : index
    %123 = vector.load %arg10[%c0_39, %c0_40] : memref<16x64xbf16, #tpu.memory_space<vmem>>, vector<16x64xbf16>
    %c0_41 = arith.constant 0 : index
    %c0_42 = arith.constant 0 : index
    %c0_43 = arith.constant 0 : index
    %124 = vector.load %arg6[%c0_41, %c0_42, %c0_43] : memref<2x64x64xbf16, #tpu.memory_space<vmem>>, vector<1x64x64xbf16>
    %125 = vector.shape_cast %124 : vector<1x64x64xbf16> to vector<64x64xbf16>
    %cst_44 = arith.constant dense<0.000000e+00> : vector<16x64xf32>
    %126 = tpu.matmul %123, %125, %cst_44 {dimension_numbers = #tpu.dot_dimension_numbers<[1], [0], [0], [1], [0, 0, 1, 1], [], []>} : vector<16x64xbf16>, vector<64x64xbf16>, vector<16x64xf32> -> vector<16x64xf32>
    %127 = vector.broadcast %30 : vector<1x64xf32> to vector<16x64xf32>
    %128 = arith.addf %126, %127 : vector<16x64xf32>
    %129 = arith.addf %128, %24 : vector<16x64xf32>
    %cst_45 = arith.constant dense<0.000000e+00> : vector<16xf32>
    %130 = vector.multi_reduction <add>, %129, %cst_45 [1] : vector<16x64xf32> to vector<16xf32>
    %131 = vector.shape_cast %130 : vector<16xf32> to vector<16x1xf32>
    %cst_46 = arith.constant 6.400000e+01 : f32
    %132 = vector.broadcast %cst_46 : f32 to vector<16x1xf32>
    %133 = arith.divf %131, %132 : vector<16x1xf32>
    %134 = vector.broadcast %133 : vector<16x1xf32> to vector<16x64xf32>
    %135 = arith.subf %129, %134 : vector<16x64xf32>
    %136 = arith.mulf %135, %135 : vector<16x64xf32>
    %cst_47 = arith.constant dense<0.000000e+00> : vector<16xf32>
    %137 = vector.multi_reduction <add>, %136, %cst_47 [1] : vector<16x64xf32> to vector<16xf32>
    %138 = vector.shape_cast %137 : vector<16xf32> to vector<16x1xf32>
    %cst_48 = arith.constant 6.400000e+01 : f32
    %139 = vector.broadcast %cst_48 : f32 to vector<16x1xf32>
    %140 = arith.divf %138, %139 : vector<16x1xf32>
    %141 = vector.broadcast %133 : vector<16x1xf32> to vector<16x64xf32>
    %142 = arith.subf %129, %141 : vector<16x64xf32>
    %cst_49 = arith.constant 9.99999974E-6 : f32
    %143 = vector.broadcast %cst_49 : f32 to vector<16x1xf32>
    %144 = arith.addf %140, %143 : vector<16x1xf32>
    %145 = math.rsqrt %144 : vector<16x1xf32>
    %146 = vector.broadcast %145 : vector<16x1xf32> to vector<16x64xf32>
    %147 = arith.mulf %142, %146 : vector<16x64xf32>
    %148 = vector.broadcast %31 : vector<1x64xf32> to vector<16x64xf32>
    %149 = arith.mulf %147, %148 : vector<16x64xf32>
    %150 = vector.broadcast %32 : vector<1x64xf32> to vector<16x64xf32>
    %151 = arith.addf %149, %150 : vector<16x64xf32>
    %152 = arith.truncf %151 : vector<16x64xf32> to vector<16x64xbf16>
    %c0_50 = arith.constant 0 : index
    %c0_51 = arith.constant 0 : index
    %c0_52 = arith.constant 0 : index
    %153 = vector.load %arg7[%c0_50, %c0_51, %c0_52] : memref<2x64x128xbf16, #tpu.memory_space<vmem>>, vector<1x64x128xbf16>
    %154 = vector.shape_cast %153 : vector<1x64x128xbf16> to vector<64x128xbf16>
    %cst_53 = arith.constant dense<0.000000e+00> : vector<16x128xf32>
    %155 = tpu.matmul %152, %154, %cst_53 {dimension_numbers = #tpu.dot_dimension_numbers<[1], [0], [0], [1], [0, 0, 1, 1], [], []>} : vector<16x64xbf16>, vector<64x128xbf16>, vector<16x128xf32> -> vector<16x128xf32>
    %156 = vector.broadcast %29 : vector<1x128xf32> to vector<16x128xf32>
    %157 = arith.addf %155, %156 : vector<16x128xf32>
    %cst_54 = arith.constant 5.000000e-01 : f32
    %158 = vector.broadcast %cst_54 : f32 to vector<16x128xf32>
    %159 = arith.mulf %158, %157 : vector<16x128xf32>
    %cst_55 = arith.constant 4.471500e-02 : f32
    %160 = vector.broadcast %cst_55 : f32 to vector<16x128xf32>
    %161 = arith.mulf %160, %157 : vector<16x128xf32>
    %162 = arith.mulf %161, %157 : vector<16x128xf32>
    %163 = arith.mulf %162, %157 : vector<16x128xf32>
    %164 = arith.addf %157, %163 : vector<16x128xf32>
    %cst_56 = arith.constant 0.797884583 : f32
    %165 = vector.broadcast %cst_56 : f32 to vector<16x128xf32>
    %166 = arith.mulf %165, %164 : vector<16x128xf32>
    %167 = math.tanh %166 : vector<16x128xf32>
    %cst_57 = arith.constant 1.000000e+00 : f32
    %168 = vector.broadcast %cst_57 : f32 to vector<16x128xf32>
    %169 = arith.addf %168, %167 : vector<16x128xf32>
    %170 = arith.mulf %159, %169 : vector<16x128xf32>
    %171 = arith.truncf %170 : vector<16x128xf32> to vector<16x128xbf16>
    %c0_58 = arith.constant 0 : index
    %c0_59 = arith.constant 0 : index
    %c0_60 = arith.constant 0 : index
    %172 = vector.load %arg8[%c0_58, %c0_59, %c0_60] : memref<2x128x64xbf16, #tpu.memory_space<vmem>>, vector<1x128x64xbf16>
    %173 = vector.shape_cast %172 : vector<1x128x64xbf16> to vector<128x64xbf16>
    %cst_61 = arith.constant dense<0.000000e+00> : vector<16x64xf32>
    %174 = tpu.matmul %171, %173, %cst_61 {dimension_numbers = #tpu.dot_dimension_numbers<[1], [0], [0], [1], [0, 0, 1, 1], [], []>} : vector<16x128xbf16>, vector<128x64xbf16>, vector<16x64xf32> -> vector<16x64xf32>
    %175 = vector.broadcast %33 : vector<1x64xf32> to vector<16x64xf32>
    %176 = arith.addf %174, %175 : vector<16x64xf32>
    %177 = arith.addf %176, %151 : vector<16x64xf32>
    %cst_62 = arith.constant dense<0.000000e+00> : vector<16xf32>
    %178 = vector.multi_reduction <add>, %177, %cst_62 [1] : vector<16x64xf32> to vector<16xf32>
    %179 = vector.shape_cast %178 : vector<16xf32> to vector<16x1xf32>
    %cst_63 = arith.constant 6.400000e+01 : f32
    %180 = vector.broadcast %cst_63 : f32 to vector<16x1xf32>
    %181 = arith.divf %179, %180 : vector<16x1xf32>
    %182 = vector.broadcast %181 : vector<16x1xf32> to vector<16x64xf32>
    %183 = arith.subf %177, %182 : vector<16x64xf32>
    %184 = arith.mulf %183, %183 : vector<16x64xf32>
    %cst_64 = arith.constant dense<0.000000e+00> : vector<16xf32>
    %185 = vector.multi_reduction <add>, %184, %cst_64 [1] : vector<16x64xf32> to vector<16xf32>
    %186 = vector.shape_cast %185 : vector<16xf32> to vector<16x1xf32>
    %cst_65 = arith.constant 6.400000e+01 : f32
    %187 = vector.broadcast %cst_65 : f32 to vector<16x1xf32>
    %188 = arith.divf %186, %187 : vector<16x1xf32>
    %189 = vector.broadcast %181 : vector<16x1xf32> to vector<16x64xf32>
    %190 = arith.subf %177, %189 : vector<16x64xf32>
    %cst_66 = arith.constant 9.99999974E-6 : f32
    %191 = vector.broadcast %cst_66 : f32 to vector<16x1xf32>
    %192 = arith.addf %188, %191 : vector<16x1xf32>
    %193 = math.rsqrt %192 : vector<16x1xf32>
    %194 = vector.broadcast %193 : vector<16x1xf32> to vector<16x64xf32>
    %195 = arith.mulf %190, %194 : vector<16x64xf32>
    %196 = vector.broadcast %34 : vector<1x64xf32> to vector<16x64xf32>
    %197 = arith.mulf %195, %196 : vector<16x64xf32>
    %198 = vector.broadcast %35 : vector<1x64xf32> to vector<16x64xf32>
    %199 = arith.addf %197, %198 : vector<16x64xf32>
    %c1_67 = arith.constant 1 : index
    %c0_68 = arith.constant 0 : index
    %c0_69 = arith.constant 0 : index
    %200 = vector.load %arg4[%c1_67, %c0_68, %c0_69] : memref<2x8x192xf32, #tpu.memory_space<vmem>>, vector<1x8x192xf32>
    %201 = vector.shape_cast %200 : vector<1x8x192xf32> to vector<8x192xf32>
    %202 = vector.extract_strided_slice %201 {offsets = [0, 0], sizes = [1, 192], strides = [1, 1]} : vector<8x192xf32> to vector<1x192xf32>
    %203 = vector.extract_strided_slice %201 {offsets = [1, 0], sizes = [1, 128], strides = [1, 1]} : vector<8x192xf32> to vector<1x128xf32>
    %204 = vector.extract_strided_slice %201 {offsets = [2, 0], sizes = [1, 64], strides = [1, 1]} : vector<8x192xf32> to vector<1x64xf32>
    %205 = vector.extract_strided_slice %201 {offsets = [3, 0], sizes = [1, 64], strides = [1, 1]} : vector<8x192xf32> to vector<1x64xf32>
    %206 = vector.extract_strided_slice %201 {offsets = [4, 0], sizes = [1, 64], strides = [1, 1]} : vector<8x192xf32> to vector<1x64xf32>
    %207 = vector.extract_strided_slice %201 {offsets = [5, 0], sizes = [1, 64], strides = [1, 1]} : vector<8x192xf32> to vector<1x64xf32>
    %208 = vector.extract_strided_slice %201 {offsets = [6, 0], sizes = [1, 64], strides = [1, 1]} : vector<8x192xf32> to vector<1x64xf32>
    %209 = vector.extract_strided_slice %201 {offsets = [7, 0], sizes = [1, 64], strides = [1, 1]} : vector<8x192xf32> to vector<1x64xf32>
    %210 = arith.truncf %199 : vector<16x64xf32> to vector<16x64xbf16>
    %c1_70 = arith.constant 1 : index
    %c0_71 = arith.constant 0 : index
    %c0_72 = arith.constant 0 : index
    %211 = vector.load %arg5[%c1_70, %c0_71, %c0_72] : memref<2x64x192xbf16, #tpu.memory_space<vmem>>, vector<1x64x192xbf16>
    %212 = vector.shape_cast %211 : vector<1x64x192xbf16> to vector<64x192xbf16>
    %cst_73 = arith.constant dense<0.000000e+00> : vector<16x192xf32>
    %213 = tpu.matmul %210, %212, %cst_73 {dimension_numbers = #tpu.dot_dimension_numbers<[1], [0], [0], [1], [0, 0, 1, 1], [], []>} : vector<16x64xbf16>, vector<64x192xbf16>, vector<16x192xf32> -> vector<16x192xf32>
    %214 = vector.broadcast %202 : vector<1x192xf32> to vector<16x192xf32>
    %215 = arith.addf %213, %214 : vector<16x192xf32>
    %216 = vector.shape_cast %215 : vector<16x192xf32> to vector<2x8x192xf32>
    %217 = vector.extract_strided_slice %216 {offsets = [0, 0, 0], sizes = [2, 8, 16], strides = [1, 1, 1]} : vector<2x8x192xf32> to vector<2x8x16xf32>
    %218 = vector.extract_strided_slice %216 {offsets = [0, 0, 64], sizes = [2, 8, 16], strides = [1, 1, 1]} : vector<2x8x192xf32> to vector<2x8x16xf32>
    %219 = vector.extract_strided_slice %216 {offsets = [0, 0, 128], sizes = [2, 8, 16], strides = [1, 1, 1]} : vector<2x8x192xf32> to vector<2x8x16xf32>
    "tpu.trace_start"() <{level = 10 : i32, message = "bqd,bkd->bqk"}> : () -> ()
    %cst_74 = arith.constant dense<0.000000e+00> : vector<2x8x8xf32>
    %220 = tpu.matmul %217, %218, %cst_74 {dimension_numbers = #tpu.dot_dimension_numbers<[2], [2], [1], [1], [0, 0, 0, 1, 1, 1], [0], [0]>} : vector<2x8x16xf32>, vector<2x8x16xf32>, vector<2x8x8xf32> -> vector<2x8x8xf32>
    "tpu.trace_stop"() : () -> ()
    %221 = vector.broadcast %25 : vector<2x1x8xf32> to vector<2x8x8xf32>
    %222 = arith.addf %220, %221 : vector<2x8x8xf32>
    %cst_75 = arith.constant dense<0xFF800000> : vector<2x8xf32>
    %223 = vector.multi_reduction <maximumf>, %222, %cst_75 [2] : vector<2x8x8xf32> to vector<2x8xf32>
    %224 = vector.shape_cast %223 : vector<2x8xf32> to vector<2x8x1xf32>
    %225 = vector.broadcast %224 : vector<2x8x1xf32> to vector<2x8x8xf32>
    %226 = arith.subf %222, %225 : vector<2x8x8xf32>
    %227 = math.exp %226 : vector<2x8x8xf32>
    %cst_76 = arith.constant dense<0.000000e+00> : vector<2x8xf32>
    %228 = vector.multi_reduction <add>, %227, %cst_76 [2] : vector<2x8x8xf32> to vector<2x8xf32>
    %229 = vector.shape_cast %228 : vector<2x8xf32> to vector<2x8x1xf32>
    %230 = tpu.reciprocal %229 {approx = true} : vector<2x8x1xf32> -> vector<2x8x1xf32>
    %231 = vector.broadcast %230 : vector<2x8x1xf32> to vector<2x8x8xf32>
    %232 = arith.mulf %227, %231 : vector<2x8x8xf32>
    "tpu.trace_start"() <{level = 10 : i32, message = "bqk,bkd->bqd"}> : () -> ()
    %cst_77 = arith.constant dense<0.000000e+00> : vector<2x8x16xf32>
    %233 = tpu.matmul %232, %219, %cst_77 {dimension_numbers = #tpu.dot_dimension_numbers<[2], [1], [1], [2], [0, 0, 0, 1, 1, 2], [0], [0]>} : vector<2x8x8xf32>, vector<2x8x16xf32>, vector<2x8x16xf32> -> vector<2x8x16xf32>
    "tpu.trace_stop"() : () -> ()
    %234 = vector.shape_cast %233 : vector<2x8x16xf32> to vector<16x16xf32>
    %235 = arith.truncf %234 : vector<16x16xf32> to vector<16x16xbf16>
    %c0_78 = arith.constant 0 : index
    %c0_79 = arith.constant 0 : index
    %236 = vector.load %arg10[%c0_78, %c0_79] : memref<16x64xbf16, #tpu.memory_space<vmem>>, vector<16x16xbf16>
    tpu.vector_store %arg10[%c0_78, %c0_79], %235 {strides = array<i32>} : memref<16x64xbf16, #tpu.memory_space<vmem>>, vector<16x16xbf16>,
    %237 = vector.extract_strided_slice %216 {offsets = [0, 0, 16], sizes = [2, 8, 16], strides = [1, 1, 1]} : vector<2x8x192xf32> to vector<2x8x16xf32>
    %238 = vector.extract_strided_slice %216 {offsets = [0, 0, 80], sizes = [2, 8, 16], strides = [1, 1, 1]} : vector<2x8x192xf32> to vector<2x8x16xf32>
    %239 = vector.extract_strided_slice %216 {offsets = [0, 0, 144], sizes = [2, 8, 16], strides = [1, 1, 1]} : vector<2x8x192xf32> to vector<2x8x16xf32>
    "tpu.trace_start"() <{level = 10 : i32, message = "bqd,bkd->bqk"}> : () -> ()
    %cst_80 = arith.constant dense<0.000000e+00> : vector<2x8x8xf32>
    %240 = tpu.matmul %237, %238, %cst_80 {dimension_numbers = #tpu.dot_dimension_numbers<[2], [2], [1], [1], [0, 0, 0, 1, 1, 1], [0], [0]>} : vector<2x8x16xf32>, vector<2x8x16xf32>, vector<2x8x8xf32> -> vector<2x8x8xf32>
    "tpu.trace_stop"() : () -> ()
    %241 = vector.broadcast %25 : vector<2x1x8xf32> to vector<2x8x8xf32>
    %242 = arith.addf %240, %241 : vector<2x8x8xf32>
    %cst_81 = arith.constant dense<0xFF800000> : vector<2x8xf32>
    %243 = vector.multi_reduction <maximumf>, %242, %cst_81 [2] : vector<2x8x8xf32> to vector<2x8xf32>
    %244 = vector.shape_cast %243 : vector<2x8xf32> to vector<2x8x1xf32>
    %245 = vector.broadcast %244 : vector<2x8x1xf32> to vector<2x8x8xf32>
    %246 = arith.subf %242, %245 : vector<2x8x8xf32>
    %247 = math.exp %246 : vector<2x8x8xf32>
    %cst_82 = arith.constant dense<0.000000e+00> : vector<2x8xf32>
    %248 = vector.multi_reduction <add>, %247, %cst_82 [2] : vector<2x8x8xf32> to vector<2x8xf32>
    %249 = vector.shape_cast %248 : vector<2x8xf32> to vector<2x8x1xf32>
    %250 = tpu.reciprocal %249 {approx = true} : vector<2x8x1xf32> -> vector<2x8x1xf32>
    %251 = vector.broadcast %250 : vector<2x8x1xf32> to vector<2x8x8xf32>
    %252 = arith.mulf %247, %251 : vector<2x8x8xf32>
    "tpu.trace_start"() <{level = 10 : i32, message = "bqk,bkd->bqd"}> : () -> ()
    %cst_83 = arith.constant dense<0.000000e+00> : vector<2x8x16xf32>
    %253 = tpu.matmul %252, %239, %cst_83 {dimension_numbers = #tpu.dot_dimension_numbers<[2], [1], [1], [2], [0, 0, 0, 1, 1, 2], [0], [0]>} : vector<2x8x8xf32>, vector<2x8x16xf32>, vector<2x8x16xf32> -> vector<2x8x16xf32>
    "tpu.trace_stop"() : () -> ()
    %254 = vector.shape_cast %253 : vector<2x8x16xf32> to vector<16x16xf32>
    %255 = arith.truncf %254 : vector<16x16xf32> to vector<16x16xbf16>
    %c0_84 = arith.constant 0 : index
    %c16_85 = arith.constant 16 : index
    %256 = vector.load %arg10[%c0_84, %c16_85] : memref<16x64xbf16, #tpu.memory_space<vmem>>, vector<16x16xbf16>
    tpu.vector_store %arg10[%c0_84, %c16_85], %255 {strides = array<i32>} : memref<16x64xbf16, #tpu.memory_space<vmem>>, vector<16x16xbf16>,
    %257 = vector.extract_strided_slice %216 {offsets = [0, 0, 32], sizes = [2, 8, 16], strides = [1, 1, 1]} : vector<2x8x192xf32> to vector<2x8x16xf32>
    %258 = vector.extract_strided_slice %216 {offsets = [0, 0, 96], sizes = [2, 8, 16], strides = [1, 1, 1]} : vector<2x8x192xf32> to vector<2x8x16xf32>
    %259 = vector.extract_strided_slice %216 {offsets = [0, 0, 160], sizes = [2, 8, 16], strides = [1, 1, 1]} : vector<2x8x192xf32> to vector<2x8x16xf32>
    "tpu.trace_start"() <{level = 10 : i32, message = "bqd,bkd->bqk"}> : () -> ()
    %cst_86 = arith.constant dense<0.000000e+00> : vector<2x8x8xf32>
    %260 = tpu.matmul %257, %258, %cst_86 {dimension_numbers = #tpu.dot_dimension_numbers<[2], [2], [1], [1], [0, 0, 0, 1, 1, 1], [0], [0]>} : vector<2x8x16xf32>, vector<2x8x16xf32>, vector<2x8x8xf32> -> vector<2x8x8xf32>
    "tpu.trace_stop"() : () -> ()
    %261 = vector.broadcast %25 : vector<2x1x8xf32> to vector<2x8x8xf32>
    %262 = arith.addf %260, %261 : vector<2x8x8xf32>
    %cst_87 = arith.constant dense<0xFF800000> : vector<2x8xf32>
    %263 = vector.multi_reduction <maximumf>, %262, %cst_87 [2] : vector<2x8x8xf32> to vector<2x8xf32>
    %264 = vector.shape_cast %263 : vector<2x8xf32> to vector<2x8x1xf32>
    %265 = vector.broadcast %264 : vector<2x8x1xf32> to vector<2x8x8xf32>
    %266 = arith.subf %262, %265 : vector<2x8x8xf32>
    %267 = math.exp %266 : vector<2x8x8xf32>
    %cst_88 = arith.constant dense<0.000000e+00> : vector<2x8xf32>
    %268 = vector.multi_reduction <add>, %267, %cst_88 [2] : vector<2x8x8xf32> to vector<2x8xf32>
    %269 = vector.shape_cast %268 : vector<2x8xf32> to vector<2x8x1xf32>
    %270 = tpu.reciprocal %269 {approx = true} : vector<2x8x1xf32> -> vector<2x8x1xf32>
    %271 = vector.broadcast %270 : vector<2x8x1xf32> to vector<2x8x8xf32>
    %272 = arith.mulf %267, %271 : vector<2x8x8xf32>
    "tpu.trace_start"() <{level = 10 : i32, message = "bqk,bkd->bqd"}> : () -> ()
    %cst_89 = arith.constant dense<0.000000e+00> : vector<2x8x16xf32>
    %273 = tpu.matmul %272, %259, %cst_89 {dimension_numbers = #tpu.dot_dimension_numbers<[2], [1], [1], [2], [0, 0, 0, 1, 1, 2], [0], [0]>} : vector<2x8x8xf32>, vector<2x8x16xf32>, vector<2x8x16xf32> -> vector<2x8x16xf32>
    "tpu.trace_stop"() : () -> ()
    %274 = vector.shape_cast %273 : vector<2x8x16xf32> to vector<16x16xf32>
    %275 = arith.truncf %274 : vector<16x16xf32> to vector<16x16xbf16>
    %c0_90 = arith.constant 0 : index
    %c32_91 = arith.constant 32 : index
    %276 = vector.load %arg10[%c0_90, %c32_91] : memref<16x64xbf16, #tpu.memory_space<vmem>>, vector<16x16xbf16>
    tpu.vector_store %arg10[%c0_90, %c32_91], %275 {strides = array<i32>} : memref<16x64xbf16, #tpu.memory_space<vmem>>, vector<16x16xbf16>,
    %277 = vector.extract_strided_slice %216 {offsets = [0, 0, 48], sizes = [2, 8, 16], strides = [1, 1, 1]} : vector<2x8x192xf32> to vector<2x8x16xf32>
    %278 = vector.extract_strided_slice %216 {offsets = [0, 0, 112], sizes = [2, 8, 16], strides = [1, 1, 1]} : vector<2x8x192xf32> to vector<2x8x16xf32>
    %279 = vector.extract_strided_slice %216 {offsets = [0, 0, 176], sizes = [2, 8, 16], strides = [1, 1, 1]} : vector<2x8x192xf32> to vector<2x8x16xf32>
    "tpu.trace_start"() <{level = 10 : i32, message = "bqd,bkd->bqk"}> : () -> ()
    %cst_92 = arith.constant dense<0.000000e+00> : vector<2x8x8xf32>
    %280 = tpu.matmul %277, %278, %cst_92 {dimension_numbers = #tpu.dot_dimension_numbers<[2], [2], [1], [1], [0, 0, 0, 1, 1, 1], [0], [0]>} : vector<2x8x16xf32>, vector<2x8x16xf32>, vector<2x8x8xf32> -> vector<2x8x8xf32>
    "tpu.trace_stop"() : () -> ()
    %281 = vector.broadcast %25 : vector<2x1x8xf32> to vector<2x8x8xf32>
    %282 = arith.addf %280, %281 : vector<2x8x8xf32>
    %cst_93 = arith.constant dense<0xFF800000> : vector<2x8xf32>
    %283 = vector.multi_reduction <maximumf>, %282, %cst_93 [2] : vector<2x8x8xf32> to vector<2x8xf32>
    %284 = vector.shape_cast %283 : vector<2x8xf32> to vector<2x8x1xf32>
    %285 = vector.broadcast %284 : vector<2x8x1xf32> to vector<2x8x8xf32>
    %286 = arith.subf %282, %285 : vector<2x8x8xf32>
    %287 = math.exp %286 : vector<2x8x8xf32>
    %cst_94 = arith.constant dense<0.000000e+00> : vector<2x8xf32>
    %288 = vector.multi_reduction <add>, %287, %cst_94 [2] : vector<2x8x8xf32> to vector<2x8xf32>
    %289 = vector.shape_cast %288 : vector<2x8xf32> to vector<2x8x1xf32>
    %290 = tpu.reciprocal %289 {approx = true} : vector<2x8x1xf32> -> vector<2x8x1xf32>
    %291 = vector.broadcast %290 : vector<2x8x1xf32> to vector<2x8x8xf32>
    %292 = arith.mulf %287, %291 : vector<2x8x8xf32>
    "tpu.trace_start"() <{level = 10 : i32, message = "bqk,bkd->bqd"}> : () -> ()
    %cst_95 = arith.constant dense<0.000000e+00> : vector<2x8x16xf32>
    %293 = tpu.matmul %292, %279, %cst_95 {dimension_numbers = #tpu.dot_dimension_numbers<[2], [1], [1], [2], [0, 0, 0, 1, 1, 2], [0], [0]>} : vector<2x8x8xf32>, vector<2x8x16xf32>, vector<2x8x16xf32> -> vector<2x8x16xf32>
    "tpu.trace_stop"() : () -> ()
    %294 = vector.shape_cast %293 : vector<2x8x16xf32> to vector<16x16xf32>
    %295 = arith.truncf %294 : vector<16x16xf32> to vector<16x16xbf16>
    %c0_96 = arith.constant 0 : index
    %c48_97 = arith.constant 48 : index
    %296 = vector.load %arg10[%c0_96, %c48_97] : memref<16x64xbf16, #tpu.memory_space<vmem>>, vector<16x16xbf16>
    tpu.vector_store %arg10[%c0_96, %c48_97], %295 {strides = array<i32>} : memref<16x64xbf16, #tpu.memory_space<vmem>>, vector<16x16xbf16>,
    %c0_98 = arith.constant 0 : index
    %c0_99 = arith.constant 0 : index
    %297 = vector.load %arg10[%c0_98, %c0_99] : memref<16x64xbf16, #tpu.memory_space<vmem>>, vector<16x64xbf16>
    %c1_100 = arith.constant 1 : index
    %c0_101 = arith.constant 0 : index
    %c0_102 = arith.constant 0 : index
    %298 = vector.load %arg6[%c1_100, %c0_101, %c0_102] : memref<2x64x64xbf16, #tpu.memory_space<vmem>>, vector<1x64x64xbf16>
    %299 = vector.shape_cast %298 : vector<1x64x64xbf16> to vector<64x64xbf16>
    %cst_103 = arith.constant dense<0.000000e+00> : vector<16x64xf32>
    %300 = tpu.matmul %297, %299, %cst_103 {dimension_numbers = #tpu.dot_dimension_numbers<[1], [0], [0], [1], [0, 0, 1, 1], [], []>} : vector<16x64xbf16>, vector<64x64xbf16>, vector<16x64xf32> -> vector<16x64xf32>
    %301 = vector.broadcast %204 : vector<1x64xf32> to vector<16x64xf32>
    %302 = arith.addf %300, %301 : vector<16x64xf32>
    %303 = arith.addf %302, %199 : vector<16x64xf32>
    %cst_104 = arith.constant dense<0.000000e+00> : vector<16xf32>
    %304 = vector.multi_reduction <add>, %303, %cst_104 [1] : vector<16x64xf32> to vector<16xf32>
    %305 = vector.shape_cast %304 : vector<16xf32> to vector<16x1xf32>
    %cst_105 = arith.constant 6.400000e+01 : f32
    %306 = vector.broadcast %cst_105 : f32 to vector<16x1xf32>
    %307 = arith.divf %305, %306 : vector<16x1xf32>
    %308 = vector.broadcast %307 : vector<16x1xf32> to vector<16x64xf32>
    %309 = arith.subf %303, %308 : vector<16x64xf32>
    %310 = arith.mulf %309, %309 : vector<16x64xf32>
    %cst_106 = arith.constant dense<0.000000e+00> : vector<16xf32>
    %311 = vector.multi_reduction <add>, %310, %cst_106 [1] : vector<16x64xf32> to vector<16xf32>
    %312 = vector.shape_cast %311 : vector<16xf32> to vector<16x1xf32>
    %cst_107 = arith.constant 6.400000e+01 : f32
    %313 = vector.broadcast %cst_107 : f32 to vector<16x1xf32>
    %314 = arith.divf %312, %313 : vector<16x1xf32>
    %315 = vector.broadcast %307 : vector<16x1xf32> to vector<16x64xf32>
    %316 = arith.subf %303, %315 : vector<16x64xf32>
    %cst_108 = arith.constant 9.99999974E-6 : f32
    %317 = vector.broadcast %cst_108 : f32 to vector<16x1xf32>
    %318 = arith.addf %314, %317 : vector<16x1xf32>
    %319 = math.rsqrt %318 : vector<16x1xf32>
    %320 = vector.broadcast %319 : vector<16x1xf32> to vector<16x64xf32>
    %321 = arith.mulf %316, %320 : vector<16x64xf32>
    %322 = vector.broadcast %205 : vector<1x64xf32> to vector<16x64xf32>
    %323 = arith.mulf %321, %322 : vector<16x64xf32>
    %324 = vector.broadcast %206 : vector<1x64xf32> to vector<16x64xf32>
    %325 = arith.addf %323, %324 : vector<16x64xf32>
    %326 = arith.truncf %325 : vector<16x64xf32> to vector<16x64xbf16>
    %c1_109 = arith.constant 1 : index
    %c0_110 = arith.constant 0 : index
    %c0_111 = arith.constant 0 : index
    %327 = vector.load %arg7[%c1_109, %c0_110, %c0_111] : memref<2x64x128xbf16, #tpu.memory_space<vmem>>, vector<1x64x128xbf16>
    %328 = vector.shape_cast %327 : vector<1x64x128xbf16> to vector<64x128xbf16>
    %cst_112 = arith.constant dense<0.000000e+00> : vector<16x128xf32>
    %329 = tpu.matmul %326, %328, %cst_112 {dimension_numbers = #tpu.dot_dimension_numbers<[1], [0], [0], [1], [0, 0, 1, 1], [], []>} : vector<16x64xbf16>, vector<64x128xbf16>, vector<16x128xf32> -> vector<16x128xf32>
    %330 = vector.broadcast %203 : vector<1x128xf32> to vector<16x128xf32>
    %331 = arith.addf %329, %330 : vector<16x128xf32>
    %cst_113 = arith.constant 5.000000e-01 : f32
    %332 = vector.broadcast %cst_113 : f32 to vector<16x128xf32>
    %333 = arith.mulf %332, %331 : vector<16x128xf32>
    %cst_114 = arith.constant 4.471500e-02 : f32
    %334 = vector.broadcast %cst_114 : f32 to vector<16x128xf32>
    %335 = arith.mulf %334, %331 : vector<16x128xf32>
    %336 = arith.mulf %335, %331 : vector<16x128xf32>
    %337 = arith.mulf %336, %331 : vector<16x128xf32>
    %338 = arith.addf %331, %337 : vector<16x128xf32>
    %cst_115 = arith.constant 0.797884583 : f32
    %339 = vector.broadcast %cst_115 : f32 to vector<16x128xf32>
    %340 = arith.mulf %339, %338 : vector<16x128xf32>
    %341 = math.tanh %340 : vector<16x128xf32>
    %cst_116 = arith.constant 1.000000e+00 : f32
    %342 = vector.broadcast %cst_116 : f32 to vector<16x128xf32>
    %343 = arith.addf %342, %341 : vector<16x128xf32>
    %344 = arith.mulf %333, %343 : vector<16x128xf32>
    %345 = arith.truncf %344 : vector<16x128xf32> to vector<16x128xbf16>
    %c1_117 = arith.constant 1 : index
    %c0_118 = arith.constant 0 : index
    %c0_119 = arith.constant 0 : index
    %346 = vector.load %arg8[%c1_117, %c0_118, %c0_119] : memref<2x128x64xbf16, #tpu.memory_space<vmem>>, vector<1x128x64xbf16>
    %347 = vector.shape_cast %346 : vector<1x128x64xbf16> to vector<128x64xbf16>
    %cst_120 = arith.constant dense<0.000000e+00> : vector<16x64xf32>
    %348 = tpu.matmul %345, %347, %cst_120 {dimension_numbers = #tpu.dot_dimension_numbers<[1], [0], [0], [1], [0, 0, 1, 1], [], []>} : vector<16x128xbf16>, vector<128x64xbf16>, vector<16x64xf32> -> vector<16x64xf32>
    %349 = vector.broadcast %207 : vector<1x64xf32> to vector<16x64xf32>
    %350 = arith.addf %348, %349 : vector<16x64xf32>
    %351 = arith.addf %350, %325 : vector<16x64xf32>
    %cst_121 = arith.constant dense<0.000000e+00> : vector<16xf32>
    %352 = vector.multi_reduction <add>, %351, %cst_121 [1] : vector<16x64xf32> to vector<16xf32>
    %353 = vector.shape_cast %352 : vector<16xf32> to vector<16x1xf32>
    %cst_122 = arith.constant 6.400000e+01 : f32
    %354 = vector.broadcast %cst_122 : f32 to vector<16x1xf32>
    %355 = arith.divf %353, %354 : vector<16x1xf32>
    %356 = vector.broadcast %355 : vector<16x1xf32> to vector<16x64xf32>
    %357 = arith.subf %351, %356 : vector<16x64xf32>
    %358 = arith.mulf %357, %357 : vector<16x64xf32>
    %cst_123 = arith.constant dense<0.000000e+00> : vector<16xf32>
    %359 = vector.multi_reduction <add>, %358, %cst_123 [1] : vector<16x64xf32> to vector<16xf32>
    %360 = vector.shape_cast %359 : vector<16xf32> to vector<16x1xf32>
    %cst_124 = arith.constant 6.400000e+01 : f32
    %361 = vector.broadcast %cst_124 : f32 to vector<16x1xf32>
    %362 = arith.divf %360, %361 : vector<16x1xf32>
    %363 = vector.broadcast %355 : vector<16x1xf32> to vector<16x64xf32>
    %364 = arith.subf %351, %363 : vector<16x64xf32>
    %cst_125 = arith.constant 9.99999974E-6 : f32
    %365 = vector.broadcast %cst_125 : f32 to vector<16x1xf32>
    %366 = arith.addf %362, %365 : vector<16x1xf32>
    %367 = math.rsqrt %366 : vector<16x1xf32>
    %368 = vector.broadcast %367 : vector<16x1xf32> to vector<16x64xf32>
    %369 = arith.mulf %364, %368 : vector<16x64xf32>
    %370 = vector.broadcast %208 : vector<1x64xf32> to vector<16x64xf32>
    %371 = arith.mulf %369, %370 : vector<16x64xf32>
    %372 = vector.broadcast %209 : vector<1x64xf32> to vector<16x64xf32>
    %373 = arith.addf %371, %372 : vector<16x64xf32>
    %c0_126 = arith.constant 0 : index
    %c0_127 = arith.constant 0 : index
    %374 = vector.load %arg9[%c0_126, %c0_127] : memref<16x64xf32, #tpu.memory_space<vmem>>, vector<16x64xf32>
    tpu.vector_store %arg9[%c0_126, %c0_127], %373 {strides = array<i32>} : memref<16x64xf32, #tpu.memory_space<vmem>>, vector<16x64xf32>,
    return
  }
  func.func @transform_0(%arg0: i32) -> (i32, i32) {
    %c0_i32 = arith.constant 0 : i32
    %c0_i32_0 = arith.constant 0 : i32
    %c0_i32_1 = arith.constant 0 : i32
    return %c0_i32, %c0_i32_0 : i32, i32
  }
  func.func @transform_1(%arg0: i32) -> (i32, i32, i32) {
    %c0_i32 = arith.constant 0 : i32
    %c0_i32_0 = arith.constant 0 : i32
    %c0_i32_1 = arith.constant 0 : i32
    %c0_i32_2 = arith.constant 0 : i32
    return %c0_i32, %c0_i32_0, %c0_i32_1 : i32, i32, i32
  }
  func.func @transform_2(%arg0: i32) -> (i32, i32) {
    %c0_i32 = arith.constant 0 : i32
    %c0_i32_0 = arith.constant 0 : i32
    %c0_i32_1 = arith.constant 0 : i32
    return %c0_i32, %c0_i32_0 : i32, i32
  }
  func.func @transform_3(%arg0: i32) -> (i32, i32, i32) {
    %c0_i32 = arith.constant 0 : i32
    %c0_i32_0 = arith.constant 0 : i32
    %c0_i32_1 = arith.constant 0 : i32
    %c0_i32_2 = arith.constant 0 : i32
    return %c0_i32, %c0_i32_0, %c0_i32_1 : i32, i32, i32
  }
  func.func @transform_4(%arg0: i32) -> (i32, i32, i32) {
    %c0_i32 = arith.constant 0 : i32
    %c0_i32_0 = arith.constant 0 : i32
    %c0_i32_1 = arith.constant 0 : i32
    %c0_i32_2 = arith.constant 0 : i32
    return %c0_i32, %c0_i32_0, %c0_i32_1 : i32, i32, i32
  }
  func.func @transform_5(%arg0: i32) -> (i32, i32, i32) {
    %c0_i32 = arith.constant 0 : i32
    %c0_i32_0 = arith.constant 0 : i32
    %c0_i32_1 = arith.constant 0 : i32
    %c0_i32_2 = arith.constant 0 : i32
    return %c0_i32, %c0_i32_0, %c0_i32_1 : i32, i32, i32
  }
  func.func @transform_6(%arg0: i32) -> (i32, i32, i32) {
    %c0_i32 = arith.constant 0 : i32
    %c0_i32_0 = arith.constant 0 : i32
    %c0_i32_1 = arith.constant 0 : i32
    %c0_i32_2 = arith.constant 0 : i32
    return %c0_i32, %c0_i32_0, %c0_i32_1 : i32, i32, i32
  }
  func.func @transform_7(%arg0: i32) -> (i32, i32, i32) {
    %c0_i32 = arith.constant 0 : i32
    %c0_i32_0 = arith.constant 0 : i32
    %c0_i32_1 = arith.constant 0 : i32
    %c0_i32_2 = arith.constant 0 : i32
    return %c0_i32, %c0_i32_0, %c0_i32_1 : i32, i32, i32
  }
  func.func @transform_8(%arg0: i32) -> (i32, i32) {
    %c0_i32 = arith.constant 0 : i32
    %c0_i32_0 = arith.constant 0 : i32
    %c0_i32_1 = arith.constant 0 : i32
    return %c0_i32, %c0_i32_0 : i32, i32
  }
}

</mosaic_0001>

<llo_original>
// kernel: extended_roberta_forward.1
$region0: #{extended_roberta_forward.1}
  #allocation0 [shape = 'u32[]', space=smem, size = 0x4, offset = 0x4, fixed_abs, tag = 'smem constant byte address 0x4 - core index']
  #allocation1 [shape = 'u32[144,128]{1,0:T(1,128)}', space=vmem, size = 0x12000, scoped, tag = 'internal scratch']
  #allocation2 [shape = 'bf16[16,64]{1,0:T(16,128)(2,1)}', space=vmem, size = 0x1000, scoped, tag = 'scratch operand']
  %s0 = inlined_call_operand.vmem [shape: f32[16,64], index: 0, kind: input, shape index: {}]
  %s1 = inlined_call_operand.vmem [shape: f32[2,1,8], index: 1, kind: input, shape index: {}]
  %s2 = inlined_call_operand.vmem [shape: f32[2,64], index: 2, kind: input, shape index: {}]
  %s3 = inlined_call_operand.vmem [shape: f32[2,8,192], index: 3, kind: input, shape index: {}]
  %s4 = inlined_call_operand.vmem [shape: bf16[2,64,192], index: 4, kind: input, shape index: {}]
  %s5 = inlined_call_operand.vmem [shape: bf16[2,64,64], index: 5, kind: input, shape index: {}]
  %s6 = inlined_call_operand.vmem [shape: bf16[2,64,128], index: 6, kind: input, shape index: {}]
  %s7 = inlined_call_operand.vmem [shape: bf16[2,128,64], index: 7, kind: input, shape index: {}]
  %s8 = inlined_call_operand.hbm [shape: f32[16,64], index: 8, kind: output, shape index: {}]
  %s9 = sld [smem:[#allocation0]]
  $region42: #{extended_roberta_forward.1} parent=0
    _
  %s11 = ssub.s32 1, %s9
  %s12 = scalar_select 0, %s11, %s9
  $region1: #{extended_roberta_forward.1} parent=0
    #allocation3 [shape = 'u8[8192]{0}', space=vmem, size = 0x2000, scoped, tag = 'output window, operand 0, single buffered']
    #allocation4 [shape = 's32[1]{0}', space=sflag, size = 0x4, scoped, tag = 'scoped memory for extended_roberta_forward.1']
    %13 = vsyncpa [#allocation4], 0
    // Predicated region
    $region2: #{extended_roberta_forward.1} parent=1 // pred_check
      _
    $region3: #{extended_roberta_forward.1} parent=1 // pred_check_branch
      %15 = sbr.rel (0) target = $region5
    $region4: #{extended_roberta_forward.1} parent=1 // pred_region
      _
    $region5: #{extended_roberta_forward.1} parent=1 // pred_fallthru
      _
    // Predicated region
    $region6: #{extended_roberta_forward.1} parent=1 // pred_check
      _
    $region7: #{extended_roberta_forward.1} parent=1 // pred_check_branch
      %17 = sbr.rel (0) target = $region9
    $region8: #{extended_roberta_forward.1} parent=1 // pred_region
      _
    $region9: #{extended_roberta_forward.1} parent=1 // pred_fallthru
      _
    // Predicated region
    $region10: #{extended_roberta_forward.1} parent=1 // pred_check
      _
    $region11: #{extended_roberta_forward.1} parent=1 // pred_check_branch
      %19 = sbr.rel (0) target = $region13
    $region12: #{extended_roberta_forward.1} parent=1 // pred_region
      _
    $region13: #{extended_roberta_forward.1} parent=1 // pred_fallthru
      _
    // Predicated region
    $region14: #{extended_roberta_forward.1} parent=1 // pred_check
      _
    $region15: #{extended_roberta_forward.1} parent=1 // pred_check_branch
      %21 = sbr.rel (0) target = $region17
    $region16: #{extended_roberta_forward.1} parent=1 // pred_region
      _
    $region17: #{extended_roberta_forward.1} parent=1 // pred_fallthru
      _
    // Predicated region
    $region18: #{extended_roberta_forward.1} parent=1 // pred_check
      _
    $region19: #{extended_roberta_forward.1} parent=1 // pred_check_branch
      %23 = sbr.rel (0) target = $region21
    $region20: #{extended_roberta_forward.1} parent=1 // pred_region
      _
    $region21: #{extended_roberta_forward.1} parent=1 // pred_fallthru
      _
    // Predicated region
    $region22: #{extended_roberta_forward.1} parent=1 // pred_check
      _
    $region23: #{extended_roberta_forward.1} parent=1 // pred_check_branch
      %25 = sbr.rel (0) target = $region25
    $region24: #{extended_roberta_forward.1} parent=1 // pred_region
      _
    $region25: #{extended_roberta_forward.1} parent=1 // pred_fallthru
      _
    // Predicated region
    $region26: #{extended_roberta_forward.1} parent=1 // pred_check
      _
    $region27: #{extended_roberta_forward.1} parent=1 // pred_check_branch
      %27 = sbr.rel (0) target = $region29
    $region28: #{extended_roberta_forward.1} parent=1 // pred_region
      _
    $region29: #{extended_roberta_forward.1} parent=1 // pred_fallthru
      _
    // Predicated region
    $region30: #{extended_roberta_forward.1} parent=1 // pred_check
      _
    $region31: #{extended_roberta_forward.1} parent=1 // pred_check_branch
      %29 = sbr.rel (0) target = $region33
    $region32: #{extended_roberta_forward.1} parent=1 // pred_region
      _
    $region33: #{extended_roberta_forward.1} parent=1 // pred_fallthru
      _
    %v31 = vld [vmem:[%s0] sm:$0xff]
    %v32 = vld [vmem:[%s0 + $0x8] sm:$0xff]
    %v33 = vld [vmem:[%s2] sm:$0x1]
    %v34 = vld [vmem:[%s2 + $0x1] sm:$0x1]
    %vm35 = vcmask 523264
    %v36 = vsel %vm35, %v31, 0.0
    %37 = vadd.xlane.f32.xlu0 %v36
    %v38 = vpop.xlane.xlu0 %37
    %v39 = vsel %vm35, %v32, 0.0
    %40 = vadd.xlane.f32.xlu0 %v39
    %v41 = vpop.xlane.xlu0 %40
    %v42 = vrcp.pop 64.0
    %v43 = vmul.f32 %v38, %v42
    %v44 = vmul.f32 %v41, %v42
    %v45 = vsub.f32 %v31, %v43
    %v46 = vsub.f32 %v32, %v44
    %v47 = vmul.f32 %v45, %v45
    %v48 = vmul.f32 %v46, %v46
    %v49 = vsel %vm35, %v47, 0.0
    %50 = vadd.xlane.f32.xlu0 %v49
    %v51 = vpop.xlane.xlu0 %50
    %v52 = vsel %vm35, %v48, 0.0
    %53 = vadd.xlane.f32.xlu0 %v52
    %v54 = vpop.xlane.xlu0 %53
    %v55 = vmul.f32 %v51, %v42
    %v56 = vmul.f32 %v54, %v42
    %v57 = vadd.f32 %v55, 1e-05
    %v58 = vadd.f32 %v56, 1e-05
    %v59 = vrsqrt.pop %v57
    %v60 = vrsqrt.pop %v58
    %v61 = vmul.f32 %v45, %v59
    %v62 = vmul.f32 %v46, %v60
    %v63 = vlaneseq
    %v64 = vshrl.u32 %v63, 7
    %v65 = vsub.s32 0, %v64
    %v66 = vrot.slane %v33, %v65
    %v67 = vmul.f32 %v61, %v66
    %v68 = vmul.f32 %v62, %v66
    %v69 = vlaneseq
    %v70 = vshrl.u32 %v69, 7
    %v71 = vsub.s32 0, %v70
    %v72 = vrot.slane %v34, %v71
    %v73 = vadd.f32 %v67, %v72
    %v74 = vadd.f32 %v68, %v72
    %v75 = vld [vmem:[%s1] sm:$0x1]
    %v76 = vld [vmem:[%s1 + $0x1] sm:$0x1]
    %v77 = vld [vmem:[%s3] sm:$0xff]
    %v78 = vld [vmem:[%s3 + $0x8] sm:$0xff]
    %v79 = vpack.c.bf16 %v74, %v73
    %v80 = vld [vmem:[%s4] sm:$0xff]
    %v81 = vld [vmem:[%s4 + $0x8] sm:$0xff]
    %v82 = vld [vmem:[%s4 + $0x10] sm:$0xff]
    %v83 = vld [vmem:[%s4 + $0x18] sm:$0xff]
    %v84 = vld [vmem:[%s4 + $0x20] sm:$0xff]
    %v85 = vld [vmem:[%s4 + $0x28] sm:$0xff]
    %v86 = vld [vmem:[%s4 + $0x30] sm:$0xff]
    %v87 = vld [vmem:[%s4 + $0x38] sm:$0xff]
    %v88 = vlaneseq
    %v89 = vshrl.u32 %v88, 7
    %v90 = vsub.s32 0, %v89
    %v91 = vrot.slane %v77, %v90
    %v92 = vlaneseq
    %v93 = vshrl.u32 %v92, 7
    %v94 = vsub.s32 0, %v93
    %v95 = vrot.slane %v78, %v94
    %v104 = vunpack.c.l.b16 %v80
    %v105 = vunpack.c.h.b16 %v80
    %v106 = vunpack.c.l.b16 %v81
    %v107 = vunpack.c.h.b16 %v81
    %v108 = vunpack.c.l.b16 %v82
    %v109 = vunpack.c.h.b16 %v82
    %v110 = vunpack.c.l.b16 %v83
    %v111 = vunpack.c.h.b16 %v83
    %v112 = vunpack.c.l.b16 %v84
    %v113 = vunpack.c.h.b16 %v84
    %v114 = vunpack.c.l.b16 %v85
    %v115 = vunpack.c.h.b16 %v85
    %v116 = vunpack.c.l.b16 %v86
    %v117 = vunpack.c.h.b16 %v86
    %v118 = vunpack.c.l.b16 %v87
    %v119 = vunpack.c.h.b16 %v87
    %v120 = vpack.c.b16 %v106, %v104
    %v121 = vpack.c.b16 %v107, %v105
    %v122 = vpack.c.b16 %v110, %v108
    %v123 = vpack.c.b16 %v111, %v109
    %v124 = vpack.c.b16 %v114, %v112
    %v125 = vpack.c.b16 %v115, %v113
    %v126 = vpack.c.b16 %v118, %v116
    %v127 = vpack.c.b16 %v119, %v117
    %v137 = vsel %vm35, %v79, 0
    %139 = vmatprep.subr.bf16.mxu0 %v121
    %140 = vmatpush1.bf16.msra.mxu0 %v120
    %141 = vmatprep.subr.bf16.mxu0 %v123
    %142 = vmatpush1.bf16.msra.mxu0 %v122
    %143 = vmatprep.subr.bf16.mxu0 %v125
    %144 = vmatpush1.bf16.msra.mxu0 %v124
    %145 = vmatprep.subr.bf16.mxu0 %v127
    %146 = vmatpush1.bf16.msra.mxu0 %v126
    %147 = vmatprep.subr.bf16.mxu0 0
    %148 = vmatpush1.bf16.msra.mxu0 0
    %149 = vmatprep.subr.bf16.mxu0 0
    %150 = vmatpush1.bf16.msra.mxu0 0
    %151 = vmatprep.subr.bf16.mxu0 0
    %152 = vmatpush1.bf16.msra.mxu0 0
    %153 = vmatprep.subr.bf16.mxu0 0
    %154 = vmatpush1.bf16.msra.mxu0 0
    %155 = vmatprep.subr.bf16.mxu0 0
    %156 = vmatpush1.bf16.msra.mxu0 0
    %157 = vmatprep.subr.bf16.mxu0 0
    %158 = vmatpush1.bf16.msra.mxu0 0
    %159 = vmatprep.subr.bf16.mxu0 0
    %160 = vmatpush1.bf16.msra.mxu0 0
    %161 = vmatprep.subr.bf16.mxu0 0
    %162 = vmatpush1.bf16.msra.mxu0 0
    %163 = vmatprep.subr.bf16.mxu0 0
    %164 = vmatpush1.bf16.msra.mxu0 0
    %165 = vmatprep.subr.bf16.mxu0 0
    %166 = vmatpush1.bf16.msra.mxu0 0
    %167 = vmatprep.subr.bf16.mxu0 0
    %168 = vmatpush1.bf16.msra.mxu0 0
    %169 = vmatprep.subr.bf16.mxu0 0
    %170 = vmatpush1.bf16.msra.mxu0 0
    %171 = vmatprep.mubr.bf16.mxu0 0
    %172 = vmatmul.mubr.bf16.gmra.mrb[0].mxu0 %v137
    %v173 = vpop.f32.mrb[0].mxu0
    %v174 = vadd.f32 %v91, %v173
    %v175 = vpop.f32.mrb[0].mxu0
    %v176 = vadd.f32 %v95, %v175
    %v177 = vpop.f32.mrb[0].mxu0
    %v178 = vadd.f32 %v91, %v177
    %v179 = vpop.f32.mrb[0].mxu0
    %v180 = vadd.f32 %v95, %v179
    %181 = vdwg.mxu0
    %v184 = vlaneseq
    %v185 = vshrl.u32 %v184, 7
    %v186 = vsub.s32 0, %v185
    %v187 = vrot.slane %v75, %v186
    %v188 = vlaneseq
    %v189 = vshrl.u32 %v188, 7
    %v190 = vsub.s32 0, %v189
    %v191 = vrot.slane %v76, %v190
    %195 = vrot.lane.b32.xlu0 %v174, 64
    %v196 = vpop.permute.xlu0 %195
    %vm197 = vcmask 130048
    %v198 = vsel %vm197, %v174, 0
    %v200 = vsel %vm197, %v196, 0
    %202 = vmatprep.subr.mxu0 0.0
    %203 = vmatpush1.xpose.msra.mxu0 %v200
    %204 = vmatprep.subr.mxu0 0.0
    %205 = vmatpush1.xpose.msra.mxu0 0.0
    %206 = vmatprep.subr.mxu0 0.0
    %207 = vmatpush1.xpose.msra.mxu0 0.0
    %208 = vmatprep.subr.mxu0 0.0
    %209 = vmatpush1.xpose.msra.mxu0 0.0
    %210 = vmatprep.subr.mxu0 0.0
    %211 = vmatpush1.xpose.msra.mxu0 0.0
    %212 = vmatprep.subr.mxu0 0.0
    %213 = vmatpush1.xpose.msra.mxu0 0.0
    %214 = vmatprep.subr.mxu0 0.0
    %215 = vmatpush1.xpose.msra.mxu0 0.0
    %216 = vmatprep.subr.mxu0 0.0
    %217 = vmatpush1.xpose.msra.mxu0 0.0
    %218 = vmatprep.subr.mxu0 0.0
    %219 = vmatpush1.xpose.msra.mxu0 0.0
    %220 = vmatprep.subr.mxu0 0.0
    %221 = vmatpush1.xpose.msra.mxu0 0.0
    %222 = vmatprep.subr.mxu0 0.0
    %223 = vmatpush1.xpose.msra.mxu0 0.0
    %224 = vmatprep.subr.mxu0 0.0
    %225 = vmatpush1.xpose.msra.mxu0 0.0
    %226 = vmatprep.subr.mxu0 0.0
    %227 = vmatpush1.xpose.msra.mxu0 0.0
    %228 = vmatprep.subr.mxu0 0.0
    %229 = vmatpush1.xpose.msra.mxu0 0.0
    %230 = vmatprep.subr.mxu0 0.0
    %231 = vmatpush1.xpose.msra.mxu0 0.0
    %232 = vmatprep.subr.mxu0 0.0
    %233 = vmatpush1.xpose.msra.mxu0 0.0
    %234 = vmatprep.subr.mxu0 0.0
    %235 = vmatpush1.xpose.msra.mxu0 0.0
    %236 = vmatprep.subr.mxu0 0.0
    %237 = vmatpush1.xpose.msra.mxu0 0.0
    %238 = vmatprep.subr.mxu0 0.0
    %239 = vmatpush1.xpose.msra.mxu0 0.0
    %240 = vmatprep.subr.mxu0 0.0
    %241 = vmatpush1.xpose.msra.mxu0 0.0
    %242 = vmatprep.subr.mxu0 0.0
    %243 = vmatpush1.xpose.msra.mxu0 0.0
    %244 = vmatprep.subr.mxu0 0.0
    %245 = vmatpush1.xpose.msra.mxu0 0.0
    %246 = vmatprep.subr.mxu0 0.0
    %247 = vmatpush1.xpose.msra.mxu0 0.0
    %248 = vmatprep.subr.mxu0 0.0
    %249 = vmatpush1.xpose.msra.mxu0 0.0
    %250 = vmatprep.subr.mxu0 0.0
    %251 = vmatpush1.xpose.msra.mxu0 0.0
    %252 = vmatprep.subr.mxu0 0.0
    %253 = vmatpush1.xpose.msra.mxu0 0.0
    %254 = vmatprep.subr.mxu0 0.0
    %255 = vmatpush1.xpose.msra.mxu0 0.0
    %256 = vmatprep.subr.mxu0 0.0
    %257 = vmatpush1.xpose.msra.mxu0 0.0
    %258 = vmatprep.subr.mxu0 0.0
    %259 = vmatpush1.xpose.msra.mxu0 0.0
    %260 = vmatprep.subr.mxu0 0.0
    %261 = vmatpush1.xpose.msra.mxu0 0.0
    %262 = vmatprep.subr.mxu0 0.0
    %263 = vmatpush1.xpose.msra.mxu0 0.0
    %264 = vmatprep.subr.mxu0 0.0
    %265 = vmatpush1.xpose.msra.mxu0 0.0
    %266 = vmatprep.mubr.f32.mxu0 0.0
    %267 = vmatmul.mubr.f32.gmra.mrb[0].mxu0 %v198
    %v268 = vpop.f32.mrb[0].mxu0
    %v269 = vadd.f32 %v187, %v268
    %v270 = vpop.f32.mrb[0].mxu0
    %271 = vdwg.mxu0
    %273 = vrot.lane.b32.xlu0 %v178, 64
    %v274 = vpop.permute.xlu0 %273
    %v275 = vsel %vm197, %v178, 0
    %v277 = vsel %vm197, %v274, 0
    %279 = vmatprep.subr.mxu0 0.0
    %280 = vmatpush1.xpose.msra.mxu0 %v277
    %281 = vmatprep.subr.mxu0 0.0
    %282 = vmatpush1.xpose.msra.mxu0 0.0
    %283 = vmatprep.subr.mxu0 0.0
    %284 = vmatpush1.xpose.msra.mxu0 0.0
    %285 = vmatprep.subr.mxu0 0.0
    %286 = vmatpush1.xpose.msra.mxu0 0.0
    %287 = vmatprep.subr.mxu0 0.0
    %288 = vmatpush1.xpose.msra.mxu0 0.0
    %289 = vmatprep.subr.mxu0 0.0
    %290 = vmatpush1.xpose.msra.mxu0 0.0
    %291 = vmatprep.subr.mxu0 0.0
    %292 = vmatpush1.xpose.msra.mxu0 0.0
    %293 = vmatprep.subr.mxu0 0.0
    %294 = vmatpush1.xpose.msra.mxu0 0.0
    %295 = vmatprep.subr.mxu0 0.0
    %296 = vmatpush1.xpose.msra.mxu0 0.0
    %297 = vmatprep.subr.mxu0 0.0
    %298 = vmatpush1.xpose.msra.mxu0 0.0
    %299 = vmatprep.subr.mxu0 0.0
    %300 = vmatpush1.xpose.msra.mxu0 0.0
    %301 = vmatprep.subr.mxu0 0.0
    %302 = vmatpush1.xpose.msra.mxu0 0.0
    %303 = vmatprep.subr.mxu0 0.0
    %304 = vmatpush1.xpose.msra.mxu0 0.0
    %305 = vmatprep.subr.mxu0 0.0
    %306 = vmatpush1.xpose.msra.mxu0 0.0
    %307 = vmatprep.subr.mxu0 0.0
    %308 = vmatpush1.xpose.msra.mxu0 0.0
    %309 = vmatprep.subr.mxu0 0.0
    %310 = vmatpush1.xpose.msra.mxu0 0.0
    %311 = vmatprep.subr.mxu0 0.0
    %312 = vmatpush1.xpose.msra.mxu0 0.0
    %313 = vmatprep.subr.mxu0 0.0
    %314 = vmatpush1.xpose.msra.mxu0 0.0
    %315 = vmatprep.subr.mxu0 0.0
    %316 = vmatpush1.xpose.msra.mxu0 0.0
    %317 = vmatprep.subr.mxu0 0.0
    %318 = vmatpush1.xpose.msra.mxu0 0.0
    %319 = vmatprep.subr.mxu0 0.0
    %320 = vmatpush1.xpose.msra.mxu0 0.0
    %321 = vmatprep.subr.mxu0 0.0
    %322 = vmatpush1.xpose.msra.mxu0 0.0
    %323 = vmatprep.subr.mxu0 0.0
    %324 = vmatpush1.xpose.msra.mxu0 0.0
    %325 = vmatprep.subr.mxu0 0.0
    %326 = vmatpush1.xpose.msra.mxu0 0.0
    %327 = vmatprep.subr.mxu0 0.0
    %328 = vmatpush1.xpose.msra.mxu0 0.0
    %329 = vmatprep.subr.mxu0 0.0
    %330 = vmatpush1.xpose.msra.mxu0 0.0
    %331 = vmatprep.subr.mxu0 0.0
    %332 = vmatpush1.xpose.msra.mxu0 0.0
    %333 = vmatprep.subr.mxu0 0.0
    %334 = vmatpush1.xpose.msra.mxu0 0.0
    %335 = vmatprep.subr.mxu0 0.0
    %336 = vmatpush1.xpose.msra.mxu0 0.0
    %337 = vmatprep.subr.mxu0 0.0
    %338 = vmatpush1.xpose.msra.mxu0 0.0
    %339 = vmatprep.subr.mxu0 0.0
    %340 = vmatpush1.xpose.msra.mxu0 0.0
    %341 = vmatprep.subr.mxu0 0.0
    %342 = vmatpush1.xpose.msra.mxu0 0.0
    %343 = vmatprep.mubr.f32.mxu0 0.0
    %344 = vmatmul.mubr.f32.gmra.mrb[0].mxu0 %v275
    %v345 = vpop.f32.mrb[0].mxu0
    %v346 = vadd.f32 %v191, %v345
    %v347 = vpop.f32.mrb[0].mxu0
    %348 = vdwg.mxu0
    %vm349 = vcmask 64512
    %v350 = vsel %vm349, %v269, -inf
    %351 = vmax.xlane.f32.xlu0 %v350
    %v352 = vpop.xlane.xlu0 %351
    %v353 = vsel %vm349, %v346, -inf
    %354 = vmax.xlane.f32.xlu0 %v353
    %v355 = vpop.xlane.xlu0 %354
    %v356 = vsub.f32 %v269, %v352
    %v357 = vsub.f32 %v346, %v355
    %v358 = vmul.f32 %v356, 1.442695
    %v359 = vpow.pop %v358
    %v360 = vmul.f32 %v357, 1.442695
    %v361 = vpow.pop %v360
    %v362 = vsel %vm349, %v359, 0.0
    %363 = vadd.xlane.f32.xlu0 %v362
    %v364 = vpop.xlane.xlu0 %363
    %v365 = vsel %vm349, %v361, 0.0
    %366 = vadd.xlane.f32.xlu0 %v365
    %v367 = vpop.xlane.xlu0 %366
    %v368 = vrcp.pop %v364
    %v369 = vrcp.pop %v367
    %v370 = vmul.f32 %v359, %v368
    %v371 = vmul.f32 %v361, %v369
    %v373 = vsel %vm349, %v370, 0
    %375 = vmatprep.subr.mxu0 0.0
    %376 = vmatpush1.msra.mxu0 %v176
    %377 = vmatprep.subr.mxu0 0.0
    %378 = vmatpush1.msra.mxu0 0.0
    %379 = vmatprep.subr.mxu0 0.0
    %380 = vmatpush1.msra.mxu0 0.0
    %381 = vmatprep.subr.mxu0 0.0
    %382 = vmatpush1.msra.mxu0 0.0
    %383 = vmatprep.subr.mxu0 0.0
    %384 = vmatpush1.msra.mxu0 0.0
    %385 = vmatprep.subr.mxu0 0.0
    %386 = vmatpush1.msra.mxu0 0.0
    %387 = vmatprep.subr.mxu0 0.0
    %388 = vmatpush1.msra.mxu0 0.0
    %389 = vmatprep.subr.mxu0 0.0
    %390 = vmatpush1.msra.mxu0 0.0
    %391 = vmatprep.subr.mxu0 0.0
    %392 = vmatpush1.msra.mxu0 0.0
    %393 = vmatprep.subr.mxu0 0.0
    %394 = vmatpush1.msra.mxu0 0.0
    %395 = vmatprep.subr.mxu0 0.0
    %396 = vmatpush1.msra.mxu0 0.0
    %397 = vmatprep.subr.mxu0 0.0
    %398 = vmatpush1.msra.mxu0 0.0
    %399 = vmatprep.subr.mxu0 0.0
    %400 = vmatpush1.msra.mxu0 0.0
    %401 = vmatprep.subr.mxu0 0.0
    %402 = vmatpush1.msra.mxu0 0.0
    %403 = vmatprep.subr.mxu0 0.0
    %404 = vmatpush1.msra.mxu0 0.0
    %405 = vmatprep.subr.mxu0 0.0
    %406 = vmatpush1.msra.mxu0 0.0
    %407 = vmatprep.subr.mxu0 0.0
    %408 = vmatpush1.msra.mxu0 0.0
    %409 = vmatprep.subr.mxu0 0.0
    %410 = vmatpush1.msra.mxu0 0.0
    %411 = vmatprep.subr.mxu0 0.0
    %412 = vmatpush1.msra.mxu0 0.0
    %413 = vmatprep.subr.mxu0 0.0
    %414 = vmatpush1.msra.mxu0 0.0
    %415 = vmatprep.subr.mxu0 0.0
    %416 = vmatpush1.msra.mxu0 0.0
    %417 = vmatprep.subr.mxu0 0.0
    %418 = vmatpush1.msra.mxu0 0.0
    %419 = vmatprep.subr.mxu0 0.0
    %420 = vmatpush1.msra.mxu0 0.0
    %421 = vmatprep.subr.mxu0 0.0
    %422 = vmatpush1.msra.mxu0 0.0
    %423 = vmatprep.subr.mxu0 0.0
    %424 = vmatpush1.msra.mxu0 0.0
    %425 = vmatprep.subr.mxu0 0.0
    %426 = vmatpush1.msra.mxu0 0.0
    %427 = vmatprep.subr.mxu0 0.0
    %428 = vmatpush1.msra.mxu0 0.0
    %429 = vmatprep.subr.mxu0 0.0
    %430 = vmatpush1.msra.mxu0 0.0
    %431 = vmatprep.subr.mxu0 0.0
    %432 = vmatpush1.msra.mxu0 0.0
    %433 = vmatprep.subr.mxu0 0.0
    %434 = vmatpush1.msra.mxu0 0.0
    %435 = vmatprep.subr.mxu0 0.0
    %436 = vmatpush1.msra.mxu0 0.0
    %437 = vmatprep.subr.mxu0 0.0
    %438 = vmatpush1.msra.mxu0 0.0
    %439 = vmatprep.mubr.f32.mxu0 0.0
    %440 = vmatmul.mubr.f32.gmra.mrb[0].mxu0 %v373
    %v441 = vpop.f32.mrb[0].mxu0
    %v442 = vadd.f32 0.0, %v441
    %v443 = vpop.f32.mrb[0].mxu0
    %444 = vdwg.mxu0
    %v446 = vsel %vm349, %v371, 0
    %448 = vmatprep.subr.mxu0 0.0
    %449 = vmatpush1.msra.mxu0 %v180
    %450 = vmatprep.subr.mxu0 0.0
    %451 = vmatpush1.msra.mxu0 0.0
    %452 = vmatprep.subr.mxu0 0.0
    %453 = vmatpush1.msra.mxu0 0.0
    %454 = vmatprep.subr.mxu0 0.0
    %455 = vmatpush1.msra.mxu0 0.0
    %456 = vmatprep.subr.mxu0 0.0
    %457 = vmatpush1.msra.mxu0 0.0
    %458 = vmatprep.subr.mxu0 0.0
    %459 = vmatpush1.msra.mxu0 0.0
    %460 = vmatprep.subr.mxu0 0.0
    %461 = vmatpush1.msra.mxu0 0.0
    %462 = vmatprep.subr.mxu0 0.0
    %463 = vmatpush1.msra.mxu0 0.0
    %464 = vmatprep.subr.mxu0 0.0
    %465 = vmatpush1.msra.mxu0 0.0
    %466 = vmatprep.subr.mxu0 0.0
    %467 = vmatpush1.msra.mxu0 0.0
    %468 = vmatprep.subr.mxu0 0.0
    %469 = vmatpush1.msra.mxu0 0.0
    %470 = vmatprep.subr.mxu0 0.0
    %471 = vmatpush1.msra.mxu0 0.0
    %472 = vmatprep.subr.mxu0 0.0
    %473 = vmatpush1.msra.mxu0 0.0
    %474 = vmatprep.subr.mxu0 0.0
    %475 = vmatpush1.msra.mxu0 0.0
    %476 = vmatprep.subr.mxu0 0.0
    %477 = vmatpush1.msra.mxu0 0.0
    %478 = vmatprep.subr.mxu0 0.0
    %479 = vmatpush1.msra.mxu0 0.0
    %480 = vmatprep.subr.mxu0 0.0
    %481 = vmatpush1.msra.mxu0 0.0
    %482 = vmatprep.subr.mxu0 0.0
    %483 = vmatpush1.msra.mxu0 0.0
    %484 = vmatprep.subr.mxu0 0.0
    %485 = vmatpush1.msra.mxu0 0.0
    %486 = vmatprep.subr.mxu0 0.0
    %487 = vmatpush1.msra.mxu0 0.0
    %488 = vmatprep.subr.mxu0 0.0
    %489 = vmatpush1.msra.mxu0 0.0
    %490 = vmatprep.subr.mxu0 0.0
    %491 = vmatpush1.msra.mxu0 0.0
    %492 = vmatprep.subr.mxu0 0.0
    %493 = vmatpush1.msra.mxu0 0.0
    %494 = vmatprep.subr.mxu0 0.0
    %495 = vmatpush1.msra.mxu0 0.0
    %496 = vmatprep.subr.mxu0 0.0
    %497 = vmatpush1.msra.mxu0 0.0
    %498 = vmatprep.subr.mxu0 0.0
    %499 = vmatpush1.msra.mxu0 0.0
    %500 = vmatprep.subr.mxu0 0.0
    %501 = vmatpush1.msra.mxu0 0.0
    %502 = vmatprep.subr.mxu0 0.0
    %503 = vmatpush1.msra.mxu0 0.0
    %504 = vmatprep.subr.mxu0 0.0
    %505 = vmatpush1.msra.mxu0 0.0
    %506 = vmatprep.subr.mxu0 0.0
    %507 = vmatpush1.msra.mxu0 0.0
    %508 = vmatprep.subr.mxu0 0.0
    %509 = vmatpush1.msra.mxu0 0.0
    %510 = vmatprep.subr.mxu0 0.0
    %511 = vmatpush1.msra.mxu0 0.0
    %512 = vmatprep.mubr.f32.mxu0 0.0
    %513 = vmatmul.mubr.f32.gmra.mrb[0].mxu0 %v446
    %v514 = vpop.f32.mrb[0].mxu0
    %v515 = vadd.f32 0.0, %v514
    %v516 = vpop.f32.mrb[0].mxu0
    %517 = vdwg.mxu0
    %v518 = vpack.c.bf16 %v515, %v442
    %519 = vst.msk [vmem:[#allocation2] sm:$0xff] %vm197, %v518
    %520 = vrot.lane.b32.xlu0 %v174, 112
    %v521 = vpop.permute.xlu0 %520
    %522 = vrot.lane.b32.xlu0 %v174, 48
    %v523 = vpop.permute.xlu0 %522
    %v524 = vsel %vm197, %v521, 0
    %v526 = vsel %vm197, %v523, 0
    %528 = vmatprep.subr.mxu0 0.0
    %529 = vmatpush1.xpose.msra.mxu0 %v526
    %530 = vmatprep.subr.mxu0 0.0
    %531 = vmatpush1.xpose.msra.mxu0 0.0
    %532 = vmatprep.subr.mxu0 0.0
    %533 = vmatpush1.xpose.msra.mxu0 0.0
    %534 = vmatprep.subr.mxu0 0.0
    %535 = vmatpush1.xpose.msra.mxu0 0.0
    %536 = vmatprep.subr.mxu0 0.0
    %537 = vmatpush1.xpose.msra.mxu0 0.0
    %538 = vmatprep.subr.mxu0 0.0
    %539 = vmatpush1.xpose.msra.mxu0 0.0
    %540 = vmatprep.subr.mxu0 0.0
    %541 = vmatpush1.xpose.msra.mxu0 0.0
    %542 = vmatprep.subr.mxu0 0.0
    %543 = vmatpush1.xpose.msra.mxu0 0.0
    %544 = vmatprep.subr.mxu0 0.0
    %545 = vmatpush1.xpose.msra.mxu0 0.0
    %546 = vmatprep.subr.mxu0 0.0
    %547 = vmatpush1.xpose.msra.mxu0 0.0
    %548 = vmatprep.subr.mxu0 0.0
    %549 = vmatpush1.xpose.msra.mxu0 0.0
    %550 = vmatprep.subr.mxu0 0.0
    %551 = vmatpush1.xpose.msra.mxu0 0.0
    %552 = vmatprep.subr.mxu0 0.0
    %553 = vmatpush1.xpose.msra.mxu0 0.0
    %554 = vmatprep.subr.mxu0 0.0
    %555 = vmatpush1.xpose.msra.mxu0 0.0
    %556 = vmatprep.subr.mxu0 0.0
    %557 = vmatpush1.xpose.msra.mxu0 0.0
    %558 = vmatprep.subr.mxu0 0.0
    %559 = vmatpush1.xpose.msra.mxu0 0.0
    %560 = vmatprep.subr.mxu0 0.0
    %561 = vmatpush1.xpose.msra.mxu0 0.0
    %562 = vmatprep.subr.mxu0 0.0
    %563 = vmatpush1.xpose.msra.mxu0 0.0
    %564 = vmatprep.subr.mxu0 0.0
    %565 = vmatpush1.xpose.msra.mxu0 0.0
    %566 = vmatprep.subr.mxu0 0.0
    %567 = vmatpush1.xpose.msra.mxu0 0.0
    %568 = vmatprep.subr.mxu0 0.0
    %569 = vmatpush1.xpose.msra.mxu0 0.0
    %570 = vmatprep.subr.mxu0 0.0
    %571 = vmatpush1.xpose.msra.mxu0 0.0
    %572 = vmatprep.subr.mxu0 0.0
    %573 = vmatpush1.xpose.msra.mxu0 0.0
    %574 = vmatprep.subr.mxu0 0.0
    %575 = vmatpush1.xpose.msra.mxu0 0.0
    %576 = vmatprep.subr.mxu0 0.0
    %577 = vmatpush1.xpose.msra.mxu0 0.0
    %578 = vmatprep.subr.mxu0 0.0
    %579 = vmatpush1.xpose.msra.mxu0 0.0
    %580 = vmatprep.subr.mxu0 0.0
    %581 = vmatpush1.xpose.msra.mxu0 0.0
    %582 = vmatprep.subr.mxu0 0.0
    %583 = vmatpush1.xpose.msra.mxu0 0.0
    %584 = vmatprep.subr.mxu0 0.0
    %585 = vmatpush1.xpose.msra.mxu0 0.0
    %586 = vmatprep.subr.mxu0 0.0
    %587 = vmatpush1.xpose.msra.mxu0 0.0
    %588 = vmatprep.subr.mxu0 0.0
    %589 = vmatpush1.xpose.msra.mxu0 0.0
    %590 = vmatprep.subr.mxu0 0.0
    %591 = vmatpush1.xpose.msra.mxu0 0.0
    %592 = vmatprep.mubr.f32.mxu0 0.0
    %593 = vmatmul.mubr.f32.gmra.mrb[0].mxu0 %v524
    %v594 = vpop.f32.mrb[0].mxu0
    %v595 = vadd.f32 %v187, %v594
    %v596 = vpop.f32.mrb[0].mxu0
    %597 = vdwg.mxu0
    %598 = vrot.lane.b32.xlu0 %v178, 112
    %v599 = vpop.permute.xlu0 %598
    %600 = vrot.lane.b32.xlu0 %v178, 48
    %v601 = vpop.permute.xlu0 %600
    %v602 = vsel %vm197, %v599, 0
    %v604 = vsel %vm197, %v601, 0
    %606 = vmatprep.subr.mxu0 0.0
    %607 = vmatpush1.xpose.msra.mxu0 %v604
    %608 = vmatprep.subr.mxu0 0.0
    %609 = vmatpush1.xpose.msra.mxu0 0.0
    %610 = vmatprep.subr.mxu0 0.0
    %611 = vmatpush1.xpose.msra.mxu0 0.0
    %612 = vmatprep.subr.mxu0 0.0
    %613 = vmatpush1.xpose.msra.mxu0 0.0
    %614 = vmatprep.subr.mxu0 0.0
    %615 = vmatpush1.xpose.msra.mxu0 0.0
    %616 = vmatprep.subr.mxu0 0.0
    %617 = vmatpush1.xpose.msra.mxu0 0.0
    %618 = vmatprep.subr.mxu0 0.0
    %619 = vmatpush1.xpose.msra.mxu0 0.0
    %620 = vmatprep.subr.mxu0 0.0
    %621 = vmatpush1.xpose.msra.mxu0 0.0
    %622 = vmatprep.subr.mxu0 0.0
    %623 = vmatpush1.xpose.msra.mxu0 0.0
    %624 = vmatprep.subr.mxu0 0.0
    %625 = vmatpush1.xpose.msra.mxu0 0.0
    %626 = vmatprep.subr.mxu0 0.0
    %627 = vmatpush1.xpose.msra.mxu0 0.0
    %628 = vmatprep.subr.mxu0 0.0
    %629 = vmatpush1.xpose.msra.mxu0 0.0
    %630 = vmatprep.subr.mxu0 0.0
    %631 = vmatpush1.xpose.msra.mxu0 0.0
    %632 = vmatprep.subr.mxu0 0.0
    %633 = vmatpush1.xpose.msra.mxu0 0.0
    %634 = vmatprep.subr.mxu0 0.0
    %635 = vmatpush1.xpose.msra.mxu0 0.0
    %636 = vmatprep.subr.mxu0 0.0
    %637 = vmatpush1.xpose.msra.mxu0 0.0
    %638 = vmatprep.subr.mxu0 0.0
    %639 = vmatpush1.xpose.msra.mxu0 0.0
    %640 = vmatprep.subr.mxu0 0.0
    %641 = vmatpush1.xpose.msra.mxu0 0.0
    %642 = vmatprep.subr.mxu0 0.0
    %643 = vmatpush1.xpose.msra.mxu0 0.0
    %644 = vmatprep.subr.mxu0 0.0
    %645 = vmatpush1.xpose.msra.mxu0 0.0
    %646 = vmatprep.subr.mxu0 0.0
    %647 = vmatpush1.xpose.msra.mxu0 0.0
    %648 = vmatprep.subr.mxu0 0.0
    %649 = vmatpush1.xpose.msra.mxu0 0.0
    %650 = vmatprep.subr.mxu0 0.0
    %651 = vmatpush1.xpose.msra.mxu0 0.0
    %652 = vmatprep.subr.mxu0 0.0
    %653 = vmatpush1.xpose.msra.mxu0 0.0
    %654 = vmatprep.subr.mxu0 0.0
    %655 = vmatpush1.xpose.msra.mxu0 0.0
    %656 = vmatprep.subr.mxu0 0.0
    %657 = vmatpush1.xpose.msra.mxu0 0.0
    %658 = vmatprep.subr.mxu0 0.0
    %659 = vmatpush1.xpose.msra.mxu0 0.0
    %660 = vmatprep.subr.mxu0 0.0
    %661 = vmatpush1.xpose.msra.mxu0 0.0
    %662 = vmatprep.subr.mxu0 0.0
    %663 = vmatpush1.xpose.msra.mxu0 0.0
    %664 = vmatprep.subr.mxu0 0.0
    %665 = vmatpush1.xpose.msra.mxu0 0.0
    %666 = vmatprep.subr.mxu0 0.0
    %667 = vmatpush1.xpose.msra.mxu0 0.0
    %668 = vmatprep.subr.mxu0 0.0
    %669 = vmatpush1.xpose.msra.mxu0 0.0
    %670 = vmatprep.mubr.f32.mxu0 0.0
    %671 = vmatmul.mubr.f32.gmra.mrb[0].mxu0 %v602
    %v672 = vpop.f32.mrb[0].mxu0
    %v673 = vadd.f32 %v191, %v672
    %v674 = vpop.f32.mrb[0].mxu0
    %675 = vdwg.mxu0
    %v676 = vsel %vm349, %v595, -inf
    %677 = vmax.xlane.f32.xlu0 %v676
    %v678 = vpop.xlane.xlu0 %677
    %v679 = vsel %vm349, %v673, -inf
    %680 = vmax.xlane.f32.xlu0 %v679
    %v681 = vpop.xlane.xlu0 %680
    %v682 = vsub.f32 %v595, %v678
    %v683 = vsub.f32 %v673, %v681
    %v684 = vmul.f32 %v682, 1.442695
    %v685 = vpow.pop %v684
    %v686 = vmul.f32 %v683, 1.442695
    %v687 = vpow.pop %v686
    %v688 = vsel %vm349, %v685, 0.0
    %689 = vadd.xlane.f32.xlu0 %v688
    %v690 = vpop.xlane.xlu0 %689
    %v691 = vsel %vm349, %v687, 0.0
    %692 = vadd.xlane.f32.xlu0 %v691
    %v693 = vpop.xlane.xlu0 %692
    %v694 = vrcp.pop %v690
    %v695 = vrcp.pop %v693
    %v696 = vmul.f32 %v685, %v694
    %v697 = vmul.f32 %v687, %v695
    %699 = vrot.lane.b32.xlu0 %v176, 112
    %v700 = vpop.permute.xlu0 %699
    %v703 = vsel %vm349, %v696, 0
    %705 = vmatprep.subr.mxu0 0.0
    %706 = vmatpush1.msra.mxu0 %v700
    %707 = vmatprep.subr.mxu0 0.0
    %708 = vmatpush1.msra.mxu0 0.0
    %709 = vmatprep.subr.mxu0 0.0
    %710 = vmatpush1.msra.mxu0 0.0
    %711 = vmatprep.subr.mxu0 0.0
    %712 = vmatpush1.msra.mxu0 0.0
    %713 = vmatprep.subr.mxu0 0.0
    %714 = vmatpush1.msra.mxu0 0.0
    %715 = vmatprep.subr.mxu0 0.0
    %716 = vmatpush1.msra.mxu0 0.0
    %717 = vmatprep.subr.mxu0 0.0
    %718 = vmatpush1.msra.mxu0 0.0
    %719 = vmatprep.subr.mxu0 0.0
    %720 = vmatpush1.msra.mxu0 0.0
    %721 = vmatprep.subr.mxu0 0.0
    %722 = vmatpush1.msra.mxu0 0.0
    %723 = vmatprep.subr.mxu0 0.0
    %724 = vmatpush1.msra.mxu0 0.0
    %725 = vmatprep.subr.mxu0 0.0
    %726 = vmatpush1.msra.mxu0 0.0
    %727 = vmatprep.subr.mxu0 0.0
    %728 = vmatpush1.msra.mxu0 0.0
    %729 = vmatprep.subr.mxu0 0.0
    %730 = vmatpush1.msra.mxu0 0.0
    %731 = vmatprep.subr.mxu0 0.0
    %732 = vmatpush1.msra.mxu0 0.0
    %733 = vmatprep.subr.mxu0 0.0
    %734 = vmatpush1.msra.mxu0 0.0
    %735 = vmatprep.subr.mxu0 0.0
    %736 = vmatpush1.msra.mxu0 0.0
    %737 = vmatprep.subr.mxu0 0.0
    %738 = vmatpush1.msra.mxu0 0.0
    %739 = vmatprep.subr.mxu0 0.0
    %740 = vmatpush1.msra.mxu0 0.0
    %741 = vmatprep.subr.mxu0 0.0
    %742 = vmatpush1.msra.mxu0 0.0
    %743 = vmatprep.subr.mxu0 0.0
    %744 = vmatpush1.msra.mxu0 0.0
    %745 = vmatprep.subr.mxu0 0.0
    %746 = vmatpush1.msra.mxu0 0.0
    %747 = vmatprep.subr.mxu0 0.0
    %748 = vmatpush1.msra.mxu0 0.0
    %749 = vmatprep.subr.mxu0 0.0
    %750 = vmatpush1.msra.mxu0 0.0
    %751 = vmatprep.subr.mxu0 0.0
    %752 = vmatpush1.msra.mxu0 0.0
    %753 = vmatprep.subr.mxu0 0.0
    %754 = vmatpush1.msra.mxu0 0.0
    %755 = vmatprep.subr.mxu0 0.0
    %756 = vmatpush1.msra.mxu0 0.0
    %757 = vmatprep.subr.mxu0 0.0
    %758 = vmatpush1.msra.mxu0 0.0
    %759 = vmatprep.subr.mxu0 0.0
    %760 = vmatpush1.msra.mxu0 0.0
    %761 = vmatprep.subr.mxu0 0.0
    %762 = vmatpush1.msra.mxu0 0.0
    %763 = vmatprep.subr.mxu0 0.0
    %764 = vmatpush1.msra.mxu0 0.0
    %765 = vmatprep.subr.mxu0 0.0
    %766 = vmatpush1.msra.mxu0 0.0
    %767 = vmatprep.subr.mxu0 0.0
    %768 = vmatpush1.msra.mxu0 0.0
    %769 = vmatprep.mubr.f32.mxu0 0.0
    %770 = vmatmul.mubr.f32.gmra.mrb[0].mxu0 %v703
    %v771 = vpop.f32.mrb[0].mxu0
    %v772 = vadd.f32 0.0, %v771
    %v773 = vpop.f32.mrb[0].mxu0
    %774 = vdwg.mxu0
    %776 = vrot.lane.b32.xlu0 %v180, 112
    %v777 = vpop.permute.xlu0 %776
    %v780 = vsel %vm349, %v697, 0
    %782 = vmatprep.subr.mxu0 0.0
    %783 = vmatpush1.msra.mxu0 %v777
    %784 = vmatprep.subr.mxu0 0.0
    %785 = vmatpush1.msra.mxu0 0.0
    %786 = vmatprep.subr.mxu0 0.0
    %787 = vmatpush1.msra.mxu0 0.0
    %788 = vmatprep.subr.mxu0 0.0
    %789 = vmatpush1.msra.mxu0 0.0
    %790 = vmatprep.subr.mxu0 0.0
    %791 = vmatpush1.msra.mxu0 0.0
    %792 = vmatprep.subr.mxu0 0.0
    %793 = vmatpush1.msra.mxu0 0.0
    %794 = vmatprep.subr.mxu0 0.0
    %795 = vmatpush1.msra.mxu0 0.0
    %796 = vmatprep.subr.mxu0 0.0
    %797 = vmatpush1.msra.mxu0 0.0
    %798 = vmatprep.subr.mxu0 0.0
    %799 = vmatpush1.msra.mxu0 0.0
    %800 = vmatprep.subr.mxu0 0.0
    %801 = vmatpush1.msra.mxu0 0.0
    %802 = vmatprep.subr.mxu0 0.0
    %803 = vmatpush1.msra.mxu0 0.0
    %804 = vmatprep.subr.mxu0 0.0
    %805 = vmatpush1.msra.mxu0 0.0
    %806 = vmatprep.subr.mxu0 0.0
    %807 = vmatpush1.msra.mxu0 0.0
    %808 = vmatprep.subr.mxu0 0.0
    %809 = vmatpush1.msra.mxu0 0.0
    %810 = vmatprep.subr.mxu0 0.0
    %811 = vmatpush1.msra.mxu0 0.0
    %812 = vmatprep.subr.mxu0 0.0
    %813 = vmatpush1.msra.mxu0 0.0
    %814 = vmatprep.subr.mxu0 0.0
    %815 = vmatpush1.msra.mxu0 0.0
    %816 = vmatprep.subr.mxu0 0.0
    %817 = vmatpush1.msra.mxu0 0.0
    %818 = vmatprep.subr.mxu0 0.0
    %819 = vmatpush1.msra.mxu0 0.0
    %820 = vmatprep.subr.mxu0 0.0
    %821 = vmatpush1.msra.mxu0 0.0
    %822 = vmatprep.subr.mxu0 0.0
    %823 = vmatpush1.msra.mxu0 0.0
    %824 = vmatprep.subr.mxu0 0.0
    %825 = vmatpush1.msra.mxu0 0.0
    %826 = vmatprep.subr.mxu0 0.0
    %827 = vmatpush1.msra.mxu0 0.0
    %828 = vmatprep.subr.mxu0 0.0
    %829 = vmatpush1.msra.mxu0 0.0
    %830 = vmatprep.subr.mxu0 0.0
    %831 = vmatpush1.msra.mxu0 0.0
    %832 = vmatprep.subr.mxu0 0.0
    %833 = vmatpush1.msra.mxu0 0.0
    %834 = vmatprep.subr.mxu0 0.0
    %835 = vmatpush1.msra.mxu0 0.0
    %836 = vmatprep.subr.mxu0 0.0
    %837 = vmatpush1.msra.mxu0 0.0
    %838 = vmatprep.subr.mxu0 0.0
    %839 = vmatpush1.msra.mxu0 0.0
    %840 = vmatprep.subr.mxu0 0.0
    %841 = vmatpush1.msra.mxu0 0.0
    %842 = vmatprep.subr.mxu0 0.0
    %843 = vmatpush1.msra.mxu0 0.0
    %844 = vmatprep.subr.mxu0 0.0
    %845 = vmatpush1.msra.mxu0 0.0
    %846 = vmatprep.mubr.f32.mxu0 0.0
    %847 = vmatmul.mubr.f32.gmra.mrb[0].mxu0 %v780
    %v848 = vpop.f32.mrb[0].mxu0
    %v849 = vadd.f32 0.0, %v848
    %v850 = vpop.f32.mrb[0].mxu0
    %851 = vdwg.mxu0
    %v852 = vpack.c.bf16 %v849, %v772
    %854 = vrot.lane.b32.xlu0 %v852, 16
    %v855 = vpop.permute.xlu0 %854
    %vm857 = vcmask 261248
    %858 = vst.msk [vmem:[#allocation2] sm:$0xff] %vm857, %v855
    %859 = vrot.lane.b32.xlu0 %v174, 96
    %v860 = vpop.permute.xlu0 %859
    %861 = vrot.lane.b32.xlu0 %v174, 32
    %v862 = vpop.permute.xlu0 %861
    %v863 = vsel %vm197, %v860, 0
    %v865 = vsel %vm197, %v862, 0
    %867 = vmatprep.subr.mxu0 0.0
    %868 = vmatpush1.xpose.msra.mxu0 %v865
    %869 = vmatprep.subr.mxu0 0.0
    %870 = vmatpush1.xpose.msra.mxu0 0.0
    %871 = vmatprep.subr.mxu0 0.0
    %872 = vmatpush1.xpose.msra.mxu0 0.0
    %873 = vmatprep.subr.mxu0 0.0
    %874 = vmatpush1.xpose.msra.mxu0 0.0
    %875 = vmatprep.subr.mxu0 0.0
    %876 = vmatpush1.xpose.msra.mxu0 0.0
    %877 = vmatprep.subr.mxu0 0.0
    %878 = vmatpush1.xpose.msra.mxu0 0.0
    %879 = vmatprep.subr.mxu0 0.0
    %880 = vmatpush1.xpose.msra.mxu0 0.0
    %881 = vmatprep.subr.mxu0 0.0
    %882 = vmatpush1.xpose.msra.mxu0 0.0
    %883 = vmatprep.subr.mxu0 0.0
    %884 = vmatpush1.xpose.msra.mxu0 0.0
    %885 = vmatprep.subr.mxu0 0.0
    %886 = vmatpush1.xpose.msra.mxu0 0.0
    %887 = vmatprep.subr.mxu0 0.0
    %888 = vmatpush1.xpose.msra.mxu0 0.0
    %889 = vmatprep.subr.mxu0 0.0
    %890 = vmatpush1.xpose.msra.mxu0 0.0
    %891 = vmatprep.subr.mxu0 0.0
    %892 = vmatpush1.xpose.msra.mxu0 0.0
    %893 = vmatprep.subr.mxu0 0.0
    %894 = vmatpush1.xpose.msra.mxu0 0.0
    %895 = vmatprep.subr.mxu0 0.0
    %896 = vmatpush1.xpose.msra.mxu0 0.0
    %897 = vmatprep.subr.mxu0 0.0
    %898 = vmatpush1.xpose.msra.mxu0 0.0
    %899 = vmatprep.subr.mxu0 0.0
    %900 = vmatpush1.xpose.msra.mxu0 0.0
    %901 = vmatprep.subr.mxu0 0.0
    %902 = vmatpush1.xpose.msra.mxu0 0.0
    %903 = vmatprep.subr.mxu0 0.0
    %904 = vmatpush1.xpose.msra.mxu0 0.0
    %905 = vmatprep.subr.mxu0 0.0
    %906 = vmatpush1.xpose.msra.mxu0 0.0
    %907 = vmatprep.subr.mxu0 0.0
    %908 = vmatpush1.xpose.msra.mxu0 0.0
    %909 = vmatprep.subr.mxu0 0.0
    %910 = vmatpush1.xpose.msra.mxu0 0.0
    %911 = vmatprep.subr.mxu0 0.0
    %912 = vmatpush1.xpose.msra.mxu0 0.0
    %913 = vmatprep.subr.mxu0 0.0
    %914 = vmatpush1.xpose.msra.mxu0 0.0
    %915 = vmatprep.subr.mxu0 0.0
    %916 = vmatpush1.xpose.msra.mxu0 0.0
    %917 = vmatprep.subr.mxu0 0.0
    %918 = vmatpush1.xpose.msra.mxu0 0.0
    %919 = vmatprep.subr.mxu0 0.0
    %920 = vmatpush1.xpose.msra.mxu0 0.0
    %921 = vmatprep.subr.mxu0 0.0
    %922 = vmatpush1.xpose.msra.mxu0 0.0
    %923 = vmatprep.subr.mxu0 0.0
    %924 = vmatpush1.xpose.msra.mxu0 0.0
    %925 = vmatprep.subr.mxu0 0.0
    %926 = vmatpush1.xpose.msra.mxu0 0.0
    %927 = vmatprep.subr.mxu0 0.0
    %928 = vmatpush1.xpose.msra.mxu0 0.0
    %929 = vmatprep.subr.mxu0 0.0
    %930 = vmatpush1.xpose.msra.mxu0 0.0
    %931 = vmatprep.mubr.f32.mxu0 0.0
    %932 = vmatmul.mubr.f32.gmra.mrb[0].mxu0 %v863
    %v933 = vpop.f32.mrb[0].mxu0
    %v934 = vadd.f32 %v187, %v933
    %v935 = vpop.f32.mrb[0].mxu0
    %936 = vdwg.mxu0
    %937 = vrot.lane.b32.xlu0 %v178, 96
    %v938 = vpop.permute.xlu0 %937
    %939 = vrot.lane.b32.xlu0 %v178, 32
    %v940 = vpop.permute.xlu0 %939
    %v941 = vsel %vm197, %v938, 0
    %v943 = vsel %vm197, %v940, 0
    %945 = vmatprep.subr.mxu0 0.0
    %946 = vmatpush1.xpose.msra.mxu0 %v943
    %947 = vmatprep.subr.mxu0 0.0
    %948 = vmatpush1.xpose.msra.mxu0 0.0
    %949 = vmatprep.subr.mxu0 0.0
    %950 = vmatpush1.xpose.msra.mxu0 0.0
    %951 = vmatprep.subr.mxu0 0.0
    %952 = vmatpush1.xpose.msra.mxu0 0.0
    %953 = vmatprep.subr.mxu0 0.0
    %954 = vmatpush1.xpose.msra.mxu0 0.0
    %955 = vmatprep.subr.mxu0 0.0
    %956 = vmatpush1.xpose.msra.mxu0 0.0
    %957 = vmatprep.subr.mxu0 0.0
    %958 = vmatpush1.xpose.msra.mxu0 0.0
    %959 = vmatprep.subr.mxu0 0.0
    %960 = vmatpush1.xpose.msra.mxu0 0.0
    %961 = vmatprep.subr.mxu0 0.0
    %962 = vmatpush1.xpose.msra.mxu0 0.0
    %963 = vmatprep.subr.mxu0 0.0
    %964 = vmatpush1.xpose.msra.mxu0 0.0
    %965 = vmatprep.subr.mxu0 0.0
    %966 = vmatpush1.xpose.msra.mxu0 0.0
    %967 = vmatprep.subr.mxu0 0.0
    %968 = vmatpush1.xpose.msra.mxu0 0.0
    %969 = vmatprep.subr.mxu0 0.0
    %970 = vmatpush1.xpose.msra.mxu0 0.0
    %971 = vmatprep.subr.mxu0 0.0
    %972 = vmatpush1.xpose.msra.mxu0 0.0
    %973 = vmatprep.subr.mxu0 0.0
    %974 = vmatpush1.xpose.msra.mxu0 0.0
    %975 = vmatprep.subr.mxu0 0.0
    %976 = vmatpush1.xpose.msra.mxu0 0.0
    %977 = vmatprep.subr.mxu0 0.0
    %978 = vmatpush1.xpose.msra.mxu0 0.0
    %979 = vmatprep.subr.mxu0 0.0
    %980 = vmatpush1.xpose.msra.mxu0 0.0
    %981 = vmatprep.subr.mxu0 0.0
    %982 = vmatpush1.xpose.msra.mxu0 0.0
    %983 = vmatprep.subr.mxu0 0.0
    %984 = vmatpush1.xpose.msra.mxu0 0.0
    %985 = vmatprep.subr.mxu0 0.0
    %986 = vmatpush1.xpose.msra.mxu0 0.0
    %987 = vmatprep.subr.mxu0 0.0
    %988 = vmatpush1.xpose.msra.mxu0 0.0
    %989 = vmatprep.subr.mxu0 0.0
    %990 = vmatpush1.xpose.msra.mxu0 0.0
    %991 = vmatprep.subr.mxu0 0.0
    %992 = vmatpush1.xpose.msra.mxu0 0.0
    %993 = vmatprep.subr.mxu0 0.0
    %994 = vmatpush1.xpose.msra.mxu0 0.0
    %995 = vmatprep.subr.mxu0 0.0
    %996 = vmatpush1.xpose.msra.mxu0 0.0
    %997 = vmatprep.subr.mxu0 0.0
    %998 = vmatpush1.xpose.msra.mxu0 0.0
    %999 = vmatprep.subr.mxu0 0.0
    %1000 = vmatpush1.xpose.msra.mxu0 0.0
    %1001 = vmatprep.subr.mxu0 0.0
    %1002 = vmatpush1.xpose.msra.mxu0 0.0
    %1003 = vmatprep.subr.mxu0 0.0
    %1004 = vmatpush1.xpose.msra.mxu0 0.0
    %1005 = vmatprep.subr.mxu0 0.0
    %1006 = vmatpush1.xpose.msra.mxu0 0.0
    %1007 = vmatprep.subr.mxu0 0.0
    %1008 = vmatpush1.xpose.msra.mxu0 0.0
    %1009 = vmatprep.mubr.f32.mxu0 0.0
    %1010 = vmatmul.mubr.f32.gmra.mrb[0].mxu0 %v941
    %v1011 = vpop.f32.mrb[0].mxu0
    %v1012 = vadd.f32 %v191, %v1011
    %v1013 = vpop.f32.mrb[0].mxu0
    %1014 = vdwg.mxu0
    %v1015 = vsel %vm349, %v934, -inf
    %1016 = vmax.xlane.f32.xlu0 %v1015
    %v1017 = vpop.xlane.xlu0 %1016
    %v1018 = vsel %vm349, %v1012, -inf
    %1019 = vmax.xlane.f32.xlu0 %v1018
    %v1020 = vpop.xlane.xlu0 %1019
    %v1021 = vsub.f32 %v934, %v1017
    %v1022 = vsub.f32 %v1012, %v1020
    %v1023 = vmul.f32 %v1021, 1.442695
    %v1024 = vpow.pop %v1023
    %v1025 = vmul.f32 %v1022, 1.442695
    %v1026 = vpow.pop %v1025
    %v1027 = vsel %vm349, %v1024, 0.0
    %1028 = vadd.xlane.f32.xlu0 %v1027
    %v1029 = vpop.xlane.xlu0 %1028
    %v1030 = vsel %vm349, %v1026, 0.0
    %1031 = vadd.xlane.f32.xlu0 %v1030
    %v1032 = vpop.xlane.xlu0 %1031
    %v1033 = vrcp.pop %v1029
    %v1034 = vrcp.pop %v1032
    %v1035 = vmul.f32 %v1024, %v1033
    %v1036 = vmul.f32 %v1026, %v1034
    %1037 = vrot.lane.b32.xlu0 %v176, 96
    %v1038 = vpop.permute.xlu0 %1037
    %v1041 = vsel %vm349, %v1035, 0
    %1043 = vmatprep.subr.mxu0 0.0
    %1044 = vmatpush1.msra.mxu0 %v1038
    %1045 = vmatprep.subr.mxu0 0.0
    %1046 = vmatpush1.msra.mxu0 0.0
    %1047 = vmatprep.subr.mxu0 0.0
    %1048 = vmatpush1.msra.mxu0 0.0
    %1049 = vmatprep.subr.mxu0 0.0
    %1050 = vmatpush1.msra.mxu0 0.0
    %1051 = vmatprep.subr.mxu0 0.0
    %1052 = vmatpush1.msra.mxu0 0.0
    %1053 = vmatprep.subr.mxu0 0.0
    %1054 = vmatpush1.msra.mxu0 0.0
    %1055 = vmatprep.subr.mxu0 0.0
    %1056 = vmatpush1.msra.mxu0 0.0
    %1057 = vmatprep.subr.mxu0 0.0
    %1058 = vmatpush1.msra.mxu0 0.0
    %1059 = vmatprep.subr.mxu0 0.0
    %1060 = vmatpush1.msra.mxu0 0.0
    %1061 = vmatprep.subr.mxu0 0.0
    %1062 = vmatpush1.msra.mxu0 0.0
    %1063 = vmatprep.subr.mxu0 0.0
    %1064 = vmatpush1.msra.mxu0 0.0
    %1065 = vmatprep.subr.mxu0 0.0
    %1066 = vmatpush1.msra.mxu0 0.0
    %1067 = vmatprep.subr.mxu0 0.0
    %1068 = vmatpush1.msra.mxu0 0.0
    %1069 = vmatprep.subr.mxu0 0.0
    %1070 = vmatpush1.msra.mxu0 0.0
    %1071 = vmatprep.subr.mxu0 0.0
    %1072 = vmatpush1.msra.mxu0 0.0
    %1073 = vmatprep.subr.mxu0 0.0
    %1074 = vmatpush1.msra.mxu0 0.0
    %1075 = vmatprep.subr.mxu0 0.0
    %1076 = vmatpush1.msra.mxu0 0.0
    %1077 = vmatprep.subr.mxu0 0.0
    %1078 = vmatpush1.msra.mxu0 0.0
    %1079 = vmatprep.subr.mxu0 0.0
    %1080 = vmatpush1.msra.mxu0 0.0
    %1081 = vmatprep.subr.mxu0 0.0
    %1082 = vmatpush1.msra.mxu0 0.0
    %1083 = vmatprep.subr.mxu0 0.0
    %1084 = vmatpush1.msra.mxu0 0.0
    %1085 = vmatprep.subr.mxu0 0.0
    %1086 = vmatpush1.msra.mxu0 0.0
    %1087 = vmatprep.subr.mxu0 0.0
    %1088 = vmatpush1.msra.mxu0 0.0
    %1089 = vmatprep.subr.mxu0 0.0
    %1090 = vmatpush1.msra.mxu0 0.0
    %1091 = vmatprep.subr.mxu0 0.0
    %1092 = vmatpush1.msra.mxu0 0.0
    %1093 = vmatprep.subr.mxu0 0.0
    %1094 = vmatpush1.msra.mxu0 0.0
    %1095 = vmatprep.subr.mxu0 0.0
    %1096 = vmatpush1.msra.mxu0 0.0
    %1097 = vmatprep.subr.mxu0 0.0
    %1098 = vmatpush1.msra.mxu0 0.0
    %1099 = vmatprep.subr.mxu0 0.0
    %1100 = vmatpush1.msra.mxu0 0.0
    %1101 = vmatprep.subr.mxu0 0.0
    %1102 = vmatpush1.msra.mxu0 0.0
    %1103 = vmatprep.subr.mxu0 0.0
    %1104 = vmatpush1.msra.mxu0 0.0
    %1105 = vmatprep.subr.mxu0 0.0
    %1106 = vmatpush1.msra.mxu0 0.0
    %1107 = vmatprep.mubr.f32.mxu0 0.0
    %1108 = vmatmul.mubr.f32.gmra.mrb[0].mxu0 %v1041
    %v1109 = vpop.f32.mrb[0].mxu0
    %v1110 = vadd.f32 0.0, %v1109
    %v1111 = vpop.f32.mrb[0].mxu0
    %1112 = vdwg.mxu0
    %1113 = vrot.lane.b32.xlu0 %v180, 96
    %v1114 = vpop.permute.xlu0 %1113
    %v1117 = vsel %vm349, %v1036, 0
    %1119 = vmatprep.subr.mxu0 0.0
    %1120 = vmatpush1.msra.mxu0 %v1114
    %1121 = vmatprep.subr.mxu0 0.0
    %1122 = vmatpush1.msra.mxu0 0.0
    %1123 = vmatprep.subr.mxu0 0.0
    %1124 = vmatpush1.msra.mxu0 0.0
    %1125 = vmatprep.subr.mxu0 0.0
    %1126 = vmatpush1.msra.mxu0 0.0
    %1127 = vmatprep.subr.mxu0 0.0
    %1128 = vmatpush1.msra.mxu0 0.0
    %1129 = vmatprep.subr.mxu0 0.0
    %1130 = vmatpush1.msra.mxu0 0.0
    %1131 = vmatprep.subr.mxu0 0.0
    %1132 = vmatpush1.msra.mxu0 0.0
    %1133 = vmatprep.subr.mxu0 0.0
    %1134 = vmatpush1.msra.mxu0 0.0
    %1135 = vmatprep.subr.mxu0 0.0
    %1136 = vmatpush1.msra.mxu0 0.0
    %1137 = vmatprep.subr.mxu0 0.0
    %1138 = vmatpush1.msra.mxu0 0.0
    %1139 = vmatprep.subr.mxu0 0.0
    %1140 = vmatpush1.msra.mxu0 0.0
    %1141 = vmatprep.subr.mxu0 0.0
    %1142 = vmatpush1.msra.mxu0 0.0
    %1143 = vmatprep.subr.mxu0 0.0
    %1144 = vmatpush1.msra.mxu0 0.0
    %1145 = vmatprep.subr.mxu0 0.0
    %1146 = vmatpush1.msra.mxu0 0.0
    %1147 = vmatprep.subr.mxu0 0.0
    %1148 = vmatpush1.msra.mxu0 0.0
    %1149 = vmatprep.subr.mxu0 0.0
    %1150 = vmatpush1.msra.mxu0 0.0
    %1151 = vmatprep.subr.mxu0 0.0
    %1152 = vmatpush1.msra.mxu0 0.0
    %1153 = vmatprep.subr.mxu0 0.0
    %1154 = vmatpush1.msra.mxu0 0.0
    %1155 = vmatprep.subr.mxu0 0.0
    %1156 = vmatpush1.msra.mxu0 0.0
    %1157 = vmatprep.subr.mxu0 0.0
    %1158 = vmatpush1.msra.mxu0 0.0
    %1159 = vmatprep.subr.mxu0 0.0
    %1160 = vmatpush1.msra.mxu0 0.0
    %1161 = vmatprep.subr.mxu0 0.0
    %1162 = vmatpush1.msra.mxu0 0.0
    %1163 = vmatprep.subr.mxu0 0.0
    %1164 = vmatpush1.msra.mxu0 0.0
    %1165 = vmatprep.subr.mxu0 0.0
    %1166 = vmatpush1.msra.mxu0 0.0
    %1167 = vmatprep.subr.mxu0 0.0
    %1168 = vmatpush1.msra.mxu0 0.0
    %1169 = vmatprep.subr.mxu0 0.0
    %1170 = vmatpush1.msra.mxu0 0.0
    %1171 = vmatprep.subr.mxu0 0.0
    %1172 = vmatpush1.msra.mxu0 0.0
    %1173 = vmatprep.subr.mxu0 0.0
    %1174 = vmatpush1.msra.mxu0 0.0
    %1175 = vmatprep.subr.mxu0 0.0
    %1176 = vmatpush1.msra.mxu0 0.0
    %1177 = vmatprep.subr.mxu0 0.0
    %1178 = vmatpush1.msra.mxu0 0.0
    %1179 = vmatprep.subr.mxu0 0.0
    %1180 = vmatpush1.msra.mxu0 0.0
    %1181 = vmatprep.subr.mxu0 0.0
    %1182 = vmatpush1.msra.mxu0 0.0
    %1183 = vmatprep.mubr.f32.mxu0 0.0
    %1184 = vmatmul.mubr.f32.gmra.mrb[0].mxu0 %v1117
    %v1185 = vpop.f32.mrb[0].mxu0
    %v1186 = vadd.f32 0.0, %v1185
    %v1187 = vpop.f32.mrb[0].mxu0
    %1188 = vdwg.mxu0
    %v1189 = vpack.c.bf16 %v1186, %v1110
    %1191 = vrot.lane.b32.xlu0 %v1189, 32
    %v1192 = vpop.permute.xlu0 %1191
    %vm1194 = vcmask 392448
    %1195 = vst.msk [vmem:[#allocation2] sm:$0xff] %vm1194, %v1192
    %1196 = vrot.lane.b32.xlu0 %v174, 80
    %v1197 = vpop.permute.xlu0 %1196
    %1198 = vrot.lane.b32.xlu0 %v174, 16
    %v1199 = vpop.permute.xlu0 %1198
    %v1200 = vsel %vm197, %v1197, 0
    %v1202 = vsel %vm197, %v1199, 0
    %1204 = vmatprep.subr.mxu0 0.0
    %1205 = vmatpush1.xpose.msra.mxu0 %v1202
    %1206 = vmatprep.subr.mxu0 0.0
    %1207 = vmatpush1.xpose.msra.mxu0 0.0
    %1208 = vmatprep.subr.mxu0 0.0
    %1209 = vmatpush1.xpose.msra.mxu0 0.0
    %1210 = vmatprep.subr.mxu0 0.0
    %1211 = vmatpush1.xpose.msra.mxu0 0.0
    %1212 = vmatprep.subr.mxu0 0.0
    %1213 = vmatpush1.xpose.msra.mxu0 0.0
    %1214 = vmatprep.subr.mxu0 0.0
    %1215 = vmatpush1.xpose.msra.mxu0 0.0
    %1216 = vmatprep.subr.mxu0 0.0
    %1217 = vmatpush1.xpose.msra.mxu0 0.0
    %1218 = vmatprep.subr.mxu0 0.0
    %1219 = vmatpush1.xpose.msra.mxu0 0.0
    %1220 = vmatprep.subr.mxu0 0.0
    %1221 = vmatpush1.xpose.msra.mxu0 0.0
    %1222 = vmatprep.subr.mxu0 0.0
    %1223 = vmatpush1.xpose.msra.mxu0 0.0
    %1224 = vmatprep.subr.mxu0 0.0
    %1225 = vmatpush1.xpose.msra.mxu0 0.0
    %1226 = vmatprep.subr.mxu0 0.0
    %1227 = vmatpush1.xpose.msra.mxu0 0.0
    %1228 = vmatprep.subr.mxu0 0.0
    %1229 = vmatpush1.xpose.msra.mxu0 0.0
    %1230 = vmatprep.subr.mxu0 0.0
    %1231 = vmatpush1.xpose.msra.mxu0 0.0
    %1232 = vmatprep.subr.mxu0 0.0
    %1233 = vmatpush1.xpose.msra.mxu0 0.0
    %1234 = vmatprep.subr.mxu0 0.0
    %1235 = vmatpush1.xpose.msra.mxu0 0.0
    %1236 = vmatprep.subr.mxu0 0.0
    %1237 = vmatpush1.xpose.msra.mxu0 0.0
    %1238 = vmatprep.subr.mxu0 0.0
    %1239 = vmatpush1.xpose.msra.mxu0 0.0
    %1240 = vmatprep.subr.mxu0 0.0
    %1241 = vmatpush1.xpose.msra.mxu0 0.0
    %1242 = vmatprep.subr.mxu0 0.0
    %1243 = vmatpush1.xpose.msra.mxu0 0.0
    %1244 = vmatprep.subr.mxu0 0.0
    %1245 = vmatpush1.xpose.msra.mxu0 0.0
    %1246 = vmatprep.subr.mxu0 0.0
    %1247 = vmatpush1.xpose.msra.mxu0 0.0
    %1248 = vmatprep.subr.mxu0 0.0
    %1249 = vmatpush1.xpose.msra.mxu0 0.0
    %1250 = vmatprep.subr.mxu0 0.0
    %1251 = vmatpush1.xpose.msra.mxu0 0.0
    %1252 = vmatprep.subr.mxu0 0.0
    %1253 = vmatpush1.xpose.msra.mxu0 0.0
    %1254 = vmatprep.subr.mxu0 0.0
    %1255 = vmatpush1.xpose.msra.mxu0 0.0
    %1256 = vmatprep.subr.mxu0 0.0
    %1257 = vmatpush1.xpose.msra.mxu0 0.0
    %1258 = vmatprep.subr.mxu0 0.0
    %1259 = vmatpush1.xpose.msra.mxu0 0.0
    %1260 = vmatprep.subr.mxu0 0.0
    %1261 = vmatpush1.xpose.msra.mxu0 0.0
    %1262 = vmatprep.subr.mxu0 0.0
    %1263 = vmatpush1.xpose.msra.mxu0 0.0
    %1264 = vmatprep.subr.mxu0 0.0
    %1265 = vmatpush1.xpose.msra.mxu0 0.0
    %1266 = vmatprep.subr.mxu0 0.0
    %1267 = vmatpush1.xpose.msra.mxu0 0.0
    %1268 = vmatprep.mubr.f32.mxu0 0.0
    %1269 = vmatmul.mubr.f32.gmra.mrb[0].mxu0 %v1200
    %v1270 = vpop.f32.mrb[0].mxu0
    %v1271 = vadd.f32 %v187, %v1270
    %v1272 = vpop.f32.mrb[0].mxu0
    %1273 = vdwg.mxu0
    %1274 = vrot.lane.b32.xlu0 %v178, 80
    %v1275 = vpop.permute.xlu0 %1274
    %1276 = vrot.lane.b32.xlu0 %v178, 16
    %v1277 = vpop.permute.xlu0 %1276
    %v1278 = vsel %vm197, %v1275, 0
    %v1280 = vsel %vm197, %v1277, 0
    %1282 = vmatprep.subr.mxu0 0.0
    %1283 = vmatpush1.xpose.msra.mxu0 %v1280
    %1284 = vmatprep.subr.mxu0 0.0
    %1285 = vmatpush1.xpose.msra.mxu0 0.0
    %1286 = vmatprep.subr.mxu0 0.0
    %1287 = vmatpush1.xpose.msra.mxu0 0.0
    %1288 = vmatprep.subr.mxu0 0.0
    %1289 = vmatpush1.xpose.msra.mxu0 0.0
    %1290 = vmatprep.subr.mxu0 0.0
    %1291 = vmatpush1.xpose.msra.mxu0 0.0
    %1292 = vmatprep.subr.mxu0 0.0
    %1293 = vmatpush1.xpose.msra.mxu0 0.0
    %1294 = vmatprep.subr.mxu0 0.0
    %1295 = vmatpush1.xpose.msra.mxu0 0.0
    %1296 = vmatprep.subr.mxu0 0.0
    %1297 = vmatpush1.xpose.msra.mxu0 0.0
    %1298 = vmatprep.subr.mxu0 0.0
    %1299 = vmatpush1.xpose.msra.mxu0 0.0
    %1300 = vmatprep.subr.mxu0 0.0
    %1301 = vmatpush1.xpose.msra.mxu0 0.0
    %1302 = vmatprep.subr.mxu0 0.0
    %1303 = vmatpush1.xpose.msra.mxu0 0.0
    %1304 = vmatprep.subr.mxu0 0.0
    %1305 = vmatpush1.xpose.msra.mxu0 0.0
    %1306 = vmatprep.subr.mxu0 0.0
    %1307 = vmatpush1.xpose.msra.mxu0 0.0
    %1308 = vmatprep.subr.mxu0 0.0
    %1309 = vmatpush1.xpose.msra.mxu0 0.0
    %1310 = vmatprep.subr.mxu0 0.0
    %1311 = vmatpush1.xpose.msra.mxu0 0.0
    %1312 = vmatprep.subr.mxu0 0.0
    %1313 = vmatpush1.xpose.msra.mxu0 0.0
    %1314 = vmatprep.subr.mxu0 0.0
    %1315 = vmatpush1.xpose.msra.mxu0 0.0
    %1316 = vmatprep.subr.mxu0 0.0
    %1317 = vmatpush1.xpose.msra.mxu0 0.0
    %1318 = vmatprep.subr.mxu0 0.0
    %1319 = vmatpush1.xpose.msra.mxu0 0.0
    %1320 = vmatprep.subr.mxu0 0.0
    %1321 = vmatpush1.xpose.msra.mxu0 0.0
    %1322 = vmatprep.subr.mxu0 0.0
    %1323 = vmatpush1.xpose.msra.mxu0 0.0
    %1324 = vmatprep.subr.mxu0 0.0
    %1325 = vmatpush1.xpose.msra.mxu0 0.0
    %1326 = vmatprep.subr.mxu0 0.0
    %1327 = vmatpush1.xpose.msra.mxu0 0.0
    %1328 = vmatprep.subr.mxu0 0.0
    %1329 = vmatpush1.xpose.msra.mxu0 0.0
    %1330 = vmatprep.subr.mxu0 0.0
    %1331 = vmatpush1.xpose.msra.mxu0 0.0
    %1332 = vmatprep.subr.mxu0 0.0
    %1333 = vmatpush1.xpose.msra.mxu0 0.0
    %1334 = vmatprep.subr.mxu0 0.0
    %1335 = vmatpush1.xpose.msra.mxu0 0.0
    %1336 = vmatprep.subr.mxu0 0.0
    %1337 = vmatpush1.xpose.msra.mxu0 0.0
    %1338 = vmatprep.subr.mxu0 0.0
    %1339 = vmatpush1.xpose.msra.mxu0 0.0
    %1340 = vmatprep.subr.mxu0 0.0
    %1341 = vmatpush1.xpose.msra.mxu0 0.0
    %1342 = vmatprep.subr.mxu0 0.0
    %1343 = vmatpush1.xpose.msra.mxu0 0.0
    %1344 = vmatprep.subr.mxu0 0.0
    %1345 = vmatpush1.xpose.msra.mxu0 0.0
    %1346 = vmatprep.mubr.f32.mxu0 0.0
    %1347 = vmatmul.mubr.f32.gmra.mrb[0].mxu0 %v1278
    %v1348 = vpop.f32.mrb[0].mxu0
    %v1349 = vadd.f32 %v191, %v1348
    %v1350 = vpop.f32.mrb[0].mxu0
    %1351 = vdwg.mxu0
    %v1352 = vsel %vm349, %v1271, -inf
    %1353 = vmax.xlane.f32.xlu0 %v1352
    %v1354 = vpop.xlane.xlu0 %1353
    %v1355 = vsel %vm349, %v1349, -inf
    %1356 = vmax.xlane.f32.xlu0 %v1355
    %v1357 = vpop.xlane.xlu0 %1356
    %v1358 = vsub.f32 %v1271, %v1354
    %v1359 = vsub.f32 %v1349, %v1357
    %v1360 = vmul.f32 %v1358, 1.442695
    %v1361 = vpow.pop %v1360
    %v1362 = vmul.f32 %v1359, 1.442695
    %v1363 = vpow.pop %v1362
    %v1364 = vsel %vm349, %v1361, 0.0
    %1365 = vadd.xlane.f32.xlu0 %v1364
    %v1366 = vpop.xlane.xlu0 %1365
    %v1367 = vsel %vm349, %v1363, 0.0
    %1368 = vadd.xlane.f32.xlu0 %v1367
    %v1369 = vpop.xlane.xlu0 %1368
    %v1370 = vrcp.pop %v1366
    %v1371 = vrcp.pop %v1369
    %v1372 = vmul.f32 %v1361, %v1370
    %v1373 = vmul.f32 %v1363, %v1371
    %1374 = vrot.lane.b32.xlu0 %v176, 80
    %v1375 = vpop.permute.xlu0 %1374
    %v1378 = vsel %vm349, %v1372, 0
    %1380 = vmatprep.subr.mxu0 0.0
    %1381 = vmatpush1.msra.mxu0 %v1375
    %1382 = vmatprep.subr.mxu0 0.0
    %1383 = vmatpush1.msra.mxu0 0.0
    %1384 = vmatprep.subr.mxu0 0.0
    %1385 = vmatpush1.msra.mxu0 0.0
    %1386 = vmatprep.subr.mxu0 0.0
    %1387 = vmatpush1.msra.mxu0 0.0
    %1388 = vmatprep.subr.mxu0 0.0
    %1389 = vmatpush1.msra.mxu0 0.0
    %1390 = vmatprep.subr.mxu0 0.0
    %1391 = vmatpush1.msra.mxu0 0.0
    %1392 = vmatprep.subr.mxu0 0.0
    %1393 = vmatpush1.msra.mxu0 0.0
    %1394 = vmatprep.subr.mxu0 0.0
    %1395 = vmatpush1.msra.mxu0 0.0
    %1396 = vmatprep.subr.mxu0 0.0
    %1397 = vmatpush1.msra.mxu0 0.0
    %1398 = vmatprep.subr.mxu0 0.0
    %1399 = vmatpush1.msra.mxu0 0.0
    %1400 = vmatprep.subr.mxu0 0.0
    %1401 = vmatpush1.msra.mxu0 0.0
    %1402 = vmatprep.subr.mxu0 0.0
    %1403 = vmatpush1.msra.mxu0 0.0
    %1404 = vmatprep.subr.mxu0 0.0
    %1405 = vmatpush1.msra.mxu0 0.0
    %1406 = vmatprep.subr.mxu0 0.0
    %1407 = vmatpush1.msra.mxu0 0.0
    %1408 = vmatprep.subr.mxu0 0.0
    %1409 = vmatpush1.msra.mxu0 0.0
    %1410 = vmatprep.subr.mxu0 0.0
    %1411 = vmatpush1.msra.mxu0 0.0
    %1412 = vmatprep.subr.mxu0 0.0
    %1413 = vmatpush1.msra.mxu0 0.0
    %1414 = vmatprep.subr.mxu0 0.0
    %1415 = vmatpush1.msra.mxu0 0.0
    %1416 = vmatprep.subr.mxu0 0.0
    %1417 = vmatpush1.msra.mxu0 0.0
    %1418 = vmatprep.subr.mxu0 0.0
    %1419 = vmatpush1.msra.mxu0 0.0
    %1420 = vmatprep.subr.mxu0 0.0
    %1421 = vmatpush1.msra.mxu0 0.0
    %1422 = vmatprep.subr.mxu0 0.0
    %1423 = vmatpush1.msra.mxu0 0.0
    %1424 = vmatprep.subr.mxu0 0.0
    %1425 = vmatpush1.msra.mxu0 0.0
    %1426 = vmatprep.subr.mxu0 0.0
    %1427 = vmatpush1.msra.mxu0 0.0
    %1428 = vmatprep.subr.mxu0 0.0
    %1429 = vmatpush1.msra.mxu0 0.0
    %1430 = vmatprep.subr.mxu0 0.0
    %1431 = vmatpush1.msra.mxu0 0.0
    %1432 = vmatprep.subr.mxu0 0.0
    %1433 = vmatpush1.msra.mxu0 0.0
    %1434 = vmatprep.subr.mxu0 0.0
    %1435 = vmatpush1.msra.mxu0 0.0
    %1436 = vmatprep.subr.mxu0 0.0
    %1437 = vmatpush1.msra.mxu0 0.0
    %1438 = vmatprep.subr.mxu0 0.0
    %1439 = vmatpush1.msra.mxu0 0.0
    %1440 = vmatprep.subr.mxu0 0.0
    %1441 = vmatpush1.msra.mxu0 0.0
    %1442 = vmatprep.subr.mxu0 0.0
    %1443 = vmatpush1.msra.mxu0 0.0
    %1444 = vmatprep.mubr.f32.mxu0 0.0
    %1445 = vmatmul.mubr.f32.gmra.mrb[0].mxu0 %v1378
    %v1446 = vpop.f32.mrb[0].mxu0
    %v1447 = vadd.f32 0.0, %v1446
    %v1448 = vpop.f32.mrb[0].mxu0
    %1449 = vdwg.mxu0
    %1450 = vrot.lane.b32.xlu0 %v180, 80
    %v1451 = vpop.permute.xlu0 %1450
    %v1454 = vsel %vm349, %v1373, 0
    %1456 = vmatprep.subr.mxu0 0.0
    %1457 = vmatpush1.msra.mxu0 %v1451
    %1458 = vmatprep.subr.mxu0 0.0
    %1459 = vmatpush1.msra.mxu0 0.0
    %1460 = vmatprep.subr.mxu0 0.0
    %1461 = vmatpush1.msra.mxu0 0.0
    %1462 = vmatprep.subr.mxu0 0.0
    %1463 = vmatpush1.msra.mxu0 0.0
    %1464 = vmatprep.subr.mxu0 0.0
    %1465 = vmatpush1.msra.mxu0 0.0
    %1466 = vmatprep.subr.mxu0 0.0
    %1467 = vmatpush1.msra.mxu0 0.0
    %1468 = vmatprep.subr.mxu0 0.0
    %1469 = vmatpush1.msra.mxu0 0.0
    %1470 = vmatprep.subr.mxu0 0.0
    %1471 = vmatpush1.msra.mxu0 0.0
    %1472 = vmatprep.subr.mxu0 0.0
    %1473 = vmatpush1.msra.mxu0 0.0
    %1474 = vmatprep.subr.mxu0 0.0
    %1475 = vmatpush1.msra.mxu0 0.0
    %1476 = vmatprep.subr.mxu0 0.0
    %1477 = vmatpush1.msra.mxu0 0.0
    %1478 = vmatprep.subr.mxu0 0.0
    %1479 = vmatpush1.msra.mxu0 0.0
    %1480 = vmatprep.subr.mxu0 0.0
    %1481 = vmatpush1.msra.mxu0 0.0
    %1482 = vmatprep.subr.mxu0 0.0
    %1483 = vmatpush1.msra.mxu0 0.0
    %1484 = vmatprep.subr.mxu0 0.0
    %1485 = vmatpush1.msra.mxu0 0.0
    %1486 = vmatprep.subr.mxu0 0.0
    %1487 = vmatpush1.msra.mxu0 0.0
    %1488 = vmatprep.subr.mxu0 0.0
    %1489 = vmatpush1.msra.mxu0 0.0
    %1490 = vmatprep.subr.mxu0 0.0
    %1491 = vmatpush1.msra.mxu0 0.0
    %1492 = vmatprep.subr.mxu0 0.0
    %1493 = vmatpush1.msra.mxu0 0.0
    %1494 = vmatprep.subr.mxu0 0.0
    %1495 = vmatpush1.msra.mxu0 0.0
    %1496 = vmatprep.subr.mxu0 0.0
    %1497 = vmatpush1.msra.mxu0 0.0
    %1498 = vmatprep.subr.mxu0 0.0
    %1499 = vmatpush1.msra.mxu0 0.0
    %1500 = vmatprep.subr.mxu0 0.0
    %1501 = vmatpush1.msra.mxu0 0.0
    %1502 = vmatprep.subr.mxu0 0.0
    %1503 = vmatpush1.msra.mxu0 0.0
    %1504 = vmatprep.subr.mxu0 0.0
    %1505 = vmatpush1.msra.mxu0 0.0
    %1506 = vmatprep.subr.mxu0 0.0
    %1507 = vmatpush1.msra.mxu0 0.0
    %1508 = vmatprep.subr.mxu0 0.0
    %1509 = vmatpush1.msra.mxu0 0.0
    %1510 = vmatprep.subr.mxu0 0.0
    %1511 = vmatpush1.msra.mxu0 0.0
    %1512 = vmatprep.subr.mxu0 0.0
    %1513 = vmatpush1.msra.mxu0 0.0
    %1514 = vmatprep.subr.mxu0 0.0
    %1515 = vmatpush1.msra.mxu0 0.0
    %1516 = vmatprep.subr.mxu0 0.0
    %1517 = vmatpush1.msra.mxu0 0.0
    %1518 = vmatprep.subr.mxu0 0.0
    %1519 = vmatpush1.msra.mxu0 0.0
    %1520 = vmatprep.mubr.f32.mxu0 0.0
    %1521 = vmatmul.mubr.f32.gmra.mrb[0].mxu0 %v1454
    %v1522 = vpop.f32.mrb[0].mxu0
    %v1523 = vadd.f32 0.0, %v1522
    %v1524 = vpop.f32.mrb[0].mxu0
    %1525 = vdwg.mxu0
    %v1526 = vpack.c.bf16 %v1523, %v1447
    %1528 = vrot.lane.b32.xlu0 %v1526, 48
    %v1529 = vpop.permute.xlu0 %1528
    %vm1531 = vcmask 523648
    %1532 = vst.msk [vmem:[#allocation2] sm:$0xff] %vm1531, %v1529
    %v1533 = vld [vmem:[#allocation2] sm:$0xff]
    %v1534 = vld [vmem:[%s5] sm:$0xf]
    %v1535 = vld [vmem:[%s5 + $0x4] sm:$0xf]
    %v1536 = vld [vmem:[%s5 + $0x8] sm:$0xf]
    %v1537 = vld [vmem:[%s5 + $0xc] sm:$0xf]
    %v1538 = vld [vmem:[%s5 + $0x10] sm:$0xf]
    %v1539 = vld [vmem:[%s5 + $0x14] sm:$0xf]
    %v1540 = vld [vmem:[%s5 + $0x18] sm:$0xf]
    %v1541 = vld [vmem:[%s5 + $0x1c] sm:$0xf]
    %v1542 = vlaneseq
    %v1543 = vshrl.u32 %v1542, 7
    %v1544 = vsub.s32 2, %v1543
    %v1545 = vrot.slane %v77, %v1544
    %v1554 = vunpack.c.l.b16 %v1534
    %v1555 = vunpack.c.l.b16 %v1535
    %v1556 = vunpack.c.l.b16 %v1536
    %v1557 = vunpack.c.l.b16 %v1537
    %v1558 = vunpack.c.l.b16 %v1538
    %v1559 = vunpack.c.l.b16 %v1539
    %v1560 = vunpack.c.l.b16 %v1540
    %v1561 = vunpack.c.l.b16 %v1541
    %v1562 = vpack.c.b16 %v1555, %v1554
    %v1563 = vpack.c.b16 %v1557, %v1556
    %v1564 = vpack.c.b16 %v1559, %v1558
    %v1565 = vpack.c.b16 %v1561, %v1560
    %v1571 = vsel %vm35, %v1533, 0
    %1573 = vmatprep.subr.bf16.mxu0 0
    %1574 = vmatpush1.bf16.msra.mxu0 %v1562
    %1575 = vmatprep.subr.bf16.mxu0 0
    %1576 = vmatpush1.bf16.msra.mxu0 %v1563
    %1577 = vmatprep.subr.bf16.mxu0 0
    %1578 = vmatpush1.bf16.msra.mxu0 %v1564
    %1579 = vmatprep.subr.bf16.mxu0 0
    %1580 = vmatpush1.bf16.msra.mxu0 %v1565
    %1581 = vmatprep.subr.bf16.mxu0 0
    %1582 = vmatpush1.bf16.msra.mxu0 0
    %1583 = vmatprep.subr.bf16.mxu0 0
    %1584 = vmatpush1.bf16.msra.mxu0 0
    %1585 = vmatprep.subr.bf16.mxu0 0
    %1586 = vmatpush1.bf16.msra.mxu0 0
    %1587 = vmatprep.subr.bf16.mxu0 0
    %1588 = vmatpush1.bf16.msra.mxu0 0
    %1589 = vmatprep.subr.bf16.mxu0 0
    %1590 = vmatpush1.bf16.msra.mxu0 0
    %1591 = vmatprep.subr.bf16.mxu0 0
    %1592 = vmatpush1.bf16.msra.mxu0 0
    %1593 = vmatprep.subr.bf16.mxu0 0
    %1594 = vmatpush1.bf16.msra.mxu0 0
    %1595 = vmatprep.subr.bf16.mxu0 0
    %1596 = vmatpush1.bf16.msra.mxu0 0
    %1597 = vmatprep.subr.bf16.mxu0 0
    %1598 = vmatpush1.bf16.msra.mxu0 0
    %1599 = vmatprep.subr.bf16.mxu0 0
    %1600 = vmatpush1.bf16.msra.mxu0 0
    %1601 = vmatprep.subr.bf16.mxu0 0
    %1602 = vmatpush1.bf16.msra.mxu0 0
    %1603 = vmatprep.subr.bf16.mxu0 0
    %1604 = vmatpush1.bf16.msra.mxu0 0
    %1605 = vmatprep.mubr.bf16.mxu0 0
    %1606 = vmatmul.mubr.bf16.gmra.mrb[0].mxu0 %v1571
    %v1607 = vpop.f32.mrb[0].mxu0
    %v1608 = vadd.f32 %v1545, %v1607
    %v1609 = vpop.f32.mrb[0].mxu0
    %v1610 = vpop.f32.mrb[0].mxu0
    %v1611 = vadd.f32 %v1545, %v1610
    %v1612 = vpop.f32.mrb[0].mxu0
    %1613 = vdwg.mxu0
    %v1614 = vadd.f32 %v1608, %v73
    %v1615 = vadd.f32 %v1611, %v74
    %v1616 = vsel %vm35, %v1614, 0.0
    %1617 = vadd.xlane.f32.xlu0 %v1616
    %v1618 = vpop.xlane.xlu0 %1617
    %v1619 = vsel %vm35, %v1615, 0.0
    %1620 = vadd.xlane.f32.xlu0 %v1619
    %v1621 = vpop.xlane.xlu0 %1620
    %v1622 = vmul.f32 %v1618, %v42
    %v1623 = vmul.f32 %v1621, %v42
    %v1624 = vsub.f32 %v1614, %v1622
    %v1625 = vsub.f32 %v1615, %v1623
    %v1626 = vmul.f32 %v1624, %v1624
    %v1627 = vmul.f32 %v1625, %v1625
    %v1628 = vsel %vm35, %v1626, 0.0
    %1629 = vadd.xlane.f32.xlu0 %v1628
    %v1630 = vpop.xlane.xlu0 %1629
    %v1631 = vsel %vm35, %v1627, 0.0
    %1632 = vadd.xlane.f32.xlu0 %v1631
    %v1633 = vpop.xlane.xlu0 %1632
    %v1634 = vmul.f32 %v1630, %v42
    %v1635 = vmul.f32 %v1633, %v42
    %v1636 = vadd.f32 %v1634, 1e-05
    %v1637 = vadd.f32 %v1635, 1e-05
    %v1638 = vrsqrt.pop %v1636
    %v1639 = vrsqrt.pop %v1637
    %v1640 = vmul.f32 %v1624, %v1638
    %v1641 = vmul.f32 %v1625, %v1639
    %v1642 = vlaneseq
    %v1643 = vshrl.u32 %v1642, 7
    %v1644 = vsub.s32 3, %v1643
    %v1645 = vrot.slane %v77, %v1644
    %v1646 = vmul.f32 %v1640, %v1645
    %v1647 = vmul.f32 %v1641, %v1645
    %v1648 = vlaneseq
    %v1649 = vshrl.u32 %v1648, 7
    %v1650 = vsub.s32 4, %v1649
    %v1651 = vrot.slane %v77, %v1650
    %v1652 = vadd.f32 %v1646, %v1651
    %v1653 = vadd.f32 %v1647, %v1651
    %v1654 = vpack.c.bf16 %v1653, %v1652
    %v1655 = vld [vmem:[%s6] sm:$0xf]
    %v1656 = vld [vmem:[%s6 + $0x4] sm:$0xf]
    %v1657 = vld [vmem:[%s6 + $0x8] sm:$0xf]
    %v1658 = vld [vmem:[%s6 + $0xc] sm:$0xf]
    %v1659 = vld [vmem:[%s6 + $0x10] sm:$0xf]
    %v1660 = vld [vmem:[%s6 + $0x14] sm:$0xf]
    %v1661 = vld [vmem:[%s6 + $0x18] sm:$0xf]
    %v1662 = vld [vmem:[%s6 + $0x1c] sm:$0xf]
    %v1663 = vlaneseq
    %v1664 = vshrl.u32 %v1663, 7
    %v1665 = vsub.s32 1, %v1664
    %v1666 = vrot.slane %v77, %v1665
    %v1675 = vunpack.c.l.b16 %v1655
    %v1676 = vunpack.c.l.b16 %v1656
    %v1677 = vunpack.c.l.b16 %v1657
    %v1678 = vunpack.c.l.b16 %v1658
    %v1679 = vunpack.c.l.b16 %v1659
    %v1680 = vunpack.c.l.b16 %v1660
    %v1681 = vunpack.c.l.b16 %v1661
    %v1682 = vunpack.c.l.b16 %v1662
    %v1683 = vpack.c.b16 %v1676, %v1675
    %v1684 = vpack.c.b16 %v1678, %v1677
    %v1685 = vpack.c.b16 %v1680, %v1679
    %v1686 = vpack.c.b16 %v1682, %v1681
    %v1692 = vsel %vm35, %v1654, 0
    %1694 = vmatprep.subr.bf16.mxu0 0
    %1695 = vmatpush1.bf16.msra.mxu0 %v1683
    %1696 = vmatprep.subr.bf16.mxu0 0
    %1697 = vmatpush1.bf16.msra.mxu0 %v1684
    %1698 = vmatprep.subr.bf16.mxu0 0
    %1699 = vmatpush1.bf16.msra.mxu0 %v1685
    %1700 = vmatprep.subr.bf16.mxu0 0
    %1701 = vmatpush1.bf16.msra.mxu0 %v1686
    %1702 = vmatprep.subr.bf16.mxu0 0
    %1703 = vmatpush1.bf16.msra.mxu0 0
    %1704 = vmatprep.subr.bf16.mxu0 0
    %1705 = vmatpush1.bf16.msra.mxu0 0
    %1706 = vmatprep.subr.bf16.mxu0 0
    %1707 = vmatpush1.bf16.msra.mxu0 0
    %1708 = vmatprep.subr.bf16.mxu0 0
    %1709 = vmatpush1.bf16.msra.mxu0 0
    %1710 = vmatprep.subr.bf16.mxu0 0
    %1711 = vmatpush1.bf16.msra.mxu0 0
    %1712 = vmatprep.subr.bf16.mxu0 0
    %1713 = vmatpush1.bf16.msra.mxu0 0
    %1714 = vmatprep.subr.bf16.mxu0 0
    %1715 = vmatpush1.bf16.msra.mxu0 0
    %1716 = vmatprep.subr.bf16.mxu0 0
    %1717 = vmatpush1.bf16.msra.mxu0 0
    %1718 = vmatprep.subr.bf16.mxu0 0
    %1719 = vmatpush1.bf16.msra.mxu0 0
    %1720 = vmatprep.subr.bf16.mxu0 0
    %1721 = vmatpush1.bf16.msra.mxu0 0
    %1722 = vmatprep.subr.bf16.mxu0 0
    %1723 = vmatpush1.bf16.msra.mxu0 0
    %1724 = vmatprep.subr.bf16.mxu0 0
    %1725 = vmatpush1.bf16.msra.mxu0 0
    %1726 = vmatprep.mubr.bf16.mxu0 0
    %1727 = vmatmul.mubr.bf16.gmra.mrb[0].mxu0 %v1692
    %v1728 = vpop.f32.mrb[0].mxu0
    %v1729 = vadd.f32 %v1666, %v1728
    %v1730 = vpop.f32.mrb[0].mxu0
    %v1731 = vpop.f32.mrb[0].mxu0
    %v1732 = vadd.f32 %v1666, %v1731
    %v1733 = vpop.f32.mrb[0].mxu0
    %1734 = vdwg.mxu0
    %v1735 = vmul.f32 %v1729, 0.5
    %v1736 = vmul.f32 %v1732, 0.5
    %v1737 = vmul.f32 %v1729, 0.044715
    %v1738 = vmul.f32 %v1732, 0.044715
    %v1739 = vmul.f32 %v1737, %v1729
    %v1740 = vmul.f32 %v1738, %v1732
    %v1741 = vmul.f32 %v1739, %v1729
    %v1742 = vmul.f32 %v1740, %v1732
    %v1743 = vadd.f32 %v1729, %v1741
    %v1744 = vadd.f32 %v1732, %v1742
    %v1745 = vmul.f32 %v1743, 0.7978846
    %v1746 = vmul.f32 %v1744, 0.7978846
    %v1747 = vtanh.pop %v1745
    %v1748 = vtanh.pop %v1746
    %v1749 = vadd.f32 %v1747, 1.0
    %v1750 = vadd.f32 %v1748, 1.0
    %v1751 = vmul.f32 %v1735, %v1749
    %v1752 = vmul.f32 %v1736, %v1750
    %v1753 = vpack.c.bf16 %v1752, %v1751
    %v1754 = vld [vmem:[%s7] sm:$0xf]
    %v1755 = vld [vmem:[%s7 + $0x4] sm:$0xf]
    %v1756 = vld [vmem:[%s7 + $0x8] sm:$0xf]
    %v1757 = vld [vmem:[%s7 + $0xc] sm:$0xf]
    %v1758 = vld [vmem:[%s7 + $0x10] sm:$0xf]
    %v1759 = vld [vmem:[%s7 + $0x14] sm:$0xf]
    %v1760 = vld [vmem:[%s7 + $0x18] sm:$0xf]
    %v1761 = vld [vmem:[%s7 + $0x1c] sm:$0xf]
    %v1762 = vld [vmem:[%s7 + $0x20] sm:$0xf]
    %v1763 = vld [vmem:[%s7 + $0x24] sm:$0xf]
    %v1764 = vld [vmem:[%s7 + $0x28] sm:$0xf]
    %v1765 = vld [vmem:[%s7 + $0x2c] sm:$0xf]
    %v1766 = vld [vmem:[%s7 + $0x30] sm:$0xf]
    %v1767 = vld [vmem:[%s7 + $0x34] sm:$0xf]
    %v1768 = vld [vmem:[%s7 + $0x38] sm:$0xf]
    %v1769 = vld [vmem:[%s7 + $0x3c] sm:$0xf]
    %v1770 = vlaneseq
    %v1771 = vshrl.u32 %v1770, 7
    %v1772 = vsub.s32 5, %v1771
    %v1773 = vrot.slane %v77, %v1772
    %v1790 = vunpack.c.l.b16 %v1754
    %v1791 = vunpack.c.l.b16 %v1755
    %v1792 = vunpack.c.l.b16 %v1756
    %v1793 = vunpack.c.l.b16 %v1757
    %v1794 = vunpack.c.l.b16 %v1758
    %v1795 = vunpack.c.l.b16 %v1759
    %v1796 = vunpack.c.l.b16 %v1760
    %v1797 = vunpack.c.l.b16 %v1761
    %v1798 = vunpack.c.l.b16 %v1762
    %v1799 = vunpack.c.l.b16 %v1763
    %v1800 = vunpack.c.l.b16 %v1764
    %v1801 = vunpack.c.l.b16 %v1765
    %v1802 = vunpack.c.l.b16 %v1766
    %v1803 = vunpack.c.l.b16 %v1767
    %v1804 = vunpack.c.l.b16 %v1768
    %v1805 = vunpack.c.l.b16 %v1769
    %v1806 = vpack.c.b16 %v1791, %v1790
    %v1807 = vpack.c.b16 %v1793, %v1792
    %v1808 = vpack.c.b16 %v1795, %v1794
    %v1809 = vpack.c.b16 %v1797, %v1796
    %v1810 = vpack.c.b16 %v1799, %v1798
    %v1811 = vpack.c.b16 %v1801, %v1800
    %v1812 = vpack.c.b16 %v1803, %v1802
    %v1813 = vpack.c.b16 %v1805, %v1804
    %1822 = vmatprep.subr.bf16.mxu0 0
    %1823 = vmatpush1.bf16.msra.mxu0 %v1806
    %1824 = vmatprep.subr.bf16.mxu0 0
    %1825 = vmatpush1.bf16.msra.mxu0 %v1807
    %1826 = vmatprep.subr.bf16.mxu0 0
    %1827 = vmatpush1.bf16.msra.mxu0 %v1808
    %1828 = vmatprep.subr.bf16.mxu0 0
    %1829 = vmatpush1.bf16.msra.mxu0 %v1809
    %1830 = vmatprep.subr.bf16.mxu0 0
    %1831 = vmatpush1.bf16.msra.mxu0 %v1810
    %1832 = vmatprep.subr.bf16.mxu0 0
    %1833 = vmatpush1.bf16.msra.mxu0 %v1811
    %1834 = vmatprep.subr.bf16.mxu0 0
    %1835 = vmatpush1.bf16.msra.mxu0 %v1812
    %1836 = vmatprep.subr.bf16.mxu0 0
    %1837 = vmatpush1.bf16.msra.mxu0 %v1813
    %1838 = vmatprep.subr.bf16.mxu0 0
    %1839 = vmatpush1.bf16.msra.mxu0 0
    %1840 = vmatprep.subr.bf16.mxu0 0
    %1841 = vmatpush1.bf16.msra.mxu0 0
    %1842 = vmatprep.subr.bf16.mxu0 0
    %1843 = vmatpush1.bf16.msra.mxu0 0
    %1844 = vmatprep.subr.bf16.mxu0 0
    %1845 = vmatpush1.bf16.msra.mxu0 0
    %1846 = vmatprep.subr.bf16.mxu0 0
    %1847 = vmatpush1.bf16.msra.mxu0 0
    %1848 = vmatprep.subr.bf16.mxu0 0
    %1849 = vmatpush1.bf16.msra.mxu0 0
    %1850 = vmatprep.subr.bf16.mxu0 0
    %1851 = vmatpush1.bf16.msra.mxu0 0
    %1852 = vmatprep.subr.bf16.mxu0 0
    %1853 = vmatpush1.bf16.msra.mxu0 0
    %1854 = vmatprep.mubr.bf16.mxu0 0
    %1855 = vmatmul.mubr.bf16.gmra.mrb[0].mxu0 %v1753
    %v1856 = vpop.f32.mrb[0].mxu0
    %v1857 = vadd.f32 %v1773, %v1856
    %v1858 = vpop.f32.mrb[0].mxu0
    %v1859 = vpop.f32.mrb[0].mxu0
    %v1860 = vadd.f32 %v1773, %v1859
    %v1861 = vpop.f32.mrb[0].mxu0
    %1862 = vdwg.mxu0
    %v1863 = vadd.f32 %v1857, %v1652
    %v1864 = vadd.f32 %v1860, %v1653
    %v1865 = vsel %vm35, %v1863, 0.0
    %1866 = vadd.xlane.f32.xlu0 %v1865
    %v1867 = vpop.xlane.xlu0 %1866
    %v1868 = vsel %vm35, %v1864, 0.0
    %1869 = vadd.xlane.f32.xlu0 %v1868
    %v1870 = vpop.xlane.xlu0 %1869
    %v1871 = vmul.f32 %v1867, %v42
    %v1872 = vmul.f32 %v1870, %v42
    %v1873 = vsub.f32 %v1863, %v1871
    %v1874 = vsub.f32 %v1864, %v1872
    %v1875 = vmul.f32 %v1873, %v1873
    %v1876 = vmul.f32 %v1874, %v1874
    %v1877 = vsel %vm35, %v1875, 0.0
    %1878 = vadd.xlane.f32.xlu0 %v1877
    %v1879 = vpop.xlane.xlu0 %1878
    %v1880 = vsel %vm35, %v1876, 0.0
    %1881 = vadd.xlane.f32.xlu0 %v1880
    %v1882 = vpop.xlane.xlu0 %1881
    %v1883 = vmul.f32 %v1879, %v42
    %v1884 = vmul.f32 %v1882, %v42
    %v1885 = vadd.f32 %v1883, 1e-05
    %v1886 = vadd.f32 %v1884, 1e-05
    %v1887 = vrsqrt.pop %v1885
    %v1888 = vrsqrt.pop %v1886
    %v1889 = vmul.f32 %v1873, %v1887
    %v1890 = vmul.f32 %v1874, %v1888
    %v1891 = vlaneseq
    %v1892 = vshrl.u32 %v1891, 7
    %v1893 = vsub.s32 6, %v1892
    %v1894 = vrot.slane %v77, %v1893
    %v1895 = vmul.f32 %v1889, %v1894
    %v1896 = vmul.f32 %v1890, %v1894
    %v1897 = vlaneseq
    %v1898 = vshrl.u32 %v1897, 7
    %v1899 = vsub.s32 7, %v1898
    %v1900 = vrot.slane %v77, %v1899
    %v1901 = vadd.f32 %v1895, %v1900
    %v1902 = vadd.f32 %v1896, %v1900
    %s1903 = scalar_lea.vmem %s3, 16
    %v1904 = vld [vmem:[%s1903] sm:$0xff]
    %v1905 = vld [vmem:[%s1903 + $0x8] sm:$0xff]
    %v1906 = vpack.c.bf16 %v1902, %v1901
    %s1907 = scalar_lea.vmem %s4, 64
    %v1908 = vld [vmem:[%s1907] sm:$0xff]
    %v1909 = vld [vmem:[%s1907 + $0x8] sm:$0xff]
    %v1910 = vld [vmem:[%s1907 + $0x10] sm:$0xff]
    %v1911 = vld [vmem:[%s1907 + $0x18] sm:$0xff]
    %v1912 = vld [vmem:[%s1907 + $0x20] sm:$0xff]
    %v1913 = vld [vmem:[%s1907 + $0x28] sm:$0xff]
    %v1914 = vld [vmem:[%s1907 + $0x30] sm:$0xff]
    %v1915 = vld [vmem:[%s1907 + $0x38] sm:$0xff]
    %v1916 = vlaneseq
    %v1917 = vshrl.u32 %v1916, 7
    %v1918 = vsub.s32 0, %v1917
    %v1919 = vrot.slane %v1904, %v1918
    %v1920 = vlaneseq
    %v1921 = vshrl.u32 %v1920, 7
    %v1922 = vsub.s32 0, %v1921
    %v1923 = vrot.slane %v1905, %v1922
    %v1932 = vunpack.c.l.b16 %v1908
    %v1933 = vunpack.c.h.b16 %v1908
    %v1934 = vunpack.c.l.b16 %v1909
    %v1935 = vunpack.c.h.b16 %v1909
    %v1936 = vunpack.c.l.b16 %v1910
    %v1937 = vunpack.c.h.b16 %v1910
    %v1938 = vunpack.c.l.b16 %v1911
    %v1939 = vunpack.c.h.b16 %v1911
    %v1940 = vunpack.c.l.b16 %v1912
    %v1941 = vunpack.c.h.b16 %v1912
    %v1942 = vunpack.c.l.b16 %v1913
    %v1943 = vunpack.c.h.b16 %v1913
    %v1944 = vunpack.c.l.b16 %v1914
    %v1945 = vunpack.c.h.b16 %v1914
    %v1946 = vunpack.c.l.b16 %v1915
    %v1947 = vunpack.c.h.b16 %v1915
    %v1948 = vpack.c.b16 %v1934, %v1932
    %v1949 = vpack.c.b16 %v1935, %v1933
    %v1950 = vpack.c.b16 %v1938, %v1936
    %v1951 = vpack.c.b16 %v1939, %v1937
    %v1952 = vpack.c.b16 %v1942, %v1940
    %v1953 = vpack.c.b16 %v1943, %v1941
    %v1954 = vpack.c.b16 %v1946, %v1944
    %v1955 = vpack.c.b16 %v1947, %v1945
    %v1965 = vsel %vm35, %v1906, 0
    %1967 = vmatprep.subr.bf16.mxu0 %v1949
    %1968 = vmatpush1.bf16.msra.mxu0 %v1948
    %1969 = vmatprep.subr.bf16.mxu0 %v1951
    %1970 = vmatpush1.bf16.msra.mxu0 %v1950
    %1971 = vmatprep.subr.bf16.mxu0 %v1953
    %1972 = vmatpush1.bf16.msra.mxu0 %v1952
    %1973 = vmatprep.subr.bf16.mxu0 %v1955
    %1974 = vmatpush1.bf16.msra.mxu0 %v1954
    %1975 = vmatprep.subr.bf16.mxu0 0
    %1976 = vmatpush1.bf16.msra.mxu0 0
    %1977 = vmatprep.subr.bf16.mxu0 0
    %1978 = vmatpush1.bf16.msra.mxu0 0
    %1979 = vmatprep.subr.bf16.mxu0 0
    %1980 = vmatpush1.bf16.msra.mxu0 0
    %1981 = vmatprep.subr.bf16.mxu0 0
    %1982 = vmatpush1.bf16.msra.mxu0 0
    %1983 = vmatprep.subr.bf16.mxu0 0
    %1984 = vmatpush1.bf16.msra.mxu0 0
    %1985 = vmatprep.subr.bf16.mxu0 0
    %1986 = vmatpush1.bf16.msra.mxu0 0
    %1987 = vmatprep.subr.bf16.mxu0 0
    %1988 = vmatpush1.bf16.msra.mxu0 0
    %1989 = vmatprep.subr.bf16.mxu0 0
    %1990 = vmatpush1.bf16.msra.mxu0 0
    %1991 = vmatprep.subr.bf16.mxu0 0
    %1992 = vmatpush1.bf16.msra.mxu0 0
    %1993 = vmatprep.subr.bf16.mxu0 0
    %1994 = vmatpush1.bf16.msra.mxu0 0
    %1995 = vmatprep.subr.bf16.mxu0 0
    %1996 = vmatpush1.bf16.msra.mxu0 0
    %1997 = vmatprep.subr.bf16.mxu0 0
    %1998 = vmatpush1.bf16.msra.mxu0 0
    %1999 = vmatprep.mubr.bf16.mxu0 0
    %2000 = vmatmul.mubr.bf16.gmra.mrb[0].mxu0 %v1965
    %v2001 = vpop.f32.mrb[0].mxu0
    %v2002 = vadd.f32 %v1919, %v2001
    %v2003 = vpop.f32.mrb[0].mxu0
    %v2004 = vadd.f32 %v1923, %v2003
    %v2005 = vpop.f32.mrb[0].mxu0
    %v2006 = vadd.f32 %v1919, %v2005
    %v2007 = vpop.f32.mrb[0].mxu0
    %v2008 = vadd.f32 %v1923, %v2007
    %2009 = vdwg.mxu0
    %2011 = vrot.lane.b32.xlu0 %v2002, 64
    %v2012 = vpop.permute.xlu0 %2011
    %v2013 = vsel %vm197, %v2002, 0
    %v2015 = vsel %vm197, %v2012, 0
    %2017 = vmatprep.subr.mxu0 0.0
    %2018 = vmatpush1.xpose.msra.mxu0 %v2015
    %2019 = vmatprep.subr.mxu0 0.0
    %2020 = vmatpush1.xpose.msra.mxu0 0.0
    %2021 = vmatprep.subr.mxu0 0.0
    %2022 = vmatpush1.xpose.msra.mxu0 0.0
    %2023 = vmatprep.subr.mxu0 0.0
    %2024 = vmatpush1.xpose.msra.mxu0 0.0
    %2025 = vmatprep.subr.mxu0 0.0
    %2026 = vmatpush1.xpose.msra.mxu0 0.0
    %2027 = vmatprep.subr.mxu0 0.0
    %2028 = vmatpush1.xpose.msra.mxu0 0.0
    %2029 = vmatprep.subr.mxu0 0.0
    %2030 = vmatpush1.xpose.msra.mxu0 0.0
    %2031 = vmatprep.subr.mxu0 0.0
    %2032 = vmatpush1.xpose.msra.mxu0 0.0
    %2033 = vmatprep.subr.mxu0 0.0
    %2034 = vmatpush1.xpose.msra.mxu0 0.0
    %2035 = vmatprep.subr.mxu0 0.0
    %2036 = vmatpush1.xpose.msra.mxu0 0.0
    %2037 = vmatprep.subr.mxu0 0.0
    %2038 = vmatpush1.xpose.msra.mxu0 0.0
    %2039 = vmatprep.subr.mxu0 0.0
    %2040 = vmatpush1.xpose.msra.mxu0 0.0
    %2041 = vmatprep.subr.mxu0 0.0
    %2042 = vmatpush1.xpose.msra.mxu0 0.0
    %2043 = vmatprep.subr.mxu0 0.0
    %2044 = vmatpush1.xpose.msra.mxu0 0.0
    %2045 = vmatprep.subr.mxu0 0.0
    %2046 = vmatpush1.xpose.msra.mxu0 0.0
    %2047 = vmatprep.subr.mxu0 0.0
    %2048 = vmatpush1.xpose.msra.mxu0 0.0
    %2049 = vmatprep.subr.mxu0 0.0
    %2050 = vmatpush1.xpose.msra.mxu0 0.0
    %2051 = vmatprep.subr.mxu0 0.0
    %2052 = vmatpush1.xpose.msra.mxu0 0.0
    %2053 = vmatprep.subr.mxu0 0.0
    %2054 = vmatpush1.xpose.msra.mxu0 0.0
    %2055 = vmatprep.subr.mxu0 0.0
    %2056 = vmatpush1.xpose.msra.mxu0 0.0
    %2057 = vmatprep.subr.mxu0 0.0
    %2058 = vmatpush1.xpose.msra.mxu0 0.0
    %2059 = vmatprep.subr.mxu0 0.0
    %2060 = vmatpush1.xpose.msra.mxu0 0.0
    %2061 = vmatprep.subr.mxu0 0.0
    %2062 = vmatpush1.xpose.msra.mxu0 0.0
    %2063 = vmatprep.subr.mxu0 0.0
    %2064 = vmatpush1.xpose.msra.mxu0 0.0
    %2065 = vmatprep.subr.mxu0 0.0
    %2066 = vmatpush1.xpose.msra.mxu0 0.0
    %2067 = vmatprep.subr.mxu0 0.0
    %2068 = vmatpush1.xpose.msra.mxu0 0.0
    %2069 = vmatprep.subr.mxu0 0.0
    %2070 = vmatpush1.xpose.msra.mxu0 0.0
    %2071 = vmatprep.subr.mxu0 0.0
    %2072 = vmatpush1.xpose.msra.mxu0 0.0
    %2073 = vmatprep.subr.mxu0 0.0
    %2074 = vmatpush1.xpose.msra.mxu0 0.0
    %2075 = vmatprep.subr.mxu0 0.0
    %2076 = vmatpush1.xpose.msra.mxu0 0.0
    %2077 = vmatprep.subr.mxu0 0.0
    %2078 = vmatpush1.xpose.msra.mxu0 0.0
    %2079 = vmatprep.subr.mxu0 0.0
    %2080 = vmatpush1.xpose.msra.mxu0 0.0
    %2081 = vmatprep.mubr.f32.mxu0 0.0
    %2082 = vmatmul.mubr.f32.gmra.mrb[0].mxu0 %v2013
    %v2083 = vpop.f32.mrb[0].mxu0
    %v2084 = vadd.f32 %v187, %v2083
    %v2085 = vpop.f32.mrb[0].mxu0
    %2086 = vdwg.mxu0
    %2088 = vrot.lane.b32.xlu0 %v2006, 64
    %v2089 = vpop.permute.xlu0 %2088
    %v2090 = vsel %vm197, %v2006, 0
    %v2092 = vsel %vm197, %v2089, 0
    %2094 = vmatprep.subr.mxu0 0.0
    %2095 = vmatpush1.xpose.msra.mxu0 %v2092
    %2096 = vmatprep.subr.mxu0 0.0
    %2097 = vmatpush1.xpose.msra.mxu0 0.0
    %2098 = vmatprep.subr.mxu0 0.0
    %2099 = vmatpush1.xpose.msra.mxu0 0.0
    %2100 = vmatprep.subr.mxu0 0.0
    %2101 = vmatpush1.xpose.msra.mxu0 0.0
    %2102 = vmatprep.subr.mxu0 0.0
    %2103 = vmatpush1.xpose.msra.mxu0 0.0
    %2104 = vmatprep.subr.mxu0 0.0
    %2105 = vmatpush1.xpose.msra.mxu0 0.0
    %2106 = vmatprep.subr.mxu0 0.0
    %2107 = vmatpush1.xpose.msra.mxu0 0.0
    %2108 = vmatprep.subr.mxu0 0.0
    %2109 = vmatpush1.xpose.msra.mxu0 0.0
    %2110 = vmatprep.subr.mxu0 0.0
    %2111 = vmatpush1.xpose.msra.mxu0 0.0
    %2112 = vmatprep.subr.mxu0 0.0
    %2113 = vmatpush1.xpose.msra.mxu0 0.0
    %2114 = vmatprep.subr.mxu0 0.0
    %2115 = vmatpush1.xpose.msra.mxu0 0.0
    %2116 = vmatprep.subr.mxu0 0.0
    %2117 = vmatpush1.xpose.msra.mxu0 0.0
    %2118 = vmatprep.subr.mxu0 0.0
    %2119 = vmatpush1.xpose.msra.mxu0 0.0
    %2120 = vmatprep.subr.mxu0 0.0
    %2121 = vmatpush1.xpose.msra.mxu0 0.0
    %2122 = vmatprep.subr.mxu0 0.0
    %2123 = vmatpush1.xpose.msra.mxu0 0.0
    %2124 = vmatprep.subr.mxu0 0.0
    %2125 = vmatpush1.xpose.msra.mxu0 0.0
    %2126 = vmatprep.subr.mxu0 0.0
    %2127 = vmatpush1.xpose.msra.mxu0 0.0
    %2128 = vmatprep.subr.mxu0 0.0
    %2129 = vmatpush1.xpose.msra.mxu0 0.0
    %2130 = vmatprep.subr.mxu0 0.0
    %2131 = vmatpush1.xpose.msra.mxu0 0.0
    %2132 = vmatprep.subr.mxu0 0.0
    %2133 = vmatpush1.xpose.msra.mxu0 0.0
    %2134 = vmatprep.subr.mxu0 0.0
    %2135 = vmatpush1.xpose.msra.mxu0 0.0
    %2136 = vmatprep.subr.mxu0 0.0
    %2137 = vmatpush1.xpose.msra.mxu0 0.0
    %2138 = vmatprep.subr.mxu0 0.0
    %2139 = vmatpush1.xpose.msra.mxu0 0.0
    %2140 = vmatprep.subr.mxu0 0.0
    %2141 = vmatpush1.xpose.msra.mxu0 0.0
    %2142 = vmatprep.subr.mxu0 0.0
    %2143 = vmatpush1.xpose.msra.mxu0 0.0
    %2144 = vmatprep.subr.mxu0 0.0
    %2145 = vmatpush1.xpose.msra.mxu0 0.0
    %2146 = vmatprep.subr.mxu0 0.0
    %2147 = vmatpush1.xpose.msra.mxu0 0.0
    %2148 = vmatprep.subr.mxu0 0.0
    %2149 = vmatpush1.xpose.msra.mxu0 0.0
    %2150 = vmatprep.subr.mxu0 0.0
    %2151 = vmatpush1.xpose.msra.mxu0 0.0
    %2152 = vmatprep.subr.mxu0 0.0
    %2153 = vmatpush1.xpose.msra.mxu0 0.0
    %2154 = vmatprep.subr.mxu0 0.0
    %2155 = vmatpush1.xpose.msra.mxu0 0.0
    %2156 = vmatprep.subr.mxu0 0.0
    %2157 = vmatpush1.xpose.msra.mxu0 0.0
    %2158 = vmatprep.mubr.f32.mxu0 0.0
    %2159 = vmatmul.mubr.f32.gmra.mrb[0].mxu0 %v2090
    %v2160 = vpop.f32.mrb[0].mxu0
    %v2161 = vadd.f32 %v191, %v2160
    %v2162 = vpop.f32.mrb[0].mxu0
    %2163 = vdwg.mxu0
    %v2164 = vsel %vm349, %v2084, -inf
    %2165 = vmax.xlane.f32.xlu0 %v2164
    %v2166 = vpop.xlane.xlu0 %2165
    %v2167 = vsel %vm349, %v2161, -inf
    %2168 = vmax.xlane.f32.xlu0 %v2167
    %v2169 = vpop.xlane.xlu0 %2168
    %v2170 = vsub.f32 %v2084, %v2166
    %v2171 = vsub.f32 %v2161, %v2169
    %v2172 = vmul.f32 %v2170, 1.442695
    %v2173 = vpow.pop %v2172
    %v2174 = vmul.f32 %v2171, 1.442695
    %v2175 = vpow.pop %v2174
    %v2176 = vsel %vm349, %v2173, 0.0
    %2177 = vadd.xlane.f32.xlu0 %v2176
    %v2178 = vpop.xlane.xlu0 %2177
    %v2179 = vsel %vm349, %v2175, 0.0
    %2180 = vadd.xlane.f32.xlu0 %v2179
    %v2181 = vpop.xlane.xlu0 %2180
    %v2182 = vrcp.pop %v2178
    %v2183 = vrcp.pop %v2181
    %v2184 = vmul.f32 %v2173, %v2182
    %v2185 = vmul.f32 %v2175, %v2183
    %v2187 = vsel %vm349, %v2184, 0
    %2189 = vmatprep.subr.mxu0 0.0
    %2190 = vmatpush1.msra.mxu0 %v2004
    %2191 = vmatprep.subr.mxu0 0.0
    %2192 = vmatpush1.msra.mxu0 0.0
    %2193 = vmatprep.subr.mxu0 0.0
    %2194 = vmatpush1.msra.mxu0 0.0
    %2195 = vmatprep.subr.mxu0 0.0
    %2196 = vmatpush1.msra.mxu0 0.0
    %2197 = vmatprep.subr.mxu0 0.0
    %2198 = vmatpush1.msra.mxu0 0.0
    %2199 = vmatprep.subr.mxu0 0.0
    %2200 = vmatpush1.msra.mxu0 0.0
    %2201 = vmatprep.subr.mxu0 0.0
    %2202 = vmatpush1.msra.mxu0 0.0
    %2203 = vmatprep.subr.mxu0 0.0
    %2204 = vmatpush1.msra.mxu0 0.0
    %2205 = vmatprep.subr.mxu0 0.0
    %2206 = vmatpush1.msra.mxu0 0.0
    %2207 = vmatprep.subr.mxu0 0.0
    %2208 = vmatpush1.msra.mxu0 0.0
    %2209 = vmatprep.subr.mxu0 0.0
    %2210 = vmatpush1.msra.mxu0 0.0
    %2211 = vmatprep.subr.mxu0 0.0
    %2212 = vmatpush1.msra.mxu0 0.0
    %2213 = vmatprep.subr.mxu0 0.0
    %2214 = vmatpush1.msra.mxu0 0.0
    %2215 = vmatprep.subr.mxu0 0.0
    %2216 = vmatpush1.msra.mxu0 0.0
    %2217 = vmatprep.subr.mxu0 0.0
    %2218 = vmatpush1.msra.mxu0 0.0
    %2219 = vmatprep.subr.mxu0 0.0
    %2220 = vmatpush1.msra.mxu0 0.0
    %2221 = vmatprep.subr.mxu0 0.0
    %2222 = vmatpush1.msra.mxu0 0.0
    %2223 = vmatprep.subr.mxu0 0.0
    %2224 = vmatpush1.msra.mxu0 0.0
    %2225 = vmatprep.subr.mxu0 0.0
    %2226 = vmatpush1.msra.mxu0 0.0
    %2227 = vmatprep.subr.mxu0 0.0
    %2228 = vmatpush1.msra.mxu0 0.0
    %2229 = vmatprep.subr.mxu0 0.0
    %2230 = vmatpush1.msra.mxu0 0.0
    %2231 = vmatprep.subr.mxu0 0.0
    %2232 = vmatpush1.msra.mxu0 0.0
    %2233 = vmatprep.subr.mxu0 0.0
    %2234 = vmatpush1.msra.mxu0 0.0
    %2235 = vmatprep.subr.mxu0 0.0
    %2236 = vmatpush1.msra.mxu0 0.0
    %2237 = vmatprep.subr.mxu0 0.0
    %2238 = vmatpush1.msra.mxu0 0.0
    %2239 = vmatprep.subr.mxu0 0.0
    %2240 = vmatpush1.msra.mxu0 0.0
    %2241 = vmatprep.subr.mxu0 0.0
    %2242 = vmatpush1.msra.mxu0 0.0
    %2243 = vmatprep.subr.mxu0 0.0
    %2244 = vmatpush1.msra.mxu0 0.0
    %2245 = vmatprep.subr.mxu0 0.0
    %2246 = vmatpush1.msra.mxu0 0.0
    %2247 = vmatprep.subr.mxu0 0.0
    %2248 = vmatpush1.msra.mxu0 0.0
    %2249 = vmatprep.subr.mxu0 0.0
    %2250 = vmatpush1.msra.mxu0 0.0
    %2251 = vmatprep.subr.mxu0 0.0
    %2252 = vmatpush1.msra.mxu0 0.0
    %2253 = vmatprep.mubr.f32.mxu0 0.0
    %2254 = vmatmul.mubr.f32.gmra.mrb[0].mxu0 %v2187
    %v2255 = vpop.f32.mrb[0].mxu0
    %v2256 = vadd.f32 0.0, %v2255
    %v2257 = vpop.f32.mrb[0].mxu0
    %2258 = vdwg.mxu0
    %v2260 = vsel %vm349, %v2185, 0
    %2262 = vmatprep.subr.mxu0 0.0
    %2263 = vmatpush1.msra.mxu0 %v2008
    %2264 = vmatprep.subr.mxu0 0.0
    %2265 = vmatpush1.msra.mxu0 0.0
    %2266 = vmatprep.subr.mxu0 0.0
    %2267 = vmatpush1.msra.mxu0 0.0
    %2268 = vmatprep.subr.mxu0 0.0
    %2269 = vmatpush1.msra.mxu0 0.0
    %2270 = vmatprep.subr.mxu0 0.0
    %2271 = vmatpush1.msra.mxu0 0.0
    %2272 = vmatprep.subr.mxu0 0.0
    %2273 = vmatpush1.msra.mxu0 0.0
    %2274 = vmatprep.subr.mxu0 0.0
    %2275 = vmatpush1.msra.mxu0 0.0
    %2276 = vmatprep.subr.mxu0 0.0
    %2277 = vmatpush1.msra.mxu0 0.0
    %2278 = vmatprep.subr.mxu0 0.0
    %2279 = vmatpush1.msra.mxu0 0.0
    %2280 = vmatprep.subr.mxu0 0.0
    %2281 = vmatpush1.msra.mxu0 0.0
    %2282 = vmatprep.subr.mxu0 0.0
    %2283 = vmatpush1.msra.mxu0 0.0
    %2284 = vmatprep.subr.mxu0 0.0
    %2285 = vmatpush1.msra.mxu0 0.0
    %2286 = vmatprep.subr.mxu0 0.0
    %2287 = vmatpush1.msra.mxu0 0.0
    %2288 = vmatprep.subr.mxu0 0.0
    %2289 = vmatpush1.msra.mxu0 0.0
    %2290 = vmatprep.subr.mxu0 0.0
    %2291 = vmatpush1.msra.mxu0 0.0
    %2292 = vmatprep.subr.mxu0 0.0
    %2293 = vmatpush1.msra.mxu0 0.0
    %2294 = vmatprep.subr.mxu0 0.0
    %2295 = vmatpush1.msra.mxu0 0.0
    %2296 = vmatprep.subr.mxu0 0.0
    %2297 = vmatpush1.msra.mxu0 0.0
    %2298 = vmatprep.subr.mxu0 0.0
    %2299 = vmatpush1.msra.mxu0 0.0
    %2300 = vmatprep.subr.mxu0 0.0
    %2301 = vmatpush1.msra.mxu0 0.0
    %2302 = vmatprep.subr.mxu0 0.0
    %2303 = vmatpush1.msra.mxu0 0.0
    %2304 = vmatprep.subr.mxu0 0.0
    %2305 = vmatpush1.msra.mxu0 0.0
    %2306 = vmatprep.subr.mxu0 0.0
    %2307 = vmatpush1.msra.mxu0 0.0
    %2308 = vmatprep.subr.mxu0 0.0
    %2309 = vmatpush1.msra.mxu0 0.0
    %2310 = vmatprep.subr.mxu0 0.0
    %2311 = vmatpush1.msra.mxu0 0.0
    %2312 = vmatprep.subr.mxu0 0.0
    %2313 = vmatpush1.msra.mxu0 0.0
    %2314 = vmatprep.subr.mxu0 0.0
    %2315 = vmatpush1.msra.mxu0 0.0
    %2316 = vmatprep.subr.mxu0 0.0
    %2317 = vmatpush1.msra.mxu0 0.0
    %2318 = vmatprep.subr.mxu0 0.0
    %2319 = vmatpush1.msra.mxu0 0.0
    %2320 = vmatprep.subr.mxu0 0.0
    %2321 = vmatpush1.msra.mxu0 0.0
    %2322 = vmatprep.subr.mxu0 0.0
    %2323 = vmatpush1.msra.mxu0 0.0
    %2324 = vmatprep.subr.mxu0 0.0
    %2325 = vmatpush1.msra.mxu0 0.0
    %2326 = vmatprep.mubr.f32.mxu0 0.0
    %2327 = vmatmul.mubr.f32.gmra.mrb[0].mxu0 %v2260
    %v2328 = vpop.f32.mrb[0].mxu0
    %v2329 = vadd.f32 0.0, %v2328
    %v2330 = vpop.f32.mrb[0].mxu0
    %2331 = vdwg.mxu0
    %v2332 = vpack.c.bf16 %v2329, %v2256
    %2333 = vst.msk [vmem:[#allocation2] sm:$0xff] %vm197, %v2332
    %2334 = vrot.lane.b32.xlu0 %v2002, 112
    %v2335 = vpop.permute.xlu0 %2334
    %2336 = vrot.lane.b32.xlu0 %v2002, 48
    %v2337 = vpop.permute.xlu0 %2336
    %v2338 = vsel %vm197, %v2335, 0
    %v2340 = vsel %vm197, %v2337, 0
    %2342 = vmatprep.subr.mxu0 0.0
    %2343 = vmatpush1.xpose.msra.mxu0 %v2340
    %2344 = vmatprep.subr.mxu0 0.0
    %2345 = vmatpush1.xpose.msra.mxu0 0.0
    %2346 = vmatprep.subr.mxu0 0.0
    %2347 = vmatpush1.xpose.msra.mxu0 0.0
    %2348 = vmatprep.subr.mxu0 0.0
    %2349 = vmatpush1.xpose.msra.mxu0 0.0
    %2350 = vmatprep.subr.mxu0 0.0
    %2351 = vmatpush1.xpose.msra.mxu0 0.0
    %2352 = vmatprep.subr.mxu0 0.0
    %2353 = vmatpush1.xpose.msra.mxu0 0.0
    %2354 = vmatprep.subr.mxu0 0.0
    %2355 = vmatpush1.xpose.msra.mxu0 0.0
    %2356 = vmatprep.subr.mxu0 0.0
    %2357 = vmatpush1.xpose.msra.mxu0 0.0
    %2358 = vmatprep.subr.mxu0 0.0
    %2359 = vmatpush1.xpose.msra.mxu0 0.0
    %2360 = vmatprep.subr.mxu0 0.0
    %2361 = vmatpush1.xpose.msra.mxu0 0.0
    %2362 = vmatprep.subr.mxu0 0.0
    %2363 = vmatpush1.xpose.msra.mxu0 0.0
    %2364 = vmatprep.subr.mxu0 0.0
    %2365 = vmatpush1.xpose.msra.mxu0 0.0
    %2366 = vmatprep.subr.mxu0 0.0
    %2367 = vmatpush1.xpose.msra.mxu0 0.0
    %2368 = vmatprep.subr.mxu0 0.0
    %2369 = vmatpush1.xpose.msra.mxu0 0.0
    %2370 = vmatprep.subr.mxu0 0.0
    %2371 = vmatpush1.xpose.msra.mxu0 0.0
    %2372 = vmatprep.subr.mxu0 0.0
    %2373 = vmatpush1.xpose.msra.mxu0 0.0
    %2374 = vmatprep.subr.mxu0 0.0
    %2375 = vmatpush1.xpose.msra.mxu0 0.0
    %2376 = vmatprep.subr.mxu0 0.0
    %2377 = vmatpush1.xpose.msra.mxu0 0.0
    %2378 = vmatprep.subr.mxu0 0.0
    %2379 = vmatpush1.xpose.msra.mxu0 0.0
    %2380 = vmatprep.subr.mxu0 0.0
    %2381 = vmatpush1.xpose.msra.mxu0 0.0
    %2382 = vmatprep.subr.mxu0 0.0
    %2383 = vmatpush1.xpose.msra.mxu0 0.0
    %2384 = vmatprep.subr.mxu0 0.0
    %2385 = vmatpush1.xpose.msra.mxu0 0.0
    %2386 = vmatprep.subr.mxu0 0.0
    %2387 = vmatpush1.xpose.msra.mxu0 0.0
    %2388 = vmatprep.subr.mxu0 0.0
    %2389 = vmatpush1.xpose.msra.mxu0 0.0
    %2390 = vmatprep.subr.mxu0 0.0
    %2391 = vmatpush1.xpose.msra.mxu0 0.0
    %2392 = vmatprep.subr.mxu0 0.0
    %2393 = vmatpush1.xpose.msra.mxu0 0.0
    %2394 = vmatprep.subr.mxu0 0.0
    %2395 = vmatpush1.xpose.msra.mxu0 0.0
    %2396 = vmatprep.subr.mxu0 0.0
    %2397 = vmatpush1.xpose.msra.mxu0 0.0
    %2398 = vmatprep.subr.mxu0 0.0
    %2399 = vmatpush1.xpose.msra.mxu0 0.0
    %2400 = vmatprep.subr.mxu0 0.0
    %2401 = vmatpush1.xpose.msra.mxu0 0.0
    %2402 = vmatprep.subr.mxu0 0.0
    %2403 = vmatpush1.xpose.msra.mxu0 0.0
    %2404 = vmatprep.subr.mxu0 0.0
    %2405 = vmatpush1.xpose.msra.mxu0 0.0
    %2406 = vmatprep.mubr.f32.mxu0 0.0
    %2407 = vmatmul.mubr.f32.gmra.mrb[0].mxu0 %v2338
    %v2408 = vpop.f32.mrb[0].mxu0
    %v2409 = vadd.f32 %v187, %v2408
    %v2410 = vpop.f32.mrb[0].mxu0
    %2411 = vdwg.mxu0
    %2412 = vrot.lane.b32.xlu0 %v2006, 112
    %v2413 = vpop.permute.xlu0 %2412
    %2414 = vrot.lane.b32.xlu0 %v2006, 48
    %v2415 = vpop.permute.xlu0 %2414
    %v2416 = vsel %vm197, %v2413, 0
    %v2418 = vsel %vm197, %v2415, 0
    %2420 = vmatprep.subr.mxu0 0.0
    %2421 = vmatpush1.xpose.msra.mxu0 %v2418
    %2422 = vmatprep.subr.mxu0 0.0
    %2423 = vmatpush1.xpose.msra.mxu0 0.0
    %2424 = vmatprep.subr.mxu0 0.0
    %2425 = vmatpush1.xpose.msra.mxu0 0.0
    %2426 = vmatprep.subr.mxu0 0.0
    %2427 = vmatpush1.xpose.msra.mxu0 0.0
    %2428 = vmatprep.subr.mxu0 0.0
    %2429 = vmatpush1.xpose.msra.mxu0 0.0
    %2430 = vmatprep.subr.mxu0 0.0
    %2431 = vmatpush1.xpose.msra.mxu0 0.0
    %2432 = vmatprep.subr.mxu0 0.0
    %2433 = vmatpush1.xpose.msra.mxu0 0.0
    %2434 = vmatprep.subr.mxu0 0.0
    %2435 = vmatpush1.xpose.msra.mxu0 0.0
    %2436 = vmatprep.subr.mxu0 0.0
    %2437 = vmatpush1.xpose.msra.mxu0 0.0
    %2438 = vmatprep.subr.mxu0 0.0
    %2439 = vmatpush1.xpose.msra.mxu0 0.0
    %2440 = vmatprep.subr.mxu0 0.0
    %2441 = vmatpush1.xpose.msra.mxu0 0.0
    %2442 = vmatprep.subr.mxu0 0.0
    %2443 = vmatpush1.xpose.msra.mxu0 0.0
    %2444 = vmatprep.subr.mxu0 0.0
    %2445 = vmatpush1.xpose.msra.mxu0 0.0
    %2446 = vmatprep.subr.mxu0 0.0
    %2447 = vmatpush1.xpose.msra.mxu0 0.0
    %2448 = vmatprep.subr.mxu0 0.0
    %2449 = vmatpush1.xpose.msra.mxu0 0.0
    %2450 = vmatprep.subr.mxu0 0.0
    %2451 = vmatpush1.xpose.msra.mxu0 0.0
    %2452 = vmatprep.subr.mxu0 0.0
    %2453 = vmatpush1.xpose.msra.mxu0 0.0
    %2454 = vmatprep.subr.mxu0 0.0
    %2455 = vmatpush1.xpose.msra.mxu0 0.0
    %2456 = vmatprep.subr.mxu0 0.0
    %2457 = vmatpush1.xpose.msra.mxu0 0.0
    %2458 = vmatprep.subr.mxu0 0.0
    %2459 = vmatpush1.xpose.msra.mxu0 0.0
    %2460 = vmatprep.subr.mxu0 0.0
    %2461 = vmatpush1.xpose.msra.mxu0 0.0
    %2462 = vmatprep.subr.mxu0 0.0
    %2463 = vmatpush1.xpose.msra.mxu0 0.0
    %2464 = vmatprep.subr.mxu0 0.0
    %2465 = vmatpush1.xpose.msra.mxu0 0.0
    %2466 = vmatprep.subr.mxu0 0.0
    %2467 = vmatpush1.xpose.msra.mxu0 0.0
    %2468 = vmatprep.subr.mxu0 0.0
    %2469 = vmatpush1.xpose.msra.mxu0 0.0
    %2470 = vmatprep.subr.mxu0 0.0
    %2471 = vmatpush1.xpose.msra.mxu0 0.0
    %2472 = vmatprep.subr.mxu0 0.0
    %2473 = vmatpush1.xpose.msra.mxu0 0.0
    %2474 = vmatprep.subr.mxu0 0.0
    %2475 = vmatpush1.xpose.msra.mxu0 0.0
    %2476 = vmatprep.subr.mxu0 0.0
    %2477 = vmatpush1.xpose.msra.mxu0 0.0
    %2478 = vmatprep.subr.mxu0 0.0
    %2479 = vmatpush1.xpose.msra.mxu0 0.0
    %2480 = vmatprep.subr.mxu0 0.0
    %2481 = vmatpush1.xpose.msra.mxu0 0.0
    %2482 = vmatprep.subr.mxu0 0.0
    %2483 = vmatpush1.xpose.msra.mxu0 0.0
    %2484 = vmatprep.mubr.f32.mxu0 0.0
    %2485 = vmatmul.mubr.f32.gmra.mrb[0].mxu0 %v2416
    %v2486 = vpop.f32.mrb[0].mxu0
    %v2487 = vadd.f32 %v191, %v2486
    %v2488 = vpop.f32.mrb[0].mxu0
    %2489 = vdwg.mxu0
    %v2490 = vsel %vm349, %v2409, -inf
    %2491 = vmax.xlane.f32.xlu0 %v2490
    %v2492 = vpop.xlane.xlu0 %2491
    %v2493 = vsel %vm349, %v2487, -inf
    %2494 = vmax.xlane.f32.xlu0 %v2493
    %v2495 = vpop.xlane.xlu0 %2494
    %v2496 = vsub.f32 %v2409, %v2492
    %v2497 = vsub.f32 %v2487, %v2495
    %v2498 = vmul.f32 %v2496, 1.442695
    %v2499 = vpow.pop %v2498
    %v2500 = vmul.f32 %v2497, 1.442695
    %v2501 = vpow.pop %v2500
    %v2502 = vsel %vm349, %v2499, 0.0
    %2503 = vadd.xlane.f32.xlu0 %v2502
    %v2504 = vpop.xlane.xlu0 %2503
    %v2505 = vsel %vm349, %v2501, 0.0
    %2506 = vadd.xlane.f32.xlu0 %v2505
    %v2507 = vpop.xlane.xlu0 %2506
    %v2508 = vrcp.pop %v2504
    %v2509 = vrcp.pop %v2507
    %v2510 = vmul.f32 %v2499, %v2508
    %v2511 = vmul.f32 %v2501, %v2509
    %2513 = vrot.lane.b32.xlu0 %v2004, 112
    %v2514 = vpop.permute.xlu0 %2513
    %v2517 = vsel %vm349, %v2510, 0
    %2519 = vmatprep.subr.mxu0 0.0
    %2520 = vmatpush1.msra.mxu0 %v2514
    %2521 = vmatprep.subr.mxu0 0.0
    %2522 = vmatpush1.msra.mxu0 0.0
    %2523 = vmatprep.subr.mxu0 0.0
    %2524 = vmatpush1.msra.mxu0 0.0
    %2525 = vmatprep.subr.mxu0 0.0
    %2526 = vmatpush1.msra.mxu0 0.0
    %2527 = vmatprep.subr.mxu0 0.0
    %2528 = vmatpush1.msra.mxu0 0.0
    %2529 = vmatprep.subr.mxu0 0.0
    %2530 = vmatpush1.msra.mxu0 0.0
    %2531 = vmatprep.subr.mxu0 0.0
    %2532 = vmatpush1.msra.mxu0 0.0
    %2533 = vmatprep.subr.mxu0 0.0
    %2534 = vmatpush1.msra.mxu0 0.0
    %2535 = vmatprep.subr.mxu0 0.0
    %2536 = vmatpush1.msra.mxu0 0.0
    %2537 = vmatprep.subr.mxu0 0.0
    %2538 = vmatpush1.msra.mxu0 0.0
    %2539 = vmatprep.subr.mxu0 0.0
    %2540 = vmatpush1.msra.mxu0 0.0
    %2541 = vmatprep.subr.mxu0 0.0
    %2542 = vmatpush1.msra.mxu0 0.0
    %2543 = vmatprep.subr.mxu0 0.0
    %2544 = vmatpush1.msra.mxu0 0.0
    %2545 = vmatprep.subr.mxu0 0.0
    %2546 = vmatpush1.msra.mxu0 0.0
    %2547 = vmatprep.subr.mxu0 0.0
    %2548 = vmatpush1.msra.mxu0 0.0
    %2549 = vmatprep.subr.mxu0 0.0
    %2550 = vmatpush1.msra.mxu0 0.0
    %2551 = vmatprep.subr.mxu0 0.0
    %2552 = vmatpush1.msra.mxu0 0.0
    %2553 = vmatprep.subr.mxu0 0.0
    %2554 = vmatpush1.msra.mxu0 0.0
    %2555 = vmatprep.subr.mxu0 0.0
    %2556 = vmatpush1.msra.mxu0 0.0
    %2557 = vmatprep.subr.mxu0 0.0
    %2558 = vmatpush1.msra.mxu0 0.0
    %2559 = vmatprep.subr.mxu0 0.0
    %2560 = vmatpush1.msra.mxu0 0.0
    %2561 = vmatprep.subr.mxu0 0.0
    %2562 = vmatpush1.msra.mxu0 0.0
    %2563 = vmatprep.subr.mxu0 0.0
    %2564 = vmatpush1.msra.mxu0 0.0
    %2565 = vmatprep.subr.mxu0 0.0
    %2566 = vmatpush1.msra.mxu0 0.0
    %2567 = vmatprep.subr.mxu0 0.0
    %2568 = vmatpush1.msra.mxu0 0.0
    %2569 = vmatprep.subr.mxu0 0.0
    %2570 = vmatpush1.msra.mxu0 0.0
    %2571 = vmatprep.subr.mxu0 0.0
    %2572 = vmatpush1.msra.mxu0 0.0
    %2573 = vmatprep.subr.mxu0 0.0
    %2574 = vmatpush1.msra.mxu0 0.0
    %2575 = vmatprep.subr.mxu0 0.0
    %2576 = vmatpush1.msra.mxu0 0.0
    %2577 = vmatprep.subr.mxu0 0.0
    %2578 = vmatpush1.msra.mxu0 0.0
    %2579 = vmatprep.subr.mxu0 0.0
    %2580 = vmatpush1.msra.mxu0 0.0
    %2581 = vmatprep.subr.mxu0 0.0
    %2582 = vmatpush1.msra.mxu0 0.0
    %2583 = vmatprep.mubr.f32.mxu0 0.0
    %2584 = vmatmul.mubr.f32.gmra.mrb[0].mxu0 %v2517
    %v2585 = vpop.f32.mrb[0].mxu0
    %v2586 = vadd.f32 0.0, %v2585
    %v2587 = vpop.f32.mrb[0].mxu0
    %2588 = vdwg.mxu0
    %2590 = vrot.lane.b32.xlu0 %v2008, 112
    %v2591 = vpop.permute.xlu0 %2590
    %v2594 = vsel %vm349, %v2511, 0
    %2596 = vmatprep.subr.mxu0 0.0
    %2597 = vmatpush1.msra.mxu0 %v2591
    %2598 = vmatprep.subr.mxu0 0.0
    %2599 = vmatpush1.msra.mxu0 0.0
    %2600 = vmatprep.subr.mxu0 0.0
    %2601 = vmatpush1.msra.mxu0 0.0
    %2602 = vmatprep.subr.mxu0 0.0
    %2603 = vmatpush1.msra.mxu0 0.0
    %2604 = vmatprep.subr.mxu0 0.0
    %2605 = vmatpush1.msra.mxu0 0.0
    %2606 = vmatprep.subr.mxu0 0.0
    %2607 = vmatpush1.msra.mxu0 0.0
    %2608 = vmatprep.subr.mxu0 0.0
    %2609 = vmatpush1.msra.mxu0 0.0
    %2610 = vmatprep.subr.mxu0 0.0
    %2611 = vmatpush1.msra.mxu0 0.0
    %2612 = vmatprep.subr.mxu0 0.0
    %2613 = vmatpush1.msra.mxu0 0.0
    %2614 = vmatprep.subr.mxu0 0.0
    %2615 = vmatpush1.msra.mxu0 0.0
    %2616 = vmatprep.subr.mxu0 0.0
    %2617 = vmatpush1.msra.mxu0 0.0
    %2618 = vmatprep.subr.mxu0 0.0
    %2619 = vmatpush1.msra.mxu0 0.0
    %2620 = vmatprep.subr.mxu0 0.0
    %2621 = vmatpush1.msra.mxu0 0.0
    %2622 = vmatprep.subr.mxu0 0.0
    %2623 = vmatpush1.msra.mxu0 0.0
    %2624 = vmatprep.subr.mxu0 0.0
    %2625 = vmatpush1.msra.mxu0 0.0
    %2626 = vmatprep.subr.mxu0 0.0
    %2627 = vmatpush1.msra.mxu0 0.0
    %2628 = vmatprep.subr.mxu0 0.0
    %2629 = vmatpush1.msra.mxu0 0.0
    %2630 = vmatprep.subr.mxu0 0.0
    %2631 = vmatpush1.msra.mxu0 0.0
    %2632 = vmatprep.subr.mxu0 0.0
    %2633 = vmatpush1.msra.mxu0 0.0
    %2634 = vmatprep.subr.mxu0 0.0
    %2635 = vmatpush1.msra.mxu0 0.0
    %2636 = vmatprep.subr.mxu0 0.0
    %2637 = vmatpush1.msra.mxu0 0.0
    %2638 = vmatprep.subr.mxu0 0.0
    %2639 = vmatpush1.msra.mxu0 0.0
    %2640 = vmatprep.subr.mxu0 0.0
    %2641 = vmatpush1.msra.mxu0 0.0
    %2642 = vmatprep.subr.mxu0 0.0
    %2643 = vmatpush1.msra.mxu0 0.0
    %2644 = vmatprep.subr.mxu0 0.0
    %2645 = vmatpush1.msra.mxu0 0.0
    %2646 = vmatprep.subr.mxu0 0.0
    %2647 = vmatpush1.msra.mxu0 0.0
    %2648 = vmatprep.subr.mxu0 0.0
    %2649 = vmatpush1.msra.mxu0 0.0
    %2650 = vmatprep.subr.mxu0 0.0
    %2651 = vmatpush1.msra.mxu0 0.0
    %2652 = vmatprep.subr.mxu0 0.0
    %2653 = vmatpush1.msra.mxu0 0.0
    %2654 = vmatprep.subr.mxu0 0.0
    %2655 = vmatpush1.msra.mxu0 0.0
    %2656 = vmatprep.subr.mxu0 0.0
    %2657 = vmatpush1.msra.mxu0 0.0
    %2658 = vmatprep.subr.mxu0 0.0
    %2659 = vmatpush1.msra.mxu0 0.0
    %2660 = vmatprep.mubr.f32.mxu0 0.0
    %2661 = vmatmul.mubr.f32.gmra.mrb[0].mxu0 %v2594
    %v2662 = vpop.f32.mrb[0].mxu0
    %v2663 = vadd.f32 0.0, %v2662
    %v2664 = vpop.f32.mrb[0].mxu0
    %2665 = vdwg.mxu0
    %v2666 = vpack.c.bf16 %v2663, %v2586
    %2668 = vrot.lane.b32.xlu0 %v2666, 16
    %v2669 = vpop.permute.xlu0 %2668
    %2671 = vst.msk [vmem:[#allocation2] sm:$0xff] %vm857, %v2669
    %2672 = vrot.lane.b32.xlu0 %v2002, 96
    %v2673 = vpop.permute.xlu0 %2672
    %2674 = vrot.lane.b32.xlu0 %v2002, 32
    %v2675 = vpop.permute.xlu0 %2674
    %v2676 = vsel %vm197, %v2673, 0
    %v2678 = vsel %vm197, %v2675, 0
    %2680 = vmatprep.subr.mxu0 0.0
    %2681 = vmatpush1.xpose.msra.mxu0 %v2678
    %2682 = vmatprep.subr.mxu0 0.0
    %2683 = vmatpush1.xpose.msra.mxu0 0.0
    %2684 = vmatprep.subr.mxu0 0.0
    %2685 = vmatpush1.xpose.msra.mxu0 0.0
    %2686 = vmatprep.subr.mxu0 0.0
    %2687 = vmatpush1.xpose.msra.mxu0 0.0
    %2688 = vmatprep.subr.mxu0 0.0
    %2689 = vmatpush1.xpose.msra.mxu0 0.0
    %2690 = vmatprep.subr.mxu0 0.0
    %2691 = vmatpush1.xpose.msra.mxu0 0.0
    %2692 = vmatprep.subr.mxu0 0.0
    %2693 = vmatpush1.xpose.msra.mxu0 0.0
    %2694 = vmatprep.subr.mxu0 0.0
    %2695 = vmatpush1.xpose.msra.mxu0 0.0
    %2696 = vmatprep.subr.mxu0 0.0
    %2697 = vmatpush1.xpose.msra.mxu0 0.0
    %2698 = vmatprep.subr.mxu0 0.0
    %2699 = vmatpush1.xpose.msra.mxu0 0.0
    %2700 = vmatprep.subr.mxu0 0.0
    %2701 = vmatpush1.xpose.msra.mxu0 0.0
    %2702 = vmatprep.subr.mxu0 0.0
    %2703 = vmatpush1.xpose.msra.mxu0 0.0
    %2704 = vmatprep.subr.mxu0 0.0
    %2705 = vmatpush1.xpose.msra.mxu0 0.0
    %2706 = vmatprep.subr.mxu0 0.0
    %2707 = vmatpush1.xpose.msra.mxu0 0.0
    %2708 = vmatprep.subr.mxu0 0.0
    %2709 = vmatpush1.xpose.msra.mxu0 0.0
    %2710 = vmatprep.subr.mxu0 0.0
    %2711 = vmatpush1.xpose.msra.mxu0 0.0
    %2712 = vmatprep.subr.mxu0 0.0
    %2713 = vmatpush1.xpose.msra.mxu0 0.0
    %2714 = vmatprep.subr.mxu0 0.0
    %2715 = vmatpush1.xpose.msra.mxu0 0.0
    %2716 = vmatprep.subr.mxu0 0.0
    %2717 = vmatpush1.xpose.msra.mxu0 0.0
    %2718 = vmatprep.subr.mxu0 0.0
    %2719 = vmatpush1.xpose.msra.mxu0 0.0
    %2720 = vmatprep.subr.mxu0 0.0
    %2721 = vmatpush1.xpose.msra.mxu0 0.0
    %2722 = vmatprep.subr.mxu0 0.0
    %2723 = vmatpush1.xpose.msra.mxu0 0.0
    %2724 = vmatprep.subr.mxu0 0.0
    %2725 = vmatpush1.xpose.msra.mxu0 0.0
    %2726 = vmatprep.subr.mxu0 0.0
    %2727 = vmatpush1.xpose.msra.mxu0 0.0
    %2728 = vmatprep.subr.mxu0 0.0
    %2729 = vmatpush1.xpose.msra.mxu0 0.0
    %2730 = vmatprep.subr.mxu0 0.0
    %2731 = vmatpush1.xpose.msra.mxu0 0.0
    %2732 = vmatprep.subr.mxu0 0.0
    %2733 = vmatpush1.xpose.msra.mxu0 0.0
    %2734 = vmatprep.subr.mxu0 0.0
    %2735 = vmatpush1.xpose.msra.mxu0 0.0
    %2736 = vmatprep.subr.mxu0 0.0
    %2737 = vmatpush1.xpose.msra.mxu0 0.0
    %2738 = vmatprep.subr.mxu0 0.0
    %2739 = vmatpush1.xpose.msra.mxu0 0.0
    %2740 = vmatprep.subr.mxu0 0.0
    %2741 = vmatpush1.xpose.msra.mxu0 0.0
    %2742 = vmatprep.subr.mxu0 0.0
    %2743 = vmatpush1.xpose.msra.mxu0 0.0
    %2744 = vmatprep.mubr.f32.mxu0 0.0
    %2745 = vmatmul.mubr.f32.gmra.mrb[0].mxu0 %v2676
    %v2746 = vpop.f32.mrb[0].mxu0
    %v2747 = vadd.f32 %v187, %v2746
    %v2748 = vpop.f32.mrb[0].mxu0
    %2749 = vdwg.mxu0
    %2750 = vrot.lane.b32.xlu0 %v2006, 96
    %v2751 = vpop.permute.xlu0 %2750
    %2752 = vrot.lane.b32.xlu0 %v2006, 32
    %v2753 = vpop.permute.xlu0 %2752
    %v2754 = vsel %vm197, %v2751, 0
    %v2756 = vsel %vm197, %v2753, 0
    %2758 = vmatprep.subr.mxu0 0.0
    %2759 = vmatpush1.xpose.msra.mxu0 %v2756
    %2760 = vmatprep.subr.mxu0 0.0
    %2761 = vmatpush1.xpose.msra.mxu0 0.0
    %2762 = vmatprep.subr.mxu0 0.0
    %2763 = vmatpush1.xpose.msra.mxu0 0.0
    %2764 = vmatprep.subr.mxu0 0.0
    %2765 = vmatpush1.xpose.msra.mxu0 0.0
    %2766 = vmatprep.subr.mxu0 0.0
    %2767 = vmatpush1.xpose.msra.mxu0 0.0
    %2768 = vmatprep.subr.mxu0 0.0
    %2769 = vmatpush1.xpose.msra.mxu0 0.0
    %2770 = vmatprep.subr.mxu0 0.0
    %2771 = vmatpush1.xpose.msra.mxu0 0.0
    %2772 = vmatprep.subr.mxu0 0.0
    %2773 = vmatpush1.xpose.msra.mxu0 0.0
    %2774 = vmatprep.subr.mxu0 0.0
    %2775 = vmatpush1.xpose.msra.mxu0 0.0
    %2776 = vmatprep.subr.mxu0 0.0
    %2777 = vmatpush1.xpose.msra.mxu0 0.0
    %2778 = vmatprep.subr.mxu0 0.0
    %2779 = vmatpush1.xpose.msra.mxu0 0.0
    %2780 = vmatprep.subr.mxu0 0.0
    %2781 = vmatpush1.xpose.msra.mxu0 0.0
    %2782 = vmatprep.subr.mxu0 0.0
    %2783 = vmatpush1.xpose.msra.mxu0 0.0
    %2784 = vmatprep.subr.mxu0 0.0
    %2785 = vmatpush1.xpose.msra.mxu0 0.0
    %2786 = vmatprep.subr.mxu0 0.0
    %2787 = vmatpush1.xpose.msra.mxu0 0.0
    %2788 = vmatprep.subr.mxu0 0.0
    %2789 = vmatpush1.xpose.msra.mxu0 0.0
    %2790 = vmatprep.subr.mxu0 0.0
    %2791 = vmatpush1.xpose.msra.mxu0 0.0
    %2792 = vmatprep.subr.mxu0 0.0
    %2793 = vmatpush1.xpose.msra.mxu0 0.0
    %2794 = vmatprep.subr.mxu0 0.0
    %2795 = vmatpush1.xpose.msra.mxu0 0.0
    %2796 = vmatprep.subr.mxu0 0.0
    %2797 = vmatpush1.xpose.msra.mxu0 0.0
    %2798 = vmatprep.subr.mxu0 0.0
    %2799 = vmatpush1.xpose.msra.mxu0 0.0
    %2800 = vmatprep.subr.mxu0 0.0
    %2801 = vmatpush1.xpose.msra.mxu0 0.0
    %2802 = vmatprep.subr.mxu0 0.0
    %2803 = vmatpush1.xpose.msra.mxu0 0.0
    %2804 = vmatprep.subr.mxu0 0.0
    %2805 = vmatpush1.xpose.msra.mxu0 0.0
    %2806 = vmatprep.subr.mxu0 0.0
    %2807 = vmatpush1.xpose.msra.mxu0 0.0
    %2808 = vmatprep.subr.mxu0 0.0
    %2809 = vmatpush1.xpose.msra.mxu0 0.0
    %2810 = vmatprep.subr.mxu0 0.0
    %2811 = vmatpush1.xpose.msra.mxu0 0.0
    %2812 = vmatprep.subr.mxu0 0.0
    %2813 = vmatpush1.xpose.msra.mxu0 0.0
    %2814 = vmatprep.subr.mxu0 0.0
    %2815 = vmatpush1.xpose.msra.mxu0 0.0
    %2816 = vmatprep.subr.mxu0 0.0
    %2817 = vmatpush1.xpose.msra.mxu0 0.0
    %2818 = vmatprep.subr.mxu0 0.0
    %2819 = vmatpush1.xpose.msra.mxu0 0.0
    %2820 = vmatprep.subr.mxu0 0.0
    %2821 = vmatpush1.xpose.msra.mxu0 0.0
    %2822 = vmatprep.mubr.f32.mxu0 0.0
    %2823 = vmatmul.mubr.f32.gmra.mrb[0].mxu0 %v2754
    %v2824 = vpop.f32.mrb[0].mxu0
    %v2825 = vadd.f32 %v191, %v2824
    %v2826 = vpop.f32.mrb[0].mxu0
    %2827 = vdwg.mxu0
    %v2828 = vsel %vm349, %v2747, -inf
    %2829 = vmax.xlane.f32.xlu0 %v2828
    %v2830 = vpop.xlane.xlu0 %2829
    %v2831 = vsel %vm349, %v2825, -inf
    %2832 = vmax.xlane.f32.xlu0 %v2831
    %v2833 = vpop.xlane.xlu0 %2832
    %v2834 = vsub.f32 %v2747, %v2830
    %v2835 = vsub.f32 %v2825, %v2833
    %v2836 = vmul.f32 %v2834, 1.442695
    %v2837 = vpow.pop %v2836
    %v2838 = vmul.f32 %v2835, 1.442695
    %v2839 = vpow.pop %v2838
    %v2840 = vsel %vm349, %v2837, 0.0
    %2841 = vadd.xlane.f32.xlu0 %v2840
    %v2842 = vpop.xlane.xlu0 %2841
    %v2843 = vsel %vm349, %v2839, 0.0
    %2844 = vadd.xlane.f32.xlu0 %v2843
    %v2845 = vpop.xlane.xlu0 %2844
    %v2846 = vrcp.pop %v2842
    %v2847 = vrcp.pop %v2845
    %v2848 = vmul.f32 %v2837, %v2846
    %v2849 = vmul.f32 %v2839, %v2847
    %2850 = vrot.lane.b32.xlu0 %v2004, 96
    %v2851 = vpop.permute.xlu0 %2850
    %v2854 = vsel %vm349, %v2848, 0
    %2856 = vmatprep.subr.mxu0 0.0
    %2857 = vmatpush1.msra.mxu0 %v2851
    %2858 = vmatprep.subr.mxu0 0.0
    %2859 = vmatpush1.msra.mxu0 0.0
    %2860 = vmatprep.subr.mxu0 0.0
    %2861 = vmatpush1.msra.mxu0 0.0
    %2862 = vmatprep.subr.mxu0 0.0
    %2863 = vmatpush1.msra.mxu0 0.0
    %2864 = vmatprep.subr.mxu0 0.0
    %2865 = vmatpush1.msra.mxu0 0.0
    %2866 = vmatprep.subr.mxu0 0.0
    %2867 = vmatpush1.msra.mxu0 0.0
    %2868 = vmatprep.subr.mxu0 0.0
    %2869 = vmatpush1.msra.mxu0 0.0
    %2870 = vmatprep.subr.mxu0 0.0
    %2871 = vmatpush1.msra.mxu0 0.0
    %2872 = vmatprep.subr.mxu0 0.0
    %2873 = vmatpush1.msra.mxu0 0.0
    %2874 = vmatprep.subr.mxu0 0.0
    %2875 = vmatpush1.msra.mxu0 0.0
    %2876 = vmatprep.subr.mxu0 0.0
    %2877 = vmatpush1.msra.mxu0 0.0
    %2878 = vmatprep.subr.mxu0 0.0
    %2879 = vmatpush1.msra.mxu0 0.0
    %2880 = vmatprep.subr.mxu0 0.0
    %2881 = vmatpush1.msra.mxu0 0.0
    %2882 = vmatprep.subr.mxu0 0.0
    %2883 = vmatpush1.msra.mxu0 0.0
    %2884 = vmatprep.subr.mxu0 0.0
    %2885 = vmatpush1.msra.mxu0 0.0
    %2886 = vmatprep.subr.mxu0 0.0
    %2887 = vmatpush1.msra.mxu0 0.0
    %2888 = vmatprep.subr.mxu0 0.0
    %2889 = vmatpush1.msra.mxu0 0.0
    %2890 = vmatprep.subr.mxu0 0.0
    %2891 = vmatpush1.msra.mxu0 0.0
    %2892 = vmatprep.subr.mxu0 0.0
    %2893 = vmatpush1.msra.mxu0 0.0
    %2894 = vmatprep.subr.mxu0 0.0
    %2895 = vmatpush1.msra.mxu0 0.0
    %2896 = vmatprep.subr.mxu0 0.0
    %2897 = vmatpush1.msra.mxu0 0.0
    %2898 = vmatprep.subr.mxu0 0.0
    %2899 = vmatpush1.msra.mxu0 0.0
    %2900 = vmatprep.subr.mxu0 0.0
    %2901 = vmatpush1.msra.mxu0 0.0
    %2902 = vmatprep.subr.mxu0 0.0
    %2903 = vmatpush1.msra.mxu0 0.0
    %2904 = vmatprep.subr.mxu0 0.0
    %2905 = vmatpush1.msra.mxu0 0.0
    %2906 = vmatprep.subr.mxu0 0.0
    %2907 = vmatpush1.msra.mxu0 0.0
    %2908 = vmatprep.subr.mxu0 0.0
    %2909 = vmatpush1.msra.mxu0 0.0
    %2910 = vmatprep.subr.mxu0 0.0
    %2911 = vmatpush1.msra.mxu0 0.0
    %2912 = vmatprep.subr.mxu0 0.0
    %2913 = vmatpush1.msra.mxu0 0.0
    %2914 = vmatprep.subr.mxu0 0.0
    %2915 = vmatpush1.msra.mxu0 0.0
    %2916 = vmatprep.subr.mxu0 0.0
    %2917 = vmatpush1.msra.mxu0 0.0
    %2918 = vmatprep.subr.mxu0 0.0
    %2919 = vmatpush1.msra.mxu0 0.0
    %2920 = vmatprep.mubr.f32.mxu0 0.0
    %2921 = vmatmul.mubr.f32.gmra.mrb[0].mxu0 %v2854
    %v2922 = vpop.f32.mrb[0].mxu0
    %v2923 = vadd.f32 0.0, %v2922
    %v2924 = vpop.f32.mrb[0].mxu0
    %2925 = vdwg.mxu0
    %2926 = vrot.lane.b32.xlu0 %v2008, 96
    %v2927 = vpop.permute.xlu0 %2926
    %v2930 = vsel %vm349, %v2849, 0
    %2932 = vmatprep.subr.mxu0 0.0
    %2933 = vmatpush1.msra.mxu0 %v2927
    %2934 = vmatprep.subr.mxu0 0.0
    %2935 = vmatpush1.msra.mxu0 0.0
    %2936 = vmatprep.subr.mxu0 0.0
    %2937 = vmatpush1.msra.mxu0 0.0
    %2938 = vmatprep.subr.mxu0 0.0
    %2939 = vmatpush1.msra.mxu0 0.0
    %2940 = vmatprep.subr.mxu0 0.0
    %2941 = vmatpush1.msra.mxu0 0.0
    %2942 = vmatprep.subr.mxu0 0.0
    %2943 = vmatpush1.msra.mxu0 0.0
    %2944 = vmatprep.subr.mxu0 0.0
    %2945 = vmatpush1.msra.mxu0 0.0
    %2946 = vmatprep.subr.mxu0 0.0
    %2947 = vmatpush1.msra.mxu0 0.0
    %2948 = vmatprep.subr.mxu0 0.0
    %2949 = vmatpush1.msra.mxu0 0.0
    %2950 = vmatprep.subr.mxu0 0.0
    %2951 = vmatpush1.msra.mxu0 0.0
    %2952 = vmatprep.subr.mxu0 0.0
    %2953 = vmatpush1.msra.mxu0 0.0
    %2954 = vmatprep.subr.mxu0 0.0
    %2955 = vmatpush1.msra.mxu0 0.0
    %2956 = vmatprep.subr.mxu0 0.0
    %2957 = vmatpush1.msra.mxu0 0.0
    %2958 = vmatprep.subr.mxu0 0.0
    %2959 = vmatpush1.msra.mxu0 0.0
    %2960 = vmatprep.subr.mxu0 0.0
    %2961 = vmatpush1.msra.mxu0 0.0
    %2962 = vmatprep.subr.mxu0 0.0
    %2963 = vmatpush1.msra.mxu0 0.0
    %2964 = vmatprep.subr.mxu0 0.0
    %2965 = vmatpush1.msra.mxu0 0.0
    %2966 = vmatprep.subr.mxu0 0.0
    %2967 = vmatpush1.msra.mxu0 0.0
    %2968 = vmatprep.subr.mxu0 0.0
    %2969 = vmatpush1.msra.mxu0 0.0
    %2970 = vmatprep.subr.mxu0 0.0
    %2971 = vmatpush1.msra.mxu0 0.0
    %2972 = vmatprep.subr.mxu0 0.0
    %2973 = vmatpush1.msra.mxu0 0.0
    %2974 = vmatprep.subr.mxu0 0.0
    %2975 = vmatpush1.msra.mxu0 0.0
    %2976 = vmatprep.subr.mxu0 0.0
    %2977 = vmatpush1.msra.mxu0 0.0
    %2978 = vmatprep.subr.mxu0 0.0
    %2979 = vmatpush1.msra.mxu0 0.0
    %2980 = vmatprep.subr.mxu0 0.0
    %2981 = vmatpush1.msra.mxu0 0.0
    %2982 = vmatprep.subr.mxu0 0.0
    %2983 = vmatpush1.msra.mxu0 0.0
    %2984 = vmatprep.subr.mxu0 0.0
    %2985 = vmatpush1.msra.mxu0 0.0
    %2986 = vmatprep.subr.mxu0 0.0
    %2987 = vmatpush1.msra.mxu0 0.0
    %2988 = vmatprep.subr.mxu0 0.0
    %2989 = vmatpush1.msra.mxu0 0.0
    %2990 = vmatprep.subr.mxu0 0.0
    %2991 = vmatpush1.msra.mxu0 0.0
    %2992 = vmatprep.subr.mxu0 0.0
    %2993 = vmatpush1.msra.mxu0 0.0
    %2994 = vmatprep.subr.mxu0 0.0
    %2995 = vmatpush1.msra.mxu0 0.0
    %2996 = vmatprep.mubr.f32.mxu0 0.0
    %2997 = vmatmul.mubr.f32.gmra.mrb[0].mxu0 %v2930
    %v2998 = vpop.f32.mrb[0].mxu0
    %v2999 = vadd.f32 0.0, %v2998
    %v3000 = vpop.f32.mrb[0].mxu0
    %3001 = vdwg.mxu0
    %v3002 = vpack.c.bf16 %v2999, %v2923
    %3004 = vrot.lane.b32.xlu0 %v3002, 32
    %v3005 = vpop.permute.xlu0 %3004
    %3007 = vst.msk [vmem:[#allocation2] sm:$0xff] %vm1194, %v3005
    %3008 = vrot.lane.b32.xlu0 %v2002, 80
    %v3009 = vpop.permute.xlu0 %3008
    %3010 = vrot.lane.b32.xlu0 %v2002, 16
    %v3011 = vpop.permute.xlu0 %3010
    %v3012 = vsel %vm197, %v3009, 0
    %v3014 = vsel %vm197, %v3011, 0
    %3016 = vmatprep.subr.mxu0 0.0
    %3017 = vmatpush1.xpose.msra.mxu0 %v3014
    %3018 = vmatprep.subr.mxu0 0.0
    %3019 = vmatpush1.xpose.msra.mxu0 0.0
    %3020 = vmatprep.subr.mxu0 0.0
    %3021 = vmatpush1.xpose.msra.mxu0 0.0
    %3022 = vmatprep.subr.mxu0 0.0
    %3023 = vmatpush1.xpose.msra.mxu0 0.0
    %3024 = vmatprep.subr.mxu0 0.0
    %3025 = vmatpush1.xpose.msra.mxu0 0.0
    %3026 = vmatprep.subr.mxu0 0.0
    %3027 = vmatpush1.xpose.msra.mxu0 0.0
    %3028 = vmatprep.subr.mxu0 0.0
    %3029 = vmatpush1.xpose.msra.mxu0 0.0
    %3030 = vmatprep.subr.mxu0 0.0
    %3031 = vmatpush1.xpose.msra.mxu0 0.0
    %3032 = vmatprep.subr.mxu0 0.0
    %3033 = vmatpush1.xpose.msra.mxu0 0.0
    %3034 = vmatprep.subr.mxu0 0.0
    %3035 = vmatpush1.xpose.msra.mxu0 0.0
    %3036 = vmatprep.subr.mxu0 0.0
    %3037 = vmatpush1.xpose.msra.mxu0 0.0
    %3038 = vmatprep.subr.mxu0 0.0
    %3039 = vmatpush1.xpose.msra.mxu0 0.0
    %3040 = vmatprep.subr.mxu0 0.0
    %3041 = vmatpush1.xpose.msra.mxu0 0.0
    %3042 = vmatprep.subr.mxu0 0.0
    %3043 = vmatpush1.xpose.msra.mxu0 0.0
    %3044 = vmatprep.subr.mxu0 0.0
    %3045 = vmatpush1.xpose.msra.mxu0 0.0
    %3046 = vmatprep.subr.mxu0 0.0
    %3047 = vmatpush1.xpose.msra.mxu0 0.0
    %3048 = vmatprep.subr.mxu0 0.0
    %3049 = vmatpush1.xpose.msra.mxu0 0.0
    %3050 = vmatprep.subr.mxu0 0.0
    %3051 = vmatpush1.xpose.msra.mxu0 0.0
    %3052 = vmatprep.subr.mxu0 0.0
    %3053 = vmatpush1.xpose.msra.mxu0 0.0
    %3054 = vmatprep.subr.mxu0 0.0
    %3055 = vmatpush1.xpose.msra.mxu0 0.0
    %3056 = vmatprep.subr.mxu0 0.0
    %3057 = vmatpush1.xpose.msra.mxu0 0.0
    %3058 = vmatprep.subr.mxu0 0.0
    %3059 = vmatpush1.xpose.msra.mxu0 0.0
    %3060 = vmatprep.subr.mxu0 0.0
    %3061 = vmatpush1.xpose.msra.mxu0 0.0
    %3062 = vmatprep.subr.mxu0 0.0
    %3063 = vmatpush1.xpose.msra.mxu0 0.0
    %3064 = vmatprep.subr.mxu0 0.0
    %3065 = vmatpush1.xpose.msra.mxu0 0.0
    %3066 = vmatprep.subr.mxu0 0.0
    %3067 = vmatpush1.xpose.msra.mxu0 0.0
    %3068 = vmatprep.subr.mxu0 0.0
    %3069 = vmatpush1.xpose.msra.mxu0 0.0
    %3070 = vmatprep.subr.mxu0 0.0
    %3071 = vmatpush1.xpose.msra.mxu0 0.0
    %3072 = vmatprep.subr.mxu0 0.0
    %3073 = vmatpush1.xpose.msra.mxu0 0.0
    %3074 = vmatprep.subr.mxu0 0.0
    %3075 = vmatpush1.xpose.msra.mxu0 0.0
    %3076 = vmatprep.subr.mxu0 0.0
    %3077 = vmatpush1.xpose.msra.mxu0 0.0
    %3078 = vmatprep.subr.mxu0 0.0
    %3079 = vmatpush1.xpose.msra.mxu0 0.0
    %3080 = vmatprep.mubr.f32.mxu0 0.0
    %3081 = vmatmul.mubr.f32.gmra.mrb[0].mxu0 %v3012
    %v3082 = vpop.f32.mrb[0].mxu0
    %v3083 = vadd.f32 %v187, %v3082
    %v3084 = vpop.f32.mrb[0].mxu0
    %3085 = vdwg.mxu0
    %3086 = vrot.lane.b32.xlu0 %v2006, 80
    %v3087 = vpop.permute.xlu0 %3086
    %3088 = vrot.lane.b32.xlu0 %v2006, 16
    %v3089 = vpop.permute.xlu0 %3088
    %v3090 = vsel %vm197, %v3087, 0
    %v3092 = vsel %vm197, %v3089, 0
    %3094 = vmatprep.subr.mxu0 0.0
    %3095 = vmatpush1.xpose.msra.mxu0 %v3092
    %3096 = vmatprep.subr.mxu0 0.0
    %3097 = vmatpush1.xpose.msra.mxu0 0.0
    %3098 = vmatprep.subr.mxu0 0.0
    %3099 = vmatpush1.xpose.msra.mxu0 0.0
    %3100 = vmatprep.subr.mxu0 0.0
    %3101 = vmatpush1.xpose.msra.mxu0 0.0
    %3102 = vmatprep.subr.mxu0 0.0
    %3103 = vmatpush1.xpose.msra.mxu0 0.0
    %3104 = vmatprep.subr.mxu0 0.0
    %3105 = vmatpush1.xpose.msra.mxu0 0.0
    %3106 = vmatprep.subr.mxu0 0.0
    %3107 = vmatpush1.xpose.msra.mxu0 0.0
    %3108 = vmatprep.subr.mxu0 0.0
    %3109 = vmatpush1.xpose.msra.mxu0 0.0
    %3110 = vmatprep.subr.mxu0 0.0
    %3111 = vmatpush1.xpose.msra.mxu0 0.0
    %3112 = vmatprep.subr.mxu0 0.0
    %3113 = vmatpush1.xpose.msra.mxu0 0.0
    %3114 = vmatprep.subr.mxu0 0.0
    %3115 = vmatpush1.xpose.msra.mxu0 0.0
    %3116 = vmatprep.subr.mxu0 0.0
    %3117 = vmatpush1.xpose.msra.mxu0 0.0
    %3118 = vmatprep.subr.mxu0 0.0
    %3119 = vmatpush1.xpose.msra.mxu0 0.0
    %3120 = vmatprep.subr.mxu0 0.0
    %3121 = vmatpush1.xpose.msra.mxu0 0.0
    %3122 = vmatprep.subr.mxu0 0.0
    %3123 = vmatpush1.xpose.msra.mxu0 0.0
    %3124 = vmatprep.subr.mxu0 0.0
    %3125 = vmatpush1.xpose.msra.mxu0 0.0
    %3126 = vmatprep.subr.mxu0 0.0
    %3127 = vmatpush1.xpose.msra.mxu0 0.0
    %3128 = vmatprep.subr.mxu0 0.0
    %3129 = vmatpush1.xpose.msra.mxu0 0.0
    %3130 = vmatprep.subr.mxu0 0.0
    %3131 = vmatpush1.xpose.msra.mxu0 0.0
    %3132 = vmatprep.subr.mxu0 0.0
    %3133 = vmatpush1.xpose.msra.mxu0 0.0
    %3134 = vmatprep.subr.mxu0 0.0
    %3135 = vmatpush1.xpose.msra.mxu0 0.0
    %3136 = vmatprep.subr.mxu0 0.0
    %3137 = vmatpush1.xpose.msra.mxu0 0.0
    %3138 = vmatprep.subr.mxu0 0.0
    %3139 = vmatpush1.xpose.msra.mxu0 0.0
    %3140 = vmatprep.subr.mxu0 0.0
    %3141 = vmatpush1.xpose.msra.mxu0 0.0
    %3142 = vmatprep.subr.mxu0 0.0
    %3143 = vmatpush1.xpose.msra.mxu0 0.0
    %3144 = vmatprep.subr.mxu0 0.0
    %3145 = vmatpush1.xpose.msra.mxu0 0.0
    %3146 = vmatprep.subr.mxu0 0.0
    %3147 = vmatpush1.xpose.msra.mxu0 0.0
    %3148 = vmatprep.subr.mxu0 0.0
    %3149 = vmatpush1.xpose.msra.mxu0 0.0
    %3150 = vmatprep.subr.mxu0 0.0
    %3151 = vmatpush1.xpose.msra.mxu0 0.0
    %3152 = vmatprep.subr.mxu0 0.0
    %3153 = vmatpush1.xpose.msra.mxu0 0.0
    %3154 = vmatprep.subr.mxu0 0.0
    %3155 = vmatpush1.xpose.msra.mxu0 0.0
    %3156 = vmatprep.subr.mxu0 0.0
    %3157 = vmatpush1.xpose.msra.mxu0 0.0
    %3158 = vmatprep.mubr.f32.mxu0 0.0
    %3159 = vmatmul.mubr.f32.gmra.mrb[0].mxu0 %v3090
    %v3160 = vpop.f32.mrb[0].mxu0
    %v3161 = vadd.f32 %v191, %v3160
    %v3162 = vpop.f32.mrb[0].mxu0
    %3163 = vdwg.mxu0
    %v3164 = vsel %vm349, %v3083, -inf
    %3165 = vmax.xlane.f32.xlu0 %v3164
    %v3166 = vpop.xlane.xlu0 %3165
    %v3167 = vsel %vm349, %v3161, -inf
    %3168 = vmax.xlane.f32.xlu0 %v3167
    %v3169 = vpop.xlane.xlu0 %3168
    %v3170 = vsub.f32 %v3083, %v3166
    %v3171 = vsub.f32 %v3161, %v3169
    %v3172 = vmul.f32 %v3170, 1.442695
    %v3173 = vpow.pop %v3172
    %v3174 = vmul.f32 %v3171, 1.442695
    %v3175 = vpow.pop %v3174
    %v3176 = vsel %vm349, %v3173, 0.0
    %3177 = vadd.xlane.f32.xlu0 %v3176
    %v3178 = vpop.xlane.xlu0 %3177
    %v3179 = vsel %vm349, %v3175, 0.0
    %3180 = vadd.xlane.f32.xlu0 %v3179
    %v3181 = vpop.xlane.xlu0 %3180
    %v3182 = vrcp.pop %v3178
    %v3183 = vrcp.pop %v3181
    %v3184 = vmul.f32 %v3173, %v3182
    %v3185 = vmul.f32 %v3175, %v3183
    %3186 = vrot.lane.b32.xlu0 %v2004, 80
    %v3187 = vpop.permute.xlu0 %3186
    %v3190 = vsel %vm349, %v3184, 0
    %3192 = vmatprep.subr.mxu0 0.0
    %3193 = vmatpush1.msra.mxu0 %v3187
    %3194 = vmatprep.subr.mxu0 0.0
    %3195 = vmatpush1.msra.mxu0 0.0
    %3196 = vmatprep.subr.mxu0 0.0
    %3197 = vmatpush1.msra.mxu0 0.0
    %3198 = vmatprep.subr.mxu0 0.0
    %3199 = vmatpush1.msra.mxu0 0.0
    %3200 = vmatprep.subr.mxu0 0.0
    %3201 = vmatpush1.msra.mxu0 0.0
    %3202 = vmatprep.subr.mxu0 0.0
    %3203 = vmatpush1.msra.mxu0 0.0
    %3204 = vmatprep.subr.mxu0 0.0
    %3205 = vmatpush1.msra.mxu0 0.0
    %3206 = vmatprep.subr.mxu0 0.0
    %3207 = vmatpush1.msra.mxu0 0.0
    %3208 = vmatprep.subr.mxu0 0.0
    %3209 = vmatpush1.msra.mxu0 0.0
    %3210 = vmatprep.subr.mxu0 0.0
    %3211 = vmatpush1.msra.mxu0 0.0
    %3212 = vmatprep.subr.mxu0 0.0
    %3213 = vmatpush1.msra.mxu0 0.0
    %3214 = vmatprep.subr.mxu0 0.0
    %3215 = vmatpush1.msra.mxu0 0.0
    %3216 = vmatprep.subr.mxu0 0.0
    %3217 = vmatpush1.msra.mxu0 0.0
    %3218 = vmatprep.subr.mxu0 0.0
    %3219 = vmatpush1.msra.mxu0 0.0
    %3220 = vmatprep.subr.mxu0 0.0
    %3221 = vmatpush1.msra.mxu0 0.0
    %3222 = vmatprep.subr.mxu0 0.0
    %3223 = vmatpush1.msra.mxu0 0.0
    %3224 = vmatprep.subr.mxu0 0.0
    %3225 = vmatpush1.msra.mxu0 0.0
    %3226 = vmatprep.subr.mxu0 0.0
    %3227 = vmatpush1.msra.mxu0 0.0
    %3228 = vmatprep.subr.mxu0 0.0
    %3229 = vmatpush1.msra.mxu0 0.0
    %3230 = vmatprep.subr.mxu0 0.0
    %3231 = vmatpush1.msra.mxu0 0.0
    %3232 = vmatprep.subr.mxu0 0.0
    %3233 = vmatpush1.msra.mxu0 0.0
    %3234 = vmatprep.subr.mxu0 0.0
    %3235 = vmatpush1.msra.mxu0 0.0
    %3236 = vmatprep.subr.mxu0 0.0
    %3237 = vmatpush1.msra.mxu0 0.0
    %3238 = vmatprep.subr.mxu0 0.0
    %3239 = vmatpush1.msra.mxu0 0.0
    %3240 = vmatprep.subr.mxu0 0.0
    %3241 = vmatpush1.msra.mxu0 0.0
    %3242 = vmatprep.subr.mxu0 0.0
    %3243 = vmatpush1.msra.mxu0 0.0
    %3244 = vmatprep.subr.mxu0 0.0
    %3245 = vmatpush1.msra.mxu0 0.0
    %3246 = vmatprep.subr.mxu0 0.0
    %3247 = vmatpush1.msra.mxu0 0.0
    %3248 = vmatprep.subr.mxu0 0.0
    %3249 = vmatpush1.msra.mxu0 0.0
    %3250 = vmatprep.subr.mxu0 0.0
    %3251 = vmatpush1.msra.mxu0 0.0
    %3252 = vmatprep.subr.mxu0 0.0
    %3253 = vmatpush1.msra.mxu0 0.0
    %3254 = vmatprep.subr.mxu0 0.0
    %3255 = vmatpush1.msra.mxu0 0.0
    %3256 = vmatprep.mubr.f32.mxu0 0.0
    %3257 = vmatmul.mubr.f32.gmra.mrb[0].mxu0 %v3190
    %v3258 = vpop.f32.mrb[0].mxu0
    %v3259 = vadd.f32 0.0, %v3258
    %v3260 = vpop.f32.mrb[0].mxu0
    %3261 = vdwg.mxu0
    %3262 = vrot.lane.b32.xlu0 %v2008, 80
    %v3263 = vpop.permute.xlu0 %3262
    %v3266 = vsel %vm349, %v3185, 0
    %3268 = vmatprep.subr.mxu0 0.0
    %3269 = vmatpush1.msra.mxu0 %v3263
    %3270 = vmatprep.subr.mxu0 0.0
    %3271 = vmatpush1.msra.mxu0 0.0
    %3272 = vmatprep.subr.mxu0 0.0
    %3273 = vmatpush1.msra.mxu0 0.0
    %3274 = vmatprep.subr.mxu0 0.0
    %3275 = vmatpush1.msra.mxu0 0.0
    %3276 = vmatprep.subr.mxu0 0.0
    %3277 = vmatpush1.msra.mxu0 0.0
    %3278 = vmatprep.subr.mxu0 0.0
    %3279 = vmatpush1.msra.mxu0 0.0
    %3280 = vmatprep.subr.mxu0 0.0
    %3281 = vmatpush1.msra.mxu0 0.0
    %3282 = vmatprep.subr.mxu0 0.0
    %3283 = vmatpush1.msra.mxu0 0.0
    %3284 = vmatprep.subr.mxu0 0.0
    %3285 = vmatpush1.msra.mxu0 0.0
    %3286 = vmatprep.subr.mxu0 0.0
    %3287 = vmatpush1.msra.mxu0 0.0
    %3288 = vmatprep.subr.mxu0 0.0
    %3289 = vmatpush1.msra.mxu0 0.0
    %3290 = vmatprep.subr.mxu0 0.0
    %3291 = vmatpush1.msra.mxu0 0.0
    %3292 = vmatprep.subr.mxu0 0.0
    %3293 = vmatpush1.msra.mxu0 0.0
    %3294 = vmatprep.subr.mxu0 0.0
    %3295 = vmatpush1.msra.mxu0 0.0
    %3296 = vmatprep.subr.mxu0 0.0
    %3297 = vmatpush1.msra.mxu0 0.0
    %3298 = vmatprep.subr.mxu0 0.0
    %3299 = vmatpush1.msra.mxu0 0.0
    %3300 = vmatprep.subr.mxu0 0.0
    %3301 = vmatpush1.msra.mxu0 0.0
    %3302 = vmatprep.subr.mxu0 0.0
    %3303 = vmatpush1.msra.mxu0 0.0
    %3304 = vmatprep.subr.mxu0 0.0
    %3305 = vmatpush1.msra.mxu0 0.0
    %3306 = vmatprep.subr.mxu0 0.0
    %3307 = vmatpush1.msra.mxu0 0.0
    %3308 = vmatprep.subr.mxu0 0.0
    %3309 = vmatpush1.msra.mxu0 0.0
    %3310 = vmatprep.subr.mxu0 0.0
    %3311 = vmatpush1.msra.mxu0 0.0
    %3312 = vmatprep.subr.mxu0 0.0
    %3313 = vmatpush1.msra.mxu0 0.0
    %3314 = vmatprep.subr.mxu0 0.0
    %3315 = vmatpush1.msra.mxu0 0.0
    %3316 = vmatprep.subr.mxu0 0.0
    %3317 = vmatpush1.msra.mxu0 0.0
    %3318 = vmatprep.subr.mxu0 0.0
    %3319 = vmatpush1.msra.mxu0 0.0
    %3320 = vmatprep.subr.mxu0 0.0
    %3321 = vmatpush1.msra.mxu0 0.0
    %3322 = vmatprep.subr.mxu0 0.0
    %3323 = vmatpush1.msra.mxu0 0.0
    %3324 = vmatprep.subr.mxu0 0.0
    %3325 = vmatpush1.msra.mxu0 0.0
    %3326 = vmatprep.subr.mxu0 0.0
    %3327 = vmatpush1.msra.mxu0 0.0
    %3328 = vmatprep.subr.mxu0 0.0
    %3329 = vmatpush1.msra.mxu0 0.0
    %3330 = vmatprep.subr.mxu0 0.0
    %3331 = vmatpush1.msra.mxu0 0.0
    %3332 = vmatprep.mubr.f32.mxu0 0.0
    %3333 = vmatmul.mubr.f32.gmra.mrb[0].mxu0 %v3266
    %v3334 = vpop.f32.mrb[0].mxu0
    %v3335 = vadd.f32 0.0, %v3334
    %v3336 = vpop.f32.mrb[0].mxu0
    %3337 = vdwg.mxu0
    %v3338 = vpack.c.bf16 %v3335, %v3259
    %3340 = vrot.lane.b32.xlu0 %v3338, 48
    %v3341 = vpop.permute.xlu0 %3340
    %3343 = vst.msk [vmem:[#allocation2] sm:$0xff] %vm1531, %v3341
    %v3344 = vld [vmem:[#allocation2] sm:$0xff]
    %s3345 = scalar_lea.vmem %s5, 32
    %v3346 = vld [vmem:[%s3345] sm:$0xf]
    %v3347 = vld [vmem:[%s3345 + $0x4] sm:$0xf]
    %v3348 = vld [vmem:[%s3345 + $0x8] sm:$0xf]
    %v3349 = vld [vmem:[%s3345 + $0xc] sm:$0xf]
    %v3350 = vld [vmem:[%s3345 + $0x10] sm:$0xf]
    %v3351 = vld [vmem:[%s3345 + $0x14] sm:$0xf]
    %v3352 = vld [vmem:[%s3345 + $0x18] sm:$0xf]
    %v3353 = vld [vmem:[%s3345 + $0x1c] sm:$0xf]
    %v3354 = vlaneseq
    %v3355 = vshrl.u32 %v3354, 7
    %v3356 = vsub.s32 2, %v3355
    %v3357 = vrot.slane %v1904, %v3356
    %v3366 = vunpack.c.l.b16 %v3346
    %v3367 = vunpack.c.l.b16 %v3347
    %v3368 = vunpack.c.l.b16 %v3348
    %v3369 = vunpack.c.l.b16 %v3349
    %v3370 = vunpack.c.l.b16 %v3350
    %v3371 = vunpack.c.l.b16 %v3351
    %v3372 = vunpack.c.l.b16 %v3352
    %v3373 = vunpack.c.l.b16 %v3353
    %v3374 = vpack.c.b16 %v3367, %v3366
    %v3375 = vpack.c.b16 %v3369, %v3368
    %v3376 = vpack.c.b16 %v3371, %v3370
    %v3377 = vpack.c.b16 %v3373, %v3372
    %v3383 = vsel %vm35, %v3344, 0
    %3385 = vmatprep.subr.bf16.mxu0 0
    %3386 = vmatpush1.bf16.msra.mxu0 %v3374
    %3387 = vmatprep.subr.bf16.mxu0 0
    %3388 = vmatpush1.bf16.msra.mxu0 %v3375
    %3389 = vmatprep.subr.bf16.mxu0 0
    %3390 = vmatpush1.bf16.msra.mxu0 %v3376
    %3391 = vmatprep.subr.bf16.mxu0 0
    %3392 = vmatpush1.bf16.msra.mxu0 %v3377
    %3393 = vmatprep.subr.bf16.mxu0 0
    %3394 = vmatpush1.bf16.msra.mxu0 0
    %3395 = vmatprep.subr.bf16.mxu0 0
    %3396 = vmatpush1.bf16.msra.mxu0 0
    %3397 = vmatprep.subr.bf16.mxu0 0
    %3398 = vmatpush1.bf16.msra.mxu0 0
    %3399 = vmatprep.subr.bf16.mxu0 0
    %3400 = vmatpush1.bf16.msra.mxu0 0
    %3401 = vmatprep.subr.bf16.mxu0 0
    %3402 = vmatpush1.bf16.msra.mxu0 0
    %3403 = vmatprep.subr.bf16.mxu0 0
    %3404 = vmatpush1.bf16.msra.mxu0 0
    %3405 = vmatprep.subr.bf16.mxu0 0
    %3406 = vmatpush1.bf16.msra.mxu0 0
    %3407 = vmatprep.subr.bf16.mxu0 0
    %3408 = vmatpush1.bf16.msra.mxu0 0
    %3409 = vmatprep.subr.bf16.mxu0 0
    %3410 = vmatpush1.bf16.msra.mxu0 0
    %3411 = vmatprep.subr.bf16.mxu0 0
    %3412 = vmatpush1.bf16.msra.mxu0 0
    %3413 = vmatprep.subr.bf16.mxu0 0
    %3414 = vmatpush1.bf16.msra.mxu0 0
    %3415 = vmatprep.subr.bf16.mxu0 0
    %3416 = vmatpush1.bf16.msra.mxu0 0
    %3417 = vmatprep.mubr.bf16.mxu0 0
    %3418 = vmatmul.mubr.bf16.gmra.mrb[0].mxu0 %v3383
    %v3419 = vpop.f32.mrb[0].mxu0
    %v3420 = vadd.f32 %v3357, %v3419
    %v3421 = vpop.f32.mrb[0].mxu0
    %v3422 = vpop.f32.mrb[0].mxu0
    %v3423 = vadd.f32 %v3357, %v3422
    %v3424 = vpop.f32.mrb[0].mxu0
    %3425 = vdwg.mxu0
    %v3426 = vadd.f32 %v3420, %v1901
    %v3427 = vadd.f32 %v3423, %v1902
    %v3428 = vsel %vm35, %v3426, 0.0
    %3429 = vadd.xlane.f32.xlu0 %v3428
    %v3430 = vpop.xlane.xlu0 %3429
    %v3431 = vsel %vm35, %v3427, 0.0
    %3432 = vadd.xlane.f32.xlu0 %v3431
    %v3433 = vpop.xlane.xlu0 %3432
    %v3434 = vmul.f32 %v3430, %v42
    %v3435 = vmul.f32 %v3433, %v42
    %v3436 = vsub.f32 %v3426, %v3434
    %v3437 = vsub.f32 %v3427, %v3435
    %v3438 = vmul.f32 %v3436, %v3436
    %v3439 = vmul.f32 %v3437, %v3437
    %v3440 = vsel %vm35, %v3438, 0.0
    %3441 = vadd.xlane.f32.xlu0 %v3440
    %v3442 = vpop.xlane.xlu0 %3441
    %v3443 = vsel %vm35, %v3439, 0.0
    %3444 = vadd.xlane.f32.xlu0 %v3443
    %v3445 = vpop.xlane.xlu0 %3444
    %v3446 = vmul.f32 %v3442, %v42
    %v3447 = vmul.f32 %v3445, %v42
    %v3448 = vadd.f32 %v3446, 1e-05
    %v3449 = vadd.f32 %v3447, 1e-05
    %v3450 = vrsqrt.pop %v3448
    %v3451 = vrsqrt.pop %v3449
    %v3452 = vmul.f32 %v3436, %v3450
    %v3453 = vmul.f32 %v3437, %v3451
    %v3454 = vlaneseq
    %v3455 = vshrl.u32 %v3454, 7
    %v3456 = vsub.s32 3, %v3455
    %v3457 = vrot.slane %v1904, %v3456
    %v3458 = vmul.f32 %v3452, %v3457
    %v3459 = vmul.f32 %v3453, %v3457
    %v3460 = vlaneseq
    %v3461 = vshrl.u32 %v3460, 7
    %v3462 = vsub.s32 4, %v3461
    %v3463 = vrot.slane %v1904, %v3462
    %v3464 = vadd.f32 %v3458, %v3463
    %v3465 = vadd.f32 %v3459, %v3463
    %v3466 = vpack.c.bf16 %v3465, %v3464
    %s3467 = scalar_lea.vmem %s6, 32
    %v3468 = vld [vmem:[%s3467] sm:$0xf]
    %v3469 = vld [vmem:[%s3467 + $0x4] sm:$0xf]
    %v3470 = vld [vmem:[%s3467 + $0x8] sm:$0xf]
    %v3471 = vld [vmem:[%s3467 + $0xc] sm:$0xf]
    %v3472 = vld [vmem:[%s3467 + $0x10] sm:$0xf]
    %v3473 = vld [vmem:[%s3467 + $0x14] sm:$0xf]
    %v3474 = vld [vmem:[%s3467 + $0x18] sm:$0xf]
    %v3475 = vld [vmem:[%s3467 + $0x1c] sm:$0xf]
    %v3476 = vlaneseq
    %v3477 = vshrl.u32 %v3476, 7
    %v3478 = vsub.s32 1, %v3477
    %v3479 = vrot.slane %v1904, %v3478
    %v3488 = vunpack.c.l.b16 %v3468
    %v3489 = vunpack.c.l.b16 %v3469
    %v3490 = vunpack.c.l.b16 %v3470
    %v3491 = vunpack.c.l.b16 %v3471
    %v3492 = vunpack.c.l.b16 %v3472
    %v3493 = vunpack.c.l.b16 %v3473
    %v3494 = vunpack.c.l.b16 %v3474
    %v3495 = vunpack.c.l.b16 %v3475
    %v3496 = vpack.c.b16 %v3489, %v3488
    %v3497 = vpack.c.b16 %v3491, %v3490
    %v3498 = vpack.c.b16 %v3493, %v3492
    %v3499 = vpack.c.b16 %v3495, %v3494
    %v3505 = vsel %vm35, %v3466, 0
    %3507 = vmatprep.subr.bf16.mxu0 0
    %3508 = vmatpush1.bf16.msra.mxu0 %v3496
    %3509 = vmatprep.subr.bf16.mxu0 0
    %3510 = vmatpush1.bf16.msra.mxu0 %v3497
    %3511 = vmatprep.subr.bf16.mxu0 0
    %3512 = vmatpush1.bf16.msra.mxu0 %v3498
    %3513 = vmatprep.subr.bf16.mxu0 0
    %3514 = vmatpush1.bf16.msra.mxu0 %v3499
    %3515 = vmatprep.subr.bf16.mxu0 0
    %3516 = vmatpush1.bf16.msra.mxu0 0
    %3517 = vmatprep.subr.bf16.mxu0 0
    %3518 = vmatpush1.bf16.msra.mxu0 0
    %3519 = vmatprep.subr.bf16.mxu0 0
    %3520 = vmatpush1.bf16.msra.mxu0 0
    %3521 = vmatprep.subr.bf16.mxu0 0
    %3522 = vmatpush1.bf16.msra.mxu0 0
    %3523 = vmatprep.subr.bf16.mxu0 0
    %3524 = vmatpush1.bf16.msra.mxu0 0
    %3525 = vmatprep.subr.bf16.mxu0 0
    %3526 = vmatpush1.bf16.msra.mxu0 0
    %3527 = vmatprep.subr.bf16.mxu0 0
    %3528 = vmatpush1.bf16.msra.mxu0 0
    %3529 = vmatprep.subr.bf16.mxu0 0
    %3530 = vmatpush1.bf16.msra.mxu0 0
    %3531 = vmatprep.subr.bf16.mxu0 0
    %3532 = vmatpush1.bf16.msra.mxu0 0
    %3533 = vmatprep.subr.bf16.mxu0 0
    %3534 = vmatpush1.bf16.msra.mxu0 0
    %3535 = vmatprep.subr.bf16.mxu0 0
    %3536 = vmatpush1.bf16.msra.mxu0 0
    %3537 = vmatprep.subr.bf16.mxu0 0
    %3538 = vmatpush1.bf16.msra.mxu0 0
    %3539 = vmatprep.mubr.bf16.mxu0 0
    %3540 = vmatmul.mubr.bf16.gmra.mrb[0].mxu0 %v3505
    %v3541 = vpop.f32.mrb[0].mxu0
    %v3542 = vadd.f32 %v3479, %v3541
    %v3543 = vpop.f32.mrb[0].mxu0
    %v3544 = vpop.f32.mrb[0].mxu0
    %v3545 = vadd.f32 %v3479, %v3544
    %v3546 = vpop.f32.mrb[0].mxu0
    %3547 = vdwg.mxu0
    %v3548 = vmul.f32 %v3542, 0.5
    %v3549 = vmul.f32 %v3545, 0.5
    %v3550 = vmul.f32 %v3542, 0.044715
    %v3551 = vmul.f32 %v3545, 0.044715
    %v3552 = vmul.f32 %v3550, %v3542
    %v3553 = vmul.f32 %v3551, %v3545
    %v3554 = vmul.f32 %v3552, %v3542
    %v3555 = vmul.f32 %v3553, %v3545
    %v3556 = vadd.f32 %v3542, %v3554
    %v3557 = vadd.f32 %v3545, %v3555
    %v3558 = vmul.f32 %v3556, 0.7978846
    %v3559 = vmul.f32 %v3557, 0.7978846
    %v3560 = vtanh.pop %v3558
    %v3561 = vtanh.pop %v3559
    %v3562 = vadd.f32 %v3560, 1.0
    %v3563 = vadd.f32 %v3561, 1.0
    %v3564 = vmul.f32 %v3548, %v3562
    %v3565 = vmul.f32 %v3549, %v3563
    %v3566 = vpack.c.bf16 %v3565, %v3564
    %s3567 = scalar_lea.vmem %s7, 64
    %v3568 = vld [vmem:[%s3567] sm:$0xf]
    %v3569 = vld [vmem:[%s3567 + $0x4] sm:$0xf]
    %v3570 = vld [vmem:[%s3567 + $0x8] sm:$0xf]
    %v3571 = vld [vmem:[%s3567 + $0xc] sm:$0xf]
    %v3572 = vld [vmem:[%s3567 + $0x10] sm:$0xf]
    %v3573 = vld [vmem:[%s3567 + $0x14] sm:$0xf]
    %v3574 = vld [vmem:[%s3567 + $0x18] sm:$0xf]
    %v3575 = vld [vmem:[%s3567 + $0x1c] sm:$0xf]
    %v3576 = vld [vmem:[%s3567 + $0x20] sm:$0xf]
    %v3577 = vld [vmem:[%s3567 + $0x24] sm:$0xf]
    %v3578 = vld [vmem:[%s3567 + $0x28] sm:$0xf]
    %v3579 = vld [vmem:[%s3567 + $0x2c] sm:$0xf]
    %v3580 = vld [vmem:[%s3567 + $0x30] sm:$0xf]
    %v3581 = vld [vmem:[%s3567 + $0x34] sm:$0xf]
    %v3582 = vld [vmem:[%s3567 + $0x38] sm:$0xf]
    %v3583 = vld [vmem:[%s3567 + $0x3c] sm:$0xf]
    %v3584 = vlaneseq
    %v3585 = vshrl.u32 %v3584, 7
    %v3586 = vsub.s32 5, %v3585
    %v3587 = vrot.slane %v1904, %v3586
    %v3604 = vunpack.c.l.b16 %v3568
    %v3605 = vunpack.c.l.b16 %v3569
    %v3606 = vunpack.c.l.b16 %v3570
    %v3607 = vunpack.c.l.b16 %v3571
    %v3608 = vunpack.c.l.b16 %v3572
    %v3609 = vunpack.c.l.b16 %v3573
    %v3610 = vunpack.c.l.b16 %v3574
    %v3611 = vunpack.c.l.b16 %v3575
    %v3612 = vunpack.c.l.b16 %v3576
    %v3613 = vunpack.c.l.b16 %v3577
    %v3614 = vunpack.c.l.b16 %v3578
    %v3615 = vunpack.c.l.b16 %v3579
    %v3616 = vunpack.c.l.b16 %v3580
    %v3617 = vunpack.c.l.b16 %v3581
    %v3618 = vunpack.c.l.b16 %v3582
    %v3619 = vunpack.c.l.b16 %v3583
    %v3620 = vpack.c.b16 %v3605, %v3604
    %v3621 = vpack.c.b16 %v3607, %v3606
    %v3622 = vpack.c.b16 %v3609, %v3608
    %v3623 = vpack.c.b16 %v3611, %v3610
    %v3624 = vpack.c.b16 %v3613, %v3612
    %v3625 = vpack.c.b16 %v3615, %v3614
    %v3626 = vpack.c.b16 %v3617, %v3616
    %v3627 = vpack.c.b16 %v3619, %v3618
    %3636 = vmatprep.subr.bf16.mxu0 0
    %3637 = vmatpush1.bf16.msra.mxu0 %v3620
    %3638 = vmatprep.subr.bf16.mxu0 0
    %3639 = vmatpush1.bf16.msra.mxu0 %v3621
    %3640 = vmatprep.subr.bf16.mxu0 0
    %3641 = vmatpush1.bf16.msra.mxu0 %v3622
    %3642 = vmatprep.subr.bf16.mxu0 0
    %3643 = vmatpush1.bf16.msra.mxu0 %v3623
    %3644 = vmatprep.subr.bf16.mxu0 0
    %3645 = vmatpush1.bf16.msra.mxu0 %v3624
    %3646 = vmatprep.subr.bf16.mxu0 0
    %3647 = vmatpush1.bf16.msra.mxu0 %v3625
    %3648 = vmatprep.subr.bf16.mxu0 0
    %3649 = vmatpush1.bf16.msra.mxu0 %v3626
    %3650 = vmatprep.subr.bf16.mxu0 0
    %3651 = vmatpush1.bf16.msra.mxu0 %v3627
    %3652 = vmatprep.subr.bf16.mxu0 0
    %3653 = vmatpush1.bf16.msra.mxu0 0
    %3654 = vmatprep.subr.bf16.mxu0 0
    %3655 = vmatpush1.bf16.msra.mxu0 0
    %3656 = vmatprep.subr.bf16.mxu0 0
    %3657 = vmatpush1.bf16.msra.mxu0 0
    %3658 = vmatprep.subr.bf16.mxu0 0
    %3659 = vmatpush1.bf16.msra.mxu0 0
    %3660 = vmatprep.subr.bf16.mxu0 0
    %3661 = vmatpush1.bf16.msra.mxu0 0
    %3662 = vmatprep.subr.bf16.mxu0 0
    %3663 = vmatpush1.bf16.msra.mxu0 0
    %3664 = vmatprep.subr.bf16.mxu0 0
    %3665 = vmatpush1.bf16.msra.mxu0 0
    %3666 = vmatprep.subr.bf16.mxu0 0
    %3667 = vmatpush1.bf16.msra.mxu0 0
    %3668 = vmatprep.mubr.bf16.mxu0 0
    %3669 = vmatmul.mubr.bf16.gmra.mrb[0].mxu0 %v3566
    %v3670 = vpop.f32.mrb[0].mxu0
    %v3671 = vadd.f32 %v3587, %v3670
    %v3672 = vpop.f32.mrb[0].mxu0
    %v3673 = vpop.f32.mrb[0].mxu0
    %v3674 = vadd.f32 %v3587, %v3673
    %v3675 = vpop.f32.mrb[0].mxu0
    %3676 = vdwg.mxu0
    %v3677 = vadd.f32 %v3671, %v3464
    %v3678 = vadd.f32 %v3674, %v3465
    %v3679 = vsel %vm35, %v3677, 0.0
    %3680 = vadd.xlane.f32.xlu0 %v3679
    %v3681 = vpop.xlane.xlu0 %3680
    %v3682 = vsel %vm35, %v3678, 0.0
    %3683 = vadd.xlane.f32.xlu0 %v3682
    %v3684 = vpop.xlane.xlu0 %3683
    %v3685 = vmul.f32 %v3681, %v42
    %v3686 = vmul.f32 %v3684, %v42
    %v3687 = vsub.f32 %v3677, %v3685
    %v3688 = vsub.f32 %v3678, %v3686
    %v3689 = vmul.f32 %v3687, %v3687
    %v3690 = vmul.f32 %v3688, %v3688
    %v3691 = vsel %vm35, %v3689, 0.0
    %3692 = vadd.xlane.f32.xlu0 %v3691
    %v3693 = vpop.xlane.xlu0 %3692
    %v3694 = vsel %vm35, %v3690, 0.0
    %3695 = vadd.xlane.f32.xlu0 %v3694
    %v3696 = vpop.xlane.xlu0 %3695
    %v3697 = vmul.f32 %v3693, %v42
    %v3698 = vmul.f32 %v3696, %v42
    %v3699 = vadd.f32 %v3697, 1e-05
    %v3700 = vadd.f32 %v3698, 1e-05
    %v3701 = vrsqrt.pop %v3699
    %v3702 = vrsqrt.pop %v3700
    %v3703 = vmul.f32 %v3687, %v3701
    %v3704 = vmul.f32 %v3688, %v3702
    %v3705 = vlaneseq
    %v3706 = vshrl.u32 %v3705, 7
    %v3707 = vsub.s32 6, %v3706
    %v3708 = vrot.slane %v1904, %v3707
    %v3709 = vmul.f32 %v3703, %v3708
    %v3710 = vmul.f32 %v3704, %v3708
    %v3711 = vlaneseq
    %v3712 = vshrl.u32 %v3711, 7
    %v3713 = vsub.s32 7, %v3712
    %v3714 = vrot.slane %v1904, %v3713
    %v3715 = vadd.f32 %v3709, %v3714
    %v3716 = vadd.f32 %v3710, %v3714
    %3717 = vst.msk [vmem:[#allocation3] sm:$0xff] %vm35, %v3715
    %3718 = vst.msk [vmem:[#allocation3 + $0x8] sm:$0xff] %vm35, %v3716
    // Predicated region
    $region34: #{extended_roberta_forward.1} parent=1 // pred_check
      _
    $region35: #{extended_roberta_forward.1} parent=1 // pred_check_branch
      %3720 = sbr.rel (0) target = $region37
    $region36: #{extended_roberta_forward.1} parent=1 // pred_region
      %s3722 = ssub.s32 256, 256
      %3723 = vsyncadd [#allocation4], %s3722
      %s3724 = sshll.u32 [#allocation3], 4
      %s3725 = int_to_ptr.vmem [resolvable:$true] %s3724
      %3730 = dma.vmem_to_hbm [thread:$0]  %s3725, 256, %s8, [#allocation4], 128, 128, 8
    $region37: #{extended_roberta_forward.1} parent=1 // pred_fallthru
      _
    // Predicated region
    $region38: #{extended_roberta_forward.1} parent=1 // pred_check
      _
    $region39: #{extended_roberta_forward.1} parent=1 // pred_check_branch
      %3732 = sbr.rel (0) target = $region41
    $region40: #{extended_roberta_forward.1} parent=1 // pred_region
      %3733 = dma.done [#allocation4], 256
    $region41: #{extended_roberta_forward.1} parent=1 // pred_fallthru
      _
    %3734 = vsyncpa [#allocation4], 1

</llo_original>
